<compile_context>
chip_gen: v7x
topology: tpu7x:2x2x1
jax: 0.10.0
libtpu: 0.0.40
codegen_flags: <defaults>
</compile_context>

<pallas_src>
import functools

import numpy as np
import jax
import jax.numpy as jnp
from jax.experimental import pallas as pl
from jax.experimental.pallas import tpu as pltpu


# ---------------------------------------------------------------------------
# In-kernel helpers.
# ---------------------------------------------------------------------------
def _lrelu(x):
    # LeakyReLU(0.1) — the module explicitly uses negative_slope=0.1.
    return jnp.where(x > 0, x, 0.1 * x)


def _lstm_gates(gates, c):
    # PyTorch LSTMCell gate order: i, f, g, o (H = 128). f32 gate math.
    H = 128
    i = jax.nn.sigmoid(gates[:, 0:H])
    f = jax.nn.sigmoid(gates[:, H:2 * H])
    g = jnp.tanh(gates[:, 2 * H:3 * H])
    o = jax.nn.sigmoid(gates[:, 3 * H:4 * H])
    c_new = f * c + i * g
    return o * jnp.tanh(c_new), c_new


# ---------------------------------------------------------------------------
# The single fused, per-timestep kernel body (grid=(T,), weights resident).
# ---------------------------------------------------------------------------
def _make_kernel(num_outputs):
    def kernel(obs_ref, state0_ref,
               c1w, c1b, c2w, c2b, c3w, c3b, c4w, c4b,
               br1w, br1b, br2w, br2b, fc3w, fc3b,
               l2w, l2b, l1w, l1b, hw, hb,
               head_ref, state_ref):
        f32 = jnp.float32
        bf16 = jnp.bfloat16

        def dotw(a, w_ref):
            # bf16 weights & LHS row, f32 MXU accumulation.
            return jnp.dot(a.astype(bf16), w_ref[...], preferred_element_type=f32)

        t = pl.program_id(0)

        # Load the initial recurrent state into the resident state block once.
        @pl.when(t == 0)
        def _():
            state_ref[...] = state0_ref[...]

        obs = obs_ref[0]                                   # (1, 96) f32
        hx1 = state_ref[0:1, :]
        cx1 = state_ref[1:2, :]
        hx2 = state_ref[2:3, :]
        cx2 = state_ref[3:4, :]

        # ---- conv1..conv4: offline-folded block-banded matmuls on flat rows.
        # (a2 slice + channels-last + final PyTorch flatten order are all
        #  folded into the matrices; lane widths padded to 128-multiples.)
        x = _lrelu(dotw(obs, c1w) + c1b[...])              # (1, 384)
        x = _lrelu(dotw(x, c2w) + c2b[...])                # (1, 384)
        x = _lrelu(dotw(x, c3w) + c3b[...])                # (1, 768)
        x = _lrelu(dotw(x, c4w) + c4b[...])                # (1, 384); cols 0:352 real

        # ---- lstm2: one matmul on the lane-aligned concat [conv_flat | hx2].
        g2 = dotw(jnp.concatenate([x, hx2], axis=1), l2w) + l2b[...]   # (1, 512)
        h2n, c2n = _lstm_gates(g2, cx2)

        # ---- scalar-feature branch MLPs (selection + 4x fc1 folded into one
        #      dot on the obs row; 4x fc2 block-diagonal; fc3), widths padded.
        u = _lrelu(dotw(obs, br1w) + br1b[...])            # (1, 256)
        u = _lrelu(dotw(u, br2w) + br2b[...])              # (1, 256)
        x1 = _lrelu(dotw(u, fc3w) + fc3b[...])             # (1, 128)

        # ---- lstm1 on cat([x1, hx2_new]) with hidden hx1 (stacked weights).
        g1 = dotw(jnp.concatenate([x1, h2n, hx1], axis=1), l1w) + l1b[...]
        h1n, c1n = _lstm_gates(g1, cx1)

        # Carry the new state (and expose it as the state output).
        state_ref[...] = jnp.concatenate([h1n, c1n, h2n, c2n], axis=0)

        # ---- heads: one (128,128) matmul; exact softsign on the actor lanes.
        ho = dotw(h1n, hw) + hb[...]                       # (1, 128)
        col = jax.lax.broadcasted_iota(jnp.int32, ho.shape, 1)
        is_actor = (col >= 1) & (col < 1 + num_outputs)
        head_ref[0] = jnp.where(is_actor, ho / (1.0 + jnp.abs(ho)), ho)

    return kernel


# ---------------------------------------------------------------------------
# Wrappers.
# ---------------------------------------------------------------------------
_WKEYS = ('c1_w', 'c1_b', 'c2_w', 'c2_b', 'c3_w', 'c3_b', 'c4_w', 'c4_b',
          'br1_w', 'br1_b', 'br2_w', 'br2_b', 'fc3_w', 'fc3_b',
          'l2_w', 'l2_b', 'l1_w', 'l1_b', 'head_w', 'head_b')


def conv6_rollout(packed, obs_seq, state0, *, num_outputs):
    """T-step rollout. obs_seq: (T,1,96) f32, state0: (4,128) f32 = [hx1;cx1;hx2;cx2].
    Returns (head_seq (T,1,128) = [critic|actor|actor2|pad] per step, state_T (4,128))."""
    T = obs_seq.shape[0]
    weights = tuple(packed[k] for k in _WKEYS)

    def const_spec(a):
        return pl.BlockSpec(a.shape, lambda t: (0,) * a.ndim)   # VMEM-resident

    in_specs = ([pl.BlockSpec((1, 1, 96), lambda t: (t, 0, 0)),
                 pl.BlockSpec((4, 128), lambda t: (0, 0))]
                + [const_spec(w) for w in weights])
    out_specs = (pl.BlockSpec((1, 1, 128), lambda t: (t, 0, 0)),
                 pl.BlockSpec((4, 128), lambda t: (0, 0)))      # resident carry
    out_shape = (jax.ShapeDtypeStruct((T, 1, 128), jnp.float32),
                 jax.ShapeDtypeStruct((4, 128), jnp.float32))

    head_seq, state_out = pl.pallas_call(
        _make_kernel(num_outputs),
        grid=(T,),
        in_specs=in_specs,
        out_specs=out_specs,
        out_shape=out_shape,
        compiler_params=pltpu.CompilerParams(
            dimension_semantics=("arbitrary",)),
    )(obs_seq, state0, *weights)
    return head_seq, state_out


def conv6_forward(packed, x, hx1, cx1, hx2, cx2, *, num_outputs):
    """Single-step forward matching the PyTorch module (B=1)."""
    obs = x.reshape(1, 1, 96).astype(jnp.float32)          # flat obs, c*24 + i
    state0 = jnp.concatenate([hx1, cx1, hx2, cx2], axis=0)  # (4, 128)
    head_seq, state_out = conv6_rollout(packed, obs, state0, num_outputs=num_outputs)
    h = head_seq[0]                                         # (1, 128)
    critic = h[:, 0:1]
    actor = h[:, 1:1 + num_outputs]
    actor2 = h[:, 1 + num_outputs:1 + 2 * num_outputs]
    h1n, c1n = state_out[0:1], state_out[1:2]
    h2n, c2n = state_out[2:3], state_out[3:4]
    return critic, actor, actor2, (h1n, c1n, h2n, c2n)


# ---------------------------------------------------------------------------
# Deterministic synthetic PyTorch-layout parameters (shapes from __init__).
# ---------------------------------------------------------------------------
def init_params(key, num_outputs=4):
    keys = iter(jax.random.split(key, 64))

    def rnd(shape, scale=0.1):
        return scale * jax.random.normal(next(keys), shape, jnp.float32)

    p = {}
    # Conv1d: weight (C_out, C_in, K), bias (C_out,)
    p['conv1_w'], p['conv1_b'] = rnd((32, 4, 3)), rnd((32,))
    p['conv2_w'], p['conv2_b'] = rnd((32, 32, 3)), rnd((32,))
    p['conv3_w'], p['conv3_b'] = rnd((64, 32, 2)), rnd((64,))
    p['conv4_w'], p['conv4_b'] = rnd((32, 64, 1)), rnd((32,))
    # Linear: weight (out, in), bias (out,)
    p['h4fc1_w'], p['h4fc1_b'] = rnd((64, 7)), rnd((64,))
    p['h4fc2_w'], p['h4fc2_b'] = rnd((64, 64)), rnd((64,))
    p['j01fc1_w'], p['j01fc1_b'] = rnd((64, 6)), rnd((64,))
    p['j01fc2_w'], p['j01fc2_b'] = rnd((64, 64)), rnd((64,))
    p['j23fc1_w'], p['j23fc1_b'] = rnd((64, 6)), rnd((64,))
    p['j23fc2_w'], p['j23fc2_b'] = rnd((64, 64)), rnd((64,))
    p['g02fc1_w'], p['g02fc1_b'] = rnd((32, 2)), rnd((32,))
    p['g02fc2_w'], p['g02fc2_b'] = rnd((32, 32)), rnd((32,))
    p['fc3_w'], p['fc3_b'] = rnd((128, 224)), rnd((128,))
    # LSTMCell: w_ih (4H, in), w_hh (4H, H); bias_ih.fill_(0) per __init__
    p['lstm2_wih'], p['lstm2_whh'] = rnd((512, 352)), rnd((512, 128))
    p['lstm2_bih'], p['lstm2_bhh'] = jnp.zeros((512,), jnp.float32), rnd((512,))
    p['lstm1_wih'], p['lstm1_whh'] = rnd((512, 256)), rnd((512, 128))
    p['lstm1_bih'], p['lstm1_bhh'] = jnp.zeros((512,), jnp.float32), rnd((512,))
    # Heads (biases filled with 0 per __init__)
    p['critic_w'], p['critic_b'] = rnd((1, 128)), jnp.zeros((1,), jnp.float32)
    p['actor_w'] = rnd((num_outputs, 128), 0.01)
    p['actor_b'] = jnp.zeros((num_outputs,), jnp.float32)
    p['actor2_w'] = rnd((num_outputs, 128), 0.01)
    p['actor2_b'] = jnp.zeros((num_outputs,), jnp.float32)
    return p


# ---------------------------------------------------------------------------
# Offline packing: exact linear-algebra folds (conv -> block-banded matrices on
# flat rows, feature selection + branch fc1 into one matrix, block-diag fc2,
# stacked LSTM weights, merged heads). Weights bf16, biases f32.
# ---------------------------------------------------------------------------
def pack_params(p, num_outputs):
    f32 = np.float32

    def npy(a):
        return np.asarray(a, dtype=f32)

    w1, b1 = npy(p['conv1_w']), npy(p['conv1_b'])
    w2, b2 = npy(p['conv2_w']), npy(p['conv2_b'])
    w3, b3 = npy(p['conv3_w']), npy(p['conv3_b'])
    w4, b4 = npy(p['conv4_w']), npy(p['conv4_b'])

    # conv1: raw obs flat (96) -> (10*32, padded to 384). obs index = c*24 + i,
    # a2 = cols 14..23 of each channel. Output index = l_out*32 + co.
    c1 = np.zeros((96, 384), f32)
    for l_out in range(10):
        for k in range(3):
            l_in = l_out + k - 1                   # padding = 1
            if 0 <= l_in < 10:
                rows = np.arange(4) * 24 + 14 + l_in
                cols = np.arange(l_out * 32, l_out * 32 + 32)
                c1[np.ix_(rows, cols)] = w1[:, :, k].T
    c1b = np.zeros((1, 384), f32)
    c1b[0, :320] = np.tile(b1, 10)

    # conv2: (10*32 -> 10*32), channels-last flat, padded 384 -> 384.
    c2 = np.zeros((384, 384), f32)
    for l_out in range(10):
        for k in range(3):
            l_in = l_out + k - 1
            if 0 <= l_in < 10:
                c2[l_in * 32:(l_in + 1) * 32, l_out * 32:(l_out + 1) * 32] = w2[:, :, k].T
    c2b = np.zeros((1, 384), f32)
    c2b[0, :320] = np.tile(b2, 10)

    # conv3: (10*32 -> 11*64), padding=1, K=2, padded 384 -> 768.
    c3 = np.zeros((384, 768), f32)
    for l_out in range(11):
        for k in range(2):
            l_in = l_out + k - 1
            if 0 <= l_in < 10:
                c3[l_in * 32:(l_in + 1) * 32, l_out * 64:(l_out + 1) * 64] = w3[:, :, k].T
    c3b = np.zeros((1, 768), f32)
    c3b[0, :704] = np.tile(b3, 11)

    # conv4 (1x1): (11*64 -> 32*11 in PyTorch flatten order co*11 + l), 768 -> 384.
    c4 = np.zeros((768, 384), f32)
    for l in range(11):
        rows = np.arange(l * 64, (l + 1) * 64)
        cols = np.arange(32) * 11 + l
        c4[np.ix_(rows, cols)] = w4[:, :, 0].T
    c4b = np.zeros((1, 384), f32)
    c4b[0, :352] = np.repeat(b4, 11)

    # Feature selection: 21 scalars [h4plus(7), j01plus(6), j23plus(6), g02(2)]
    # as a linear map from the flat 96-obs row (exact fold of split/view/sub/cat).
    sel = np.zeros((96, 21), f32)
    for i in range(4):                               # h4b = x[3, 0:4]
        sel[72 + i, i] = 1.0
    for i in range(1, 4):                            # h4b[1:4] - h4c[1:4]
        sel[72 + i, 3 + i] = 1.0
        sel[48 + i, 3 + i] = -1.0
    for i in range(4):                               # j01b = x[3, 4:8]
        sel[76 + i, 7 + i] = 1.0
    sel[77, 11] = 1.0; sel[53, 11] = -1.0            # j01bcsub[1]
    sel[79, 12] = 1.0; sel[55, 12] = -1.0            # j01bcsub[3]
    for i in range(4):                               # j23b = x[3, 9:13]
        sel[81 + i, 13 + i] = 1.0
    sel[82, 17] = 1.0; sel[58, 17] = -1.0            # j23bcsub[1]
    sel[84, 18] = 1.0; sel[60, 18] = -1.0            # j23bcsub[3]
    sel[80, 19] = 1.0                                # g0 = x[3, 8]
    sel[85, 20] = 1.0                                # g2 = x[3, 13]

    w1blk = np.zeros((21, 256), f32)                 # block-diag fc1, padded to 256
    w1blk[0:7, 0:64] = npy(p['h4fc1_w']).T
    w1blk[7:13, 64:128] = npy(p['j01fc1_w']).T
    w1blk[13:19, 128:192] = npy(p['j23fc1_w']).T
    w1blk[19:21, 192:224] = npy(p['g02fc1_w']).T
    br1_w = sel @ w1blk                              # (96, 256): one dot on obs row
    br1_b = np.zeros((1, 256), f32)
    br1_b[0, :224] = np.concatenate([npy(p['h4fc1_b']), npy(p['j01fc1_b']),
                                     npy(p['j23fc1_b']), npy(p['g02fc1_b'])])

    br2_w = np.zeros((256, 256), f32)                # block-diag fc2, padded
    br2_w[0:64, 0:64] = npy(p['h4fc2_w']).T
    br2_w[64:128, 64:128] = npy(p['j01fc2_w']).T
    br2_w[128:192, 128:192] = npy(p['j23fc2_w']).T
    br2_w[192:224, 192:224] = npy(p['g02fc2_w']).T
    br2_b = np.zeros((1, 256), f32)
    br2_b[0, :224] = np.concatenate([npy(p['h4fc2_b']), npy(p['j01fc2_b']),
                                     npy(p['j23fc2_b']), npy(p['g02fc2_b'])])

    fc3_w = np.zeros((256, 128), f32)
    fc3_w[0:224, :] = npy(p['fc3_w']).T
    fc3_b = npy(p['fc3_b']).reshape(1, 128)

    # lstm2: rows 0:352 = W_ih.T (PyTorch flatten order matches conv4 fold),
    # rows 352:384 zero (lane padding of the conv output), rows 384:512 = W_hh.T.
    l2_w = np.zeros((512, 512), f32)
    l2_w[0:352, :] = npy(p['lstm2_wih']).T
    l2_w[384:512, :] = npy(p['lstm2_whh']).T
    l2_b = (npy(p['lstm2_bih']) + npy(p['lstm2_bhh'])).reshape(1, 512)

    # lstm1: input is cat([x1(128), hx2_new(128)]), hidden hx1(128).
    l1_w = np.concatenate([npy(p['lstm1_wih']).T, npy(p['lstm1_whh']).T], axis=0)
    l1_b = (npy(p['lstm1_bih']) + npy(p['lstm1_bhh'])).reshape(1, 512)

    # Heads merged into one lane-dense (128, 128): [critic | actor | actor2 | 0].
    head_w = np.zeros((128, 128), f32)
    head_w[:, 0:1] = npy(p['critic_w']).T
    head_w[:, 1:1 + num_outputs] = npy(p['actor_w']).T
    head_w[:, 1 + num_outputs:1 + 2 * num_outputs] = npy(p['actor2_w']).T
    head_b = np.zeros((1, 128), f32)
    head_b[0, 0] = npy(p['critic_b'])[0]
    head_b[0, 1:1 + num_outputs] = npy(p['actor_b'])
    head_b[0, 1 + num_outputs:1 + 2 * num_outputs] = npy(p['actor2_b'])

    def wcast(a):
        return jnp.asarray(a, jnp.bfloat16)

    def bcast(a):
        return jnp.asarray(a, jnp.float32)

    return {
        'c1_w': wcast(c1), 'c1_b': bcast(c1b), 'c2_w': wcast(c2), 'c2_b': bcast(c2b),
        'c3_w': wcast(c3), 'c3_b': bcast(c3b), 'c4_w': wcast(c4), 'c4_b': bcast(c4b),
        'br1_w': wcast(br1_w), 'br1_b': bcast(br1_b),
        'br2_w': wcast(br2_w), 'br2_b': bcast(br2_b),
        'fc3_w': wcast(fc3_w), 'fc3_b': bcast(fc3_b),
        'l2_w': wcast(l2_w), 'l2_b': bcast(l2_b),
        'l1_w': wcast(l1_w), 'l1_b': bcast(l1_b),
        'head_w': wcast(head_w), 'head_b': bcast(head_b),
    }


if __name__ == "__main__":
    num_outputs = 4                      # action_space.shape[0]
    key = jax.random.PRNGKey(0)
    kp, kx, kh, kr = jax.random.split(key, 4)
    raw_params = init_params(kp, num_outputs=num_outputs)
    packed = pack_params(raw_params, num_outputs)

    x = jax.random.normal(kx, (1, 4, 24), jnp.float32)        # (B=1, C=4, obs=24)
    kh1, kh2, kh3, kh4 = jax.random.split(kh, 4)
    hx1 = 0.1 * jax.random.normal(kh1, (1, 128), jnp.float32)
    cx1 = 0.1 * jax.random.normal(kh2, (1, 128), jnp.float32)
    hx2 = 0.1 * jax.random.normal(kh3, (1, 128), jnp.float32)
    cx2 = 0.1 * jax.random.normal(kh4, (1, 128), jnp.float32)

    # Single-step forward (matches the PyTorch module's forward).
    fwd = jax.jit(conv6_forward, static_argnames=("num_outputs",))
    critic, actor, actor2, (h1, c1, h2, c2) = fwd(
        packed, x, hx1, cx1, hx2, cx2, num_outputs=num_outputs)
    jax.block_until_ready((critic, actor, actor2, h1, c1, h2, c2))

    assert critic.shape == (1, 1)
    assert actor.shape == (1, num_outputs) and actor2.shape == (1, num_outputs)
    assert h1.shape == (1, 128) and c1.shape == (1, 128)
    assert h2.shape == (1, 128) and c2.shape == (1, 128)
    assert bool(jnp.all(jnp.isfinite(critic))) and bool(jnp.all(jnp.isfinite(actor)))

    # Multi-step rollout path: weights stay VMEM-resident across the T grid.
    T = 4
    obs_seq = jax.random.normal(kr, (T, 1, 96), jnp.float32)
    state0 = jnp.concatenate([hx1, cx1, hx2, cx2], axis=0)
    roll = jax.jit(conv6_rollout, static_argnames=("num_outputs",))
    head_seq, state_T = roll(packed, obs_seq, state0, num_outputs=num_outputs)
    jax.block_until_ready((head_seq, state_T))
    assert head_seq.shape == (T, 1, 128) and state_T.shape == (4, 128)
    assert bool(jnp.all(jnp.isfinite(head_seq))) and bool(jnp.all(jnp.isfinite(state_T)))

    print("KERNEL_OK")
</pallas_src>

<mosaic_0001>
module attributes {stable_mosaic.version = 11 : i64} {
  func.func @kernel(%arg0: i32, %arg1: memref<1x1x96xf32, #tpu.memory_space<vmem>>, %arg2: memref<4x128xf32, #tpu.memory_space<vmem>>, %arg3: memref<96x384xbf16, #tpu.memory_space<vmem>>, %arg4: memref<1x384xf32, #tpu.memory_space<vmem>>, %arg5: memref<384x384xbf16, #tpu.memory_space<vmem>>, %arg6: memref<1x384xf32, #tpu.memory_space<vmem>>, %arg7: memref<384x768xbf16, #tpu.memory_space<vmem>>, %arg8: memref<1x768xf32, #tpu.memory_space<vmem>>, %arg9: memref<768x384xbf16, #tpu.memory_space<vmem>>, %arg10: memref<1x384xf32, #tpu.memory_space<vmem>>, %arg11: memref<96x256xbf16, #tpu.memory_space<vmem>>, %arg12: memref<1x256xf32, #tpu.memory_space<vmem>>, %arg13: memref<256x256xbf16, #tpu.memory_space<vmem>>, %arg14: memref<1x256xf32, #tpu.memory_space<vmem>>, %arg15: memref<256x128xbf16, #tpu.memory_space<vmem>>, %arg16: memref<1x128xf32, #tpu.memory_space<vmem>>, %arg17: memref<512x512xbf16, #tpu.memory_space<vmem>>, %arg18: memref<1x512xf32, #tpu.memory_space<vmem>>, %arg19: memref<384x512xbf16, #tpu.memory_space<vmem>>, %arg20: memref<1x512xf32, #tpu.memory_space<vmem>>, %arg21: memref<128x128xbf16, #tpu.memory_space<vmem>>, %arg22: memref<1x128xf32, #tpu.memory_space<vmem>>, %arg23: memref<1x1x128xf32, #tpu.memory_space<vmem>>, %arg24: memref<4x128xf32, #tpu.memory_space<vmem>>) attributes {dimension_semantics = [#tpu.dimension_semantics<arbitrary>], iteration_bounds = array<i64: 1>, scalar_prefetch = 0 : i64, scratch_operands = 0 : i64, tpu.core_type = #tpu.core_type<tc>, window_params = [{transform_indices = @transform_0, window_bounds = array<i64: 1, 1, 96>}, {pipeline_mode = #tpu.pipeline_mode<synchronous>, transform_indices = @transform_1, window_bounds = array<i64: 4, 128>}, {pipeline_mode = #tpu.pipeline_mode<synchronous>, transform_indices = @transform_2, window_bounds = array<i64: 96, 384>}, {pipeline_mode = #tpu.pipeline_mode<synchronous>, transform_indices = @transform_3, window_bounds = array<i64: 1, 384>}, {pipeline_mode = #tpu.pipeline_mode<synchronous>, transform_indices = @transform_4, window_bounds = array<i64: 384, 384>}, {pipeline_mode = #tpu.pipeline_mode<synchronous>, transform_indices = @transform_5, window_bounds = array<i64: 1, 384>}, {pipeline_mode = #tpu.pipeline_mode<synchronous>, transform_indices = @transform_6, window_bounds = array<i64: 384, 768>}, {pipeline_mode = #tpu.pipeline_mode<synchronous>, transform_indices = @transform_7, window_bounds = array<i64: 1, 768>}, {pipeline_mode = #tpu.pipeline_mode<synchronous>, transform_indices = @transform_8, window_bounds = array<i64: 768, 384>}, {pipeline_mode = #tpu.pipeline_mode<synchronous>, transform_indices = @transform_9, window_bounds = array<i64: 1, 384>}, {pipeline_mode = #tpu.pipeline_mode<synchronous>, transform_indices = @transform_10, window_bounds = array<i64: 96, 256>}, {pipeline_mode = #tpu.pipeline_mode<synchronous>, transform_indices = @transform_11, window_bounds = array<i64: 1, 256>}, {pipeline_mode = #tpu.pipeline_mode<synchronous>, transform_indices = @transform_12, window_bounds = array<i64: 256, 256>}, {pipeline_mode = #tpu.pipeline_mode<synchronous>, transform_indices = @transform_13, window_bounds = array<i64: 1, 256>}, {pipeline_mode = #tpu.pipeline_mode<synchronous>, transform_indices = @transform_14, window_bounds = array<i64: 256, 128>}, {pipeline_mode = #tpu.pipeline_mode<synchronous>, transform_indices = @transform_15, window_bounds = array<i64: 1, 128>}, {pipeline_mode = #tpu.pipeline_mode<synchronous>, transform_indices = @transform_16, window_bounds = array<i64: 512, 512>}, {pipeline_mode = #tpu.pipeline_mode<synchronous>, transform_indices = @transform_17, window_bounds = array<i64: 1, 512>}, {pipeline_mode = #tpu.pipeline_mode<synchronous>, transform_indices = @transform_18, window_bounds = array<i64: 384, 512>}, {pipeline_mode = #tpu.pipeline_mode<synchronous>, transform_indices = @transform_19, window_bounds = array<i64: 1, 512>}, {pipeline_mode = #tpu.pipeline_mode<synchronous>, transform_indices = @transform_20, window_bounds = array<i64: 128, 128>}, {pipeline_mode = #tpu.pipeline_mode<synchronous>, transform_indices = @transform_21, window_bounds = array<i64: 1, 128>}, {transform_indices = @transform_22, window_bounds = array<i64: 1, 1, 128>}, {pipeline_mode = #tpu.pipeline_mode<synchronous>, transform_indices = @transform_23, window_bounds = array<i64: 4, 128>}]} {
    %c0_i32 = arith.constant 0 : i32
    %0 = arith.cmpi eq, %arg0, %c0_i32 : i32
    %1 = arith.extui %0 : i1 to i32
    %c0_i32_0 = arith.constant 0 : i32
    %2 = arith.cmpi ne, %1, %c0_i32_0 : i32
    scf.if %2 {
      %c0_83 = arith.constant 0 : index
      %c0_84 = arith.constant 0 : index
      %162 = vector.load %arg2[%c0_83, %c0_84] : memref<4x128xf32, #tpu.memory_space<vmem>>, vector<4x128xf32>
      %c0_85 = arith.constant 0 : index
      %c0_86 = arith.constant 0 : index
      %163 = vector.load %arg24[%c0_85, %c0_86] : memref<4x128xf32, #tpu.memory_space<vmem>>, vector<4x128xf32>
      tpu.vector_store %arg24[%c0_85, %c0_86], %162 {strides = array<i32>} : memref<4x128xf32, #tpu.memory_space<vmem>>, vector<4x128xf32>,
    } else {
    }
    %c0 = arith.constant 0 : index
    %c0_1 = arith.constant 0 : index
    %c0_2 = arith.constant 0 : index
    %3 = vector.load %arg1[%c0, %c0_1, %c0_2] : memref<1x1x96xf32, #tpu.memory_space<vmem>>, vector<1x1x96xf32>
    %4 = vector.shape_cast %3 : vector<1x1x96xf32> to vector<1x96xf32>
    %c0_3 = arith.constant 0 : index
    %c0_4 = arith.constant 0 : index
    %5 = vector.load %arg24[%c0_3, %c0_4] : memref<4x128xf32, #tpu.memory_space<vmem>>, vector<1x128xf32>
    %c1 = arith.constant 1 : index
    %c0_5 = arith.constant 0 : index
    %6 = vector.load %arg24[%c1, %c0_5] : memref<4x128xf32, #tpu.memory_space<vmem>>, vector<1x128xf32>
    %c2 = arith.constant 2 : index
    %c0_6 = arith.constant 0 : index
    %7 = vector.load %arg24[%c2, %c0_6] : memref<4x128xf32, #tpu.memory_space<vmem>>, vector<1x128xf32>
    %c3 = arith.constant 3 : index
    %c0_7 = arith.constant 0 : index
    %8 = vector.load %arg24[%c3, %c0_7] : memref<4x128xf32, #tpu.memory_space<vmem>>, vector<1x128xf32>
    %9 = arith.truncf %4 : vector<1x96xf32> to vector<1x96xbf16>
    %c0_8 = arith.constant 0 : index
    %c0_9 = arith.constant 0 : index
    %10 = vector.load %arg3[%c0_8, %c0_9] : memref<96x384xbf16, #tpu.memory_space<vmem>>, vector<96x384xbf16>
    %cst = arith.constant dense<0.000000e+00> : vector<1x384xf32>
    %11 = tpu.matmul %9, %10, %cst {dimension_numbers = #tpu.dot_dimension_numbers<[1], [0], [0], [1], [0, 0, 1, 1], [], []>} : vector<1x96xbf16>, vector<96x384xbf16>, vector<1x384xf32> -> vector<1x384xf32>
    %c0_10 = arith.constant 0 : index
    %c0_11 = arith.constant 0 : index
    %12 = vector.load %arg4[%c0_10, %c0_11] : memref<1x384xf32, #tpu.memory_space<vmem>>, vector<1x384xf32>
    %13 = arith.addf %11, %12 : vector<1x384xf32>
    %cst_12 = arith.constant 0.000000e+00 : f32
    %14 = vector.broadcast %cst_12 : f32 to vector<1x384xf32>
    %15 = arith.cmpf ogt, %13, %14 : vector<1x384xf32>
    %cst_13 = arith.constant 1.000000e-01 : f32
    %16 = vector.broadcast %cst_13 : f32 to vector<1x384xf32>
    %17 = arith.mulf %16, %13 : vector<1x384xf32>
    %18 = arith.select %15, %13, %17 : vector<1x384xi1>, vector<1x384xf32>
    %19 = arith.truncf %18 : vector<1x384xf32> to vector<1x384xbf16>
    %c0_14 = arith.constant 0 : index
    %c0_15 = arith.constant 0 : index
    %20 = vector.load %arg5[%c0_14, %c0_15] : memref<384x384xbf16, #tpu.memory_space<vmem>>, vector<384x384xbf16>
    %cst_16 = arith.constant dense<0.000000e+00> : vector<1x384xf32>
    %21 = tpu.matmul %19, %20, %cst_16 {dimension_numbers = #tpu.dot_dimension_numbers<[1], [0], [0], [1], [0, 0, 1, 1], [], []>} : vector<1x384xbf16>, vector<384x384xbf16>, vector<1x384xf32> -> vector<1x384xf32>
    %c0_17 = arith.constant 0 : index
    %c0_18 = arith.constant 0 : index
    %22 = vector.load %arg6[%c0_17, %c0_18] : memref<1x384xf32, #tpu.memory_space<vmem>>, vector<1x384xf32>
    %23 = arith.addf %21, %22 : vector<1x384xf32>
    %cst_19 = arith.constant 0.000000e+00 : f32
    %24 = vector.broadcast %cst_19 : f32 to vector<1x384xf32>
    %25 = arith.cmpf ogt, %23, %24 : vector<1x384xf32>
    %cst_20 = arith.constant 1.000000e-01 : f32
    %26 = vector.broadcast %cst_20 : f32 to vector<1x384xf32>
    %27 = arith.mulf %26, %23 : vector<1x384xf32>
    %28 = arith.select %25, %23, %27 : vector<1x384xi1>, vector<1x384xf32>
    %29 = arith.truncf %28 : vector<1x384xf32> to vector<1x384xbf16>
    %c0_21 = arith.constant 0 : index
    %c0_22 = arith.constant 0 : index
    %30 = vector.load %arg7[%c0_21, %c0_22] : memref<384x768xbf16, #tpu.memory_space<vmem>>, vector<384x768xbf16>
    %cst_23 = arith.constant dense<0.000000e+00> : vector<1x768xf32>
    %31 = tpu.matmul %29, %30, %cst_23 {dimension_numbers = #tpu.dot_dimension_numbers<[1], [0], [0], [1], [0, 0, 1, 1], [], []>} : vector<1x384xbf16>, vector<384x768xbf16>, vector<1x768xf32> -> vector<1x768xf32>
    %c0_24 = arith.constant 0 : index
    %c0_25 = arith.constant 0 : index
    %32 = vector.load %arg8[%c0_24, %c0_25] : memref<1x768xf32, #tpu.memory_space<vmem>>, vector<1x768xf32>
    %33 = arith.addf %31, %32 : vector<1x768xf32>
    %cst_26 = arith.constant 0.000000e+00 : f32
    %34 = vector.broadcast %cst_26 : f32 to vector<1x768xf32>
    %35 = arith.cmpf ogt, %33, %34 : vector<1x768xf32>
    %cst_27 = arith.constant 1.000000e-01 : f32
    %36 = vector.broadcast %cst_27 : f32 to vector<1x768xf32>
    %37 = arith.mulf %36, %33 : vector<1x768xf32>
    %38 = arith.select %35, %33, %37 : vector<1x768xi1>, vector<1x768xf32>
    %39 = arith.truncf %38 : vector<1x768xf32> to vector<1x768xbf16>
    %c0_28 = arith.constant 0 : index
    %c0_29 = arith.constant 0 : index
    %40 = vector.load %arg9[%c0_28, %c0_29] : memref<768x384xbf16, #tpu.memory_space<vmem>>, vector<768x384xbf16>
    %cst_30 = arith.constant dense<0.000000e+00> : vector<1x384xf32>
    %41 = tpu.matmul %39, %40, %cst_30 {dimension_numbers = #tpu.dot_dimension_numbers<[1], [0], [0], [1], [0, 0, 1, 1], [], []>} : vector<1x768xbf16>, vector<768x384xbf16>, vector<1x384xf32> -> vector<1x384xf32>
    %c0_31 = arith.constant 0 : index
    %c0_32 = arith.constant 0 : index
    %42 = vector.load %arg10[%c0_31, %c0_32] : memref<1x384xf32, #tpu.memory_space<vmem>>, vector<1x384xf32>
    %43 = arith.addf %41, %42 : vector<1x384xf32>
    %cst_33 = arith.constant 0.000000e+00 : f32
    %44 = vector.broadcast %cst_33 : f32 to vector<1x384xf32>
    %45 = arith.cmpf ogt, %43, %44 : vector<1x384xf32>
    %cst_34 = arith.constant 1.000000e-01 : f32
    %46 = vector.broadcast %cst_34 : f32 to vector<1x384xf32>
    %47 = arith.mulf %46, %43 : vector<1x384xf32>
    %48 = arith.select %45, %43, %47 : vector<1x384xi1>, vector<1x384xf32>
    %49 = tpu.concatenate %48, %7 in 1 : vector<1x384xf32>, vector<1x128xf32> -> vector<1x512xf32>
    %50 = arith.truncf %49 : vector<1x512xf32> to vector<1x512xbf16>
    %c0_35 = arith.constant 0 : index
    %c0_36 = arith.constant 0 : index
    %51 = vector.load %arg17[%c0_35, %c0_36] : memref<512x512xbf16, #tpu.memory_space<vmem>>, vector<512x512xbf16>
    %cst_37 = arith.constant dense<0.000000e+00> : vector<1x512xf32>
    %52 = tpu.matmul %50, %51, %cst_37 {dimension_numbers = #tpu.dot_dimension_numbers<[1], [0], [0], [1], [0, 0, 1, 1], [], []>} : vector<1x512xbf16>, vector<512x512xbf16>, vector<1x512xf32> -> vector<1x512xf32>
    %c0_38 = arith.constant 0 : index
    %c0_39 = arith.constant 0 : index
    %53 = vector.load %arg18[%c0_38, %c0_39] : memref<1x512xf32, #tpu.memory_space<vmem>>, vector<1x512xf32>
    %54 = arith.addf %52, %53 : vector<1x512xf32>
    %55 = vector.extract_strided_slice %54 {offsets = [0, 0], sizes = [1, 128], strides = [1, 1]} : vector<1x512xf32> to vector<1x128xf32>
    %56 = arith.negf %55 : vector<1x128xf32>
    %57 = math.exp %56 : vector<1x128xf32>
    %cst_40 = arith.constant 1.000000e+00 : f32
    %58 = vector.broadcast %cst_40 : f32 to vector<1x128xf32>
    %59 = arith.addf %58, %57 : vector<1x128xf32>
    %60 = arith.divf %58, %59 : vector<1x128xf32>
    %61 = vector.extract_strided_slice %54 {offsets = [0, 128], sizes = [1, 128], strides = [1, 1]} : vector<1x512xf32> to vector<1x128xf32>
    %62 = arith.negf %61 : vector<1x128xf32>
    %63 = math.exp %62 : vector<1x128xf32>
    %cst_41 = arith.constant 1.000000e+00 : f32
    %64 = vector.broadcast %cst_41 : f32 to vector<1x128xf32>
    %65 = arith.addf %64, %63 : vector<1x128xf32>
    %66 = arith.divf %64, %65 : vector<1x128xf32>
    %67 = vector.extract_strided_slice %54 {offsets = [0, 256], sizes = [1, 128], strides = [1, 1]} : vector<1x512xf32> to vector<1x128xf32>
    %68 = math.tanh %67 : vector<1x128xf32>
    %69 = vector.extract_strided_slice %54 {offsets = [0, 384], sizes = [1, 128], strides = [1, 1]} : vector<1x512xf32> to vector<1x128xf32>
    %70 = arith.negf %69 : vector<1x128xf32>
    %71 = math.exp %70 : vector<1x128xf32>
    %cst_42 = arith.constant 1.000000e+00 : f32
    %72 = vector.broadcast %cst_42 : f32 to vector<1x128xf32>
    %73 = arith.addf %72, %71 : vector<1x128xf32>
    %74 = arith.divf %72, %73 : vector<1x128xf32>
    %75 = arith.mulf %66, %8 : vector<1x128xf32>
    %76 = arith.mulf %60, %68 : vector<1x128xf32>
    %77 = arith.addf %75, %76 : vector<1x128xf32>
    %78 = math.tanh %77 : vector<1x128xf32>
    %79 = arith.mulf %74, %78 : vector<1x128xf32>
    %80 = arith.truncf %4 : vector<1x96xf32> to vector<1x96xbf16>
    %c0_43 = arith.constant 0 : index
    %c0_44 = arith.constant 0 : index
    %81 = vector.load %arg11[%c0_43, %c0_44] : memref<96x256xbf16, #tpu.memory_space<vmem>>, vector<96x256xbf16>
    %cst_45 = arith.constant dense<0.000000e+00> : vector<1x256xf32>
    %82 = tpu.matmul %80, %81, %cst_45 {dimension_numbers = #tpu.dot_dimension_numbers<[1], [0], [0], [1], [0, 0, 1, 1], [], []>} : vector<1x96xbf16>, vector<96x256xbf16>, vector<1x256xf32> -> vector<1x256xf32>
    %c0_46 = arith.constant 0 : index
    %c0_47 = arith.constant 0 : index
    %83 = vector.load %arg12[%c0_46, %c0_47] : memref<1x256xf32, #tpu.memory_space<vmem>>, vector<1x256xf32>
    %84 = arith.addf %82, %83 : vector<1x256xf32>
    %cst_48 = arith.constant 0.000000e+00 : f32
    %85 = vector.broadcast %cst_48 : f32 to vector<1x256xf32>
    %86 = arith.cmpf ogt, %84, %85 : vector<1x256xf32>
    %cst_49 = arith.constant 1.000000e-01 : f32
    %87 = vector.broadcast %cst_49 : f32 to vector<1x256xf32>
    %88 = arith.mulf %87, %84 : vector<1x256xf32>
    %89 = arith.select %86, %84, %88 : vector<1x256xi1>, vector<1x256xf32>
    %90 = arith.truncf %89 : vector<1x256xf32> to vector<1x256xbf16>
    %c0_50 = arith.constant 0 : index
    %c0_51 = arith.constant 0 : index
    %91 = vector.load %arg13[%c0_50, %c0_51] : memref<256x256xbf16, #tpu.memory_space<vmem>>, vector<256x256xbf16>
    %cst_52 = arith.constant dense<0.000000e+00> : vector<1x256xf32>
    %92 = tpu.matmul %90, %91, %cst_52 {dimension_numbers = #tpu.dot_dimension_numbers<[1], [0], [0], [1], [0, 0, 1, 1], [], []>} : vector<1x256xbf16>, vector<256x256xbf16>, vector<1x256xf32> -> vector<1x256xf32>
    %c0_53 = arith.constant 0 : index
    %c0_54 = arith.constant 0 : index
    %93 = vector.load %arg14[%c0_53, %c0_54] : memref<1x256xf32, #tpu.memory_space<vmem>>, vector<1x256xf32>
    %94 = arith.addf %92, %93 : vector<1x256xf32>
    %cst_55 = arith.constant 0.000000e+00 : f32
    %95 = vector.broadcast %cst_55 : f32 to vector<1x256xf32>
    %96 = arith.cmpf ogt, %94, %95 : vector<1x256xf32>
    %cst_56 = arith.constant 1.000000e-01 : f32
    %97 = vector.broadcast %cst_56 : f32 to vector<1x256xf32>
    %98 = arith.mulf %97, %94 : vector<1x256xf32>
    %99 = arith.select %96, %94, %98 : vector<1x256xi1>, vector<1x256xf32>
    %100 = arith.truncf %99 : vector<1x256xf32> to vector<1x256xbf16>
    %c0_57 = arith.constant 0 : index
    %c0_58 = arith.constant 0 : index
    %101 = vector.load %arg15[%c0_57, %c0_58] : memref<256x128xbf16, #tpu.memory_space<vmem>>, vector<256x128xbf16>
    %cst_59 = arith.constant dense<0.000000e+00> : vector<1x128xf32>
    %102 = tpu.matmul %100, %101, %cst_59 {dimension_numbers = #tpu.dot_dimension_numbers<[1], [0], [0], [1], [0, 0, 1, 1], [], []>} : vector<1x256xbf16>, vector<256x128xbf16>, vector<1x128xf32> -> vector<1x128xf32>
    %c0_60 = arith.constant 0 : index
    %c0_61 = arith.constant 0 : index
    %103 = vector.load %arg16[%c0_60, %c0_61] : memref<1x128xf32, #tpu.memory_space<vmem>>, vector<1x128xf32>
    %104 = arith.addf %102, %103 : vector<1x128xf32>
    %cst_62 = arith.constant 0.000000e+00 : f32
    %105 = vector.broadcast %cst_62 : f32 to vector<1x128xf32>
    %106 = arith.cmpf ogt, %104, %105 : vector<1x128xf32>
    %cst_63 = arith.constant 1.000000e-01 : f32
    %107 = vector.broadcast %cst_63 : f32 to vector<1x128xf32>
    %108 = arith.mulf %107, %104 : vector<1x128xf32>
    %109 = arith.select %106, %104, %108 : vector<1x128xi1>, vector<1x128xf32>
    %110 = tpu.concatenate %109, %79, %5 in 1 : vector<1x128xf32>, vector<1x128xf32>, vector<1x128xf32> -> vector<1x384xf32>
    %111 = arith.truncf %110 : vector<1x384xf32> to vector<1x384xbf16>
    %c0_64 = arith.constant 0 : index
    %c0_65 = arith.constant 0 : index
    %112 = vector.load %arg19[%c0_64, %c0_65] : memref<384x512xbf16, #tpu.memory_space<vmem>>, vector<384x512xbf16>
    %cst_66 = arith.constant dense<0.000000e+00> : vector<1x512xf32>
    %113 = tpu.matmul %111, %112, %cst_66 {dimension_numbers = #tpu.dot_dimension_numbers<[1], [0], [0], [1], [0, 0, 1, 1], [], []>} : vector<1x384xbf16>, vector<384x512xbf16>, vector<1x512xf32> -> vector<1x512xf32>
    %c0_67 = arith.constant 0 : index
    %c0_68 = arith.constant 0 : index
    %114 = vector.load %arg20[%c0_67, %c0_68] : memref<1x512xf32, #tpu.memory_space<vmem>>, vector<1x512xf32>
    %115 = arith.addf %113, %114 : vector<1x512xf32>
    %116 = vector.extract_strided_slice %115 {offsets = [0, 0], sizes = [1, 128], strides = [1, 1]} : vector<1x512xf32> to vector<1x128xf32>
    %117 = arith.negf %116 : vector<1x128xf32>
    %118 = math.exp %117 : vector<1x128xf32>
    %cst_69 = arith.constant 1.000000e+00 : f32
    %119 = vector.broadcast %cst_69 : f32 to vector<1x128xf32>
    %120 = arith.addf %119, %118 : vector<1x128xf32>
    %121 = arith.divf %119, %120 : vector<1x128xf32>
    %122 = vector.extract_strided_slice %115 {offsets = [0, 128], sizes = [1, 128], strides = [1, 1]} : vector<1x512xf32> to vector<1x128xf32>
    %123 = arith.negf %122 : vector<1x128xf32>
    %124 = math.exp %123 : vector<1x128xf32>
    %cst_70 = arith.constant 1.000000e+00 : f32
    %125 = vector.broadcast %cst_70 : f32 to vector<1x128xf32>
    %126 = arith.addf %125, %124 : vector<1x128xf32>
    %127 = arith.divf %125, %126 : vector<1x128xf32>
    %128 = vector.extract_strided_slice %115 {offsets = [0, 256], sizes = [1, 128], strides = [1, 1]} : vector<1x512xf32> to vector<1x128xf32>
    %129 = math.tanh %128 : vector<1x128xf32>
    %130 = vector.extract_strided_slice %115 {offsets = [0, 384], sizes = [1, 128], strides = [1, 1]} : vector<1x512xf32> to vector<1x128xf32>
    %131 = arith.negf %130 : vector<1x128xf32>
    %132 = math.exp %131 : vector<1x128xf32>
    %cst_71 = arith.constant 1.000000e+00 : f32
    %133 = vector.broadcast %cst_71 : f32 to vector<1x128xf32>
    %134 = arith.addf %133, %132 : vector<1x128xf32>
    %135 = arith.divf %133, %134 : vector<1x128xf32>
    %136 = arith.mulf %127, %6 : vector<1x128xf32>
    %137 = arith.mulf %121, %129 : vector<1x128xf32>
    %138 = arith.addf %136, %137 : vector<1x128xf32>
    %139 = math.tanh %138 : vector<1x128xf32>
    %140 = arith.mulf %135, %139 : vector<1x128xf32>
    %141 = tpu.concatenate %140, %138, %79, %77 in 0 : vector<1x128xf32>, vector<1x128xf32>, vector<1x128xf32>, vector<1x128xf32> -> vector<4x128xf32>
    %c0_72 = arith.constant 0 : index
    %c0_73 = arith.constant 0 : index
    %142 = vector.load %arg24[%c0_72, %c0_73] : memref<4x128xf32, #tpu.memory_space<vmem>>, vector<4x128xf32>
    tpu.vector_store %arg24[%c0_72, %c0_73], %141 {strides = array<i32>} : memref<4x128xf32, #tpu.memory_space<vmem>>, vector<4x128xf32>,
    %143 = arith.truncf %140 : vector<1x128xf32> to vector<1x128xbf16>
    %c0_74 = arith.constant 0 : index
    %c0_75 = arith.constant 0 : index
    %144 = vector.load %arg21[%c0_74, %c0_75] : memref<128x128xbf16, #tpu.memory_space<vmem>>, vector<128x128xbf16>
    %cst_76 = arith.constant dense<0.000000e+00> : vector<1x128xf32>
    %145 = tpu.matmul %143, %144, %cst_76 {dimension_numbers = #tpu.dot_dimension_numbers<[1], [0], [0], [1], [0, 0, 1, 1], [], []>} : vector<1x128xbf16>, vector<128x128xbf16>, vector<1x128xf32> -> vector<1x128xf32>
    %c0_77 = arith.constant 0 : index
    %c0_78 = arith.constant 0 : index
    %146 = vector.load %arg22[%c0_77, %c0_78] : memref<1x128xf32, #tpu.memory_space<vmem>>, vector<1x128xf32>
    %147 = arith.addf %145, %146 : vector<1x128xf32>
    %148 = tpu.iota {dimensions = array<i32: 1>} : vector<1x128xi32>
    %c1_i32 = arith.constant 1 : i32
    %149 = vector.broadcast %c1_i32 : i32 to vector<1x128xi32>
    %150 = arith.cmpi sge, %148, %149 : vector<1x128xi32>
    %c5_i32 = arith.constant 5 : i32
    %151 = vector.broadcast %c5_i32 : i32 to vector<1x128xi32>
    %152 = arith.cmpi slt, %148, %151 : vector<1x128xi32>
    %153 = arith.andi %150, %152 : vector<1x128xi1>
    %154 = math.absf %147 : vector<1x128xf32>
    %cst_79 = arith.constant 1.000000e+00 : f32
    %155 = vector.broadcast %cst_79 : f32 to vector<1x128xf32>
    %156 = arith.addf %155, %154 : vector<1x128xf32>
    %157 = arith.divf %147, %156 : vector<1x128xf32>
    %158 = arith.select %153, %157, %147 : vector<1x128xi1>, vector<1x128xf32>
    %c0_80 = arith.constant 0 : index
    %c0_81 = arith.constant 0 : index
    %c0_82 = arith.constant 0 : index
    %159 = vector.load %arg23[%c0_80, %c0_81, %c0_82] : memref<1x1x128xf32, #tpu.memory_space<vmem>>, vector<1x1x128xf32>
    %160 = vector.shape_cast %159 : vector<1x1x128xf32> to vector<1x128xf32>
    %161 = vector.shape_cast %158 : vector<1x128xf32> to vector<1x1x128xf32>
    tpu.vector_store %arg23[%c0_80, %c0_81, %c0_82], %161 {strides = array<i32>} : memref<1x1x128xf32, #tpu.memory_space<vmem>>, vector<1x1x128xf32>,
    return
  }
  func.func @transform_0(%arg0: i32) -> (i32, i32, i32) {
    %c0_i32 = arith.constant 0 : i32
    %c0_i32_0 = arith.constant 0 : i32
    %c0_i32_1 = arith.constant 0 : i32
    return %arg0, %c0_i32, %c0_i32_0 : i32, i32, i32
  }
  func.func @transform_1(%arg0: i32) -> (i32, i32) {
    %c0_i32 = arith.constant 0 : i32
    %c0_i32_0 = arith.constant 0 : i32
    %c0_i32_1 = arith.constant 0 : i32
    return %c0_i32, %c0_i32_0 : i32, i32
  }
  func.func @transform_2(%arg0: i32) -> (i32, i32) {
    %c0_i32 = arith.constant 0 : i32
    %c0_i32_0 = arith.constant 0 : i32
    %c0_i32_1 = arith.constant 0 : i32
    return %c0_i32, %c0_i32_0 : i32, i32
  }
  func.func @transform_3(%arg0: i32) -> (i32, i32) {
    %c0_i32 = arith.constant 0 : i32
    %c0_i32_0 = arith.constant 0 : i32
    %c0_i32_1 = arith.constant 0 : i32
    return %c0_i32, %c0_i32_0 : i32, i32
  }
  func.func @transform_4(%arg0: i32) -> (i32, i32) {
    %c0_i32 = arith.constant 0 : i32
    %c0_i32_0 = arith.constant 0 : i32
    %c0_i32_1 = arith.constant 0 : i32
    return %c0_i32, %c0_i32_0 : i32, i32
  }
  func.func @transform_5(%arg0: i32) -> (i32, i32) {
    %c0_i32 = arith.constant 0 : i32
    %c0_i32_0 = arith.constant 0 : i32
    %c0_i32_1 = arith.constant 0 : i32
    return %c0_i32, %c0_i32_0 : i32, i32
  }
  func.func @transform_6(%arg0: i32) -> (i32, i32) {
    %c0_i32 = arith.constant 0 : i32
    %c0_i32_0 = arith.constant 0 : i32
    %c0_i32_1 = arith.constant 0 : i32
    return %c0_i32, %c0_i32_0 : i32, i32
  }
  func.func @transform_7(%arg0: i32) -> (i32, i32) {
    %c0_i32 = arith.constant 0 : i32
    %c0_i32_0 = arith.constant 0 : i32
    %c0_i32_1 = arith.constant 0 : i32
    return %c0_i32, %c0_i32_0 : i32, i32
  }
  func.func @transform_8(%arg0: i32) -> (i32, i32) {
    %c0_i32 = arith.constant 0 : i32
    %c0_i32_0 = arith.constant 0 : i32
    %c0_i32_1 = arith.constant 0 : i32
    return %c0_i32, %c0_i32_0 : i32, i32
  }
  func.func @transform_9(%arg0: i32) -> (i32, i32) {
    %c0_i32 = arith.constant 0 : i32
    %c0_i32_0 = arith.constant 0 : i32
    %c0_i32_1 = arith.constant 0 : i32
    return %c0_i32, %c0_i32_0 : i32, i32
  }
  func.func @transform_10(%arg0: i32) -> (i32, i32) {
    %c0_i32 = arith.constant 0 : i32
    %c0_i32_0 = arith.constant 0 : i32
    %c0_i32_1 = arith.constant 0 : i32
    return %c0_i32, %c0_i32_0 : i32, i32
  }
  func.func @transform_11(%arg0: i32) -> (i32, i32) {
    %c0_i32 = arith.constant 0 : i32
    %c0_i32_0 = arith.constant 0 : i32
    %c0_i32_1 = arith.constant 0 : i32
    return %c0_i32, %c0_i32_0 : i32, i32
  }
  func.func @transform_12(%arg0: i32) -> (i32, i32) {
    %c0_i32 = arith.constant 0 : i32
    %c0_i32_0 = arith.constant 0 : i32
    %c0_i32_1 = arith.constant 0 : i32
    return %c0_i32, %c0_i32_0 : i32, i32
  }
  func.func @transform_13(%arg0: i32) -> (i32, i32) {
    %c0_i32 = arith.constant 0 : i32
    %c0_i32_0 = arith.constant 0 : i32
    %c0_i32_1 = arith.constant 0 : i32
    return %c0_i32, %c0_i32_0 : i32, i32
  }
  func.func @transform_14(%arg0: i32) -> (i32, i32) {
    %c0_i32 = arith.constant 0 : i32
    %c0_i32_0 = arith.constant 0 : i32
    %c0_i32_1 = arith.constant 0 : i32
    return %c0_i32, %c0_i32_0 : i32, i32
  }
  func.func @transform_15(%arg0: i32) -> (i32, i32) {
    %c0_i32 = arith.constant 0 : i32
    %c0_i32_0 = arith.constant 0 : i32
    %c0_i32_1 = arith.constant 0 : i32
    return %c0_i32, %c0_i32_0 : i32, i32
  }
  func.func @transform_16(%arg0: i32) -> (i32, i32) {
    %c0_i32 = arith.constant 0 : i32
    %c0_i32_0 = arith.constant 0 : i32
    %c0_i32_1 = arith.constant 0 : i32
    return %c0_i32, %c0_i32_0 : i32, i32
  }
  func.func @transform_17(%arg0: i32) -> (i32, i32) {
    %c0_i32 = arith.constant 0 : i32
    %c0_i32_0 = arith.constant 0 : i32
    %c0_i32_1 = arith.constant 0 : i32
    return %c0_i32, %c0_i32_0 : i32, i32
  }
  func.func @transform_18(%arg0: i32) -> (i32, i32) {
    %c0_i32 = arith.constant 0 : i32
    %c0_i32_0 = arith.constant 0 : i32
    %c0_i32_1 = arith.constant 0 : i32
    return %c0_i32, %c0_i32_0 : i32, i32
  }
  func.func @transform_19(%arg0: i32) -> (i32, i32) {
    %c0_i32 = arith.constant 0 : i32
    %c0_i32_0 = arith.constant 0 : i32
    %c0_i32_1 = arith.constant 0 : i32
    return %c0_i32, %c0_i32_0 : i32, i32
  }
  func.func @transform_20(%arg0: i32) -> (i32, i32) {
    %c0_i32 = arith.constant 0 : i32
    %c0_i32_0 = arith.constant 0 : i32
    %c0_i32_1 = arith.constant 0 : i32
    return %c0_i32, %c0_i32_0 : i32, i32
  }
  func.func @transform_21(%arg0: i32) -> (i32, i32) {
    %c0_i32 = arith.constant 0 : i32
    %c0_i32_0 = arith.constant 0 : i32
    %c0_i32_1 = arith.constant 0 : i32
    return %c0_i32, %c0_i32_0 : i32, i32
  }
  func.func @transform_22(%arg0: i32) -> (i32, i32, i32) {
    %c0_i32 = arith.constant 0 : i32
    %c0_i32_0 = arith.constant 0 : i32
    %c0_i32_1 = arith.constant 0 : i32
    return %arg0, %c0_i32, %c0_i32_0 : i32, i32, i32
  }
  func.func @transform_23(%arg0: i32) -> (i32, i32) {
    %c0_i32 = arith.constant 0 : i32
    %c0_i32_0 = arith.constant 0 : i32
    %c0_i32_1 = arith.constant 0 : i32
    return %c0_i32, %c0_i32_0 : i32, i32
  }
}

</mosaic_0001>

<llo_original>
// kernel: conv6_forward.1
$region0: #{conv6_forward.1}
  #allocation0 [shape = 'u32[]', space=smem, size = 0x4, offset = 0x4, fixed_abs, tag = 'smem constant byte address 0x4 - core index']
  #allocation1 [shape = 'u32[144,128]{1,0:T(1,128)}', space=vmem, size = 0x12000, scoped, tag = 'internal scratch']
  %s0 = inlined_call_operand.vmem [shape: f32[1,1,96], index: 0, kind: input, shape index: {}]
  %s1 = inlined_call_operand.vmem [shape: f32[4,128], index: 1, kind: input, shape index: {}]
  %s2 = inlined_call_operand.hbm [shape: bf16[96,384], index: 2, kind: input, shape index: {}]
  %s3 = inlined_call_operand.vmem [shape: f32[1,384], index: 3, kind: input, shape index: {}]
  %s4 = inlined_call_operand.hbm [shape: bf16[384,384], index: 4, kind: input, shape index: {}]
  %s5 = inlined_call_operand.vmem [shape: f32[1,384], index: 5, kind: input, shape index: {}]
  %s6 = inlined_call_operand.hbm [shape: bf16[384,768], index: 6, kind: input, shape index: {}]
  %s7 = inlined_call_operand.vmem [shape: f32[1,768], index: 7, kind: input, shape index: {}]
  %s8 = inlined_call_operand.hbm [shape: bf16[768,384], index: 8, kind: input, shape index: {}]
  %s9 = inlined_call_operand.vmem [shape: f32[1,384], index: 9, kind: input, shape index: {}]
  %s10 = inlined_call_operand.hbm [shape: bf16[96,256], index: 10, kind: input, shape index: {}]
  %s11 = inlined_call_operand.vmem [shape: f32[1,256], index: 11, kind: input, shape index: {}]
  %s12 = inlined_call_operand.hbm [shape: bf16[256,256], index: 12, kind: input, shape index: {}]
  %s13 = inlined_call_operand.vmem [shape: f32[1,256], index: 13, kind: input, shape index: {}]
  %s14 = inlined_call_operand.hbm [shape: bf16[256,128], index: 14, kind: input, shape index: {}]
  %s15 = inlined_call_operand.vmem [shape: f32[1,128], index: 15, kind: input, shape index: {}]
  %s16 = inlined_call_operand.hbm [shape: bf16[512,512], index: 16, kind: input, shape index: {}]
  %s17 = inlined_call_operand.vmem [shape: f32[1,512], index: 17, kind: input, shape index: {}]
  %s18 = inlined_call_operand.hbm [shape: bf16[384,512], index: 18, kind: input, shape index: {}]
  %s19 = inlined_call_operand.vmem [shape: f32[1,512], index: 19, kind: input, shape index: {}]
  %s20 = inlined_call_operand.hbm [shape: bf16[128,128], index: 20, kind: input, shape index: {}]
  %s21 = inlined_call_operand.hbm [shape: f32[1,128], index: 21, kind: input, shape index: {}]
  %s22 = inlined_call_operand.vmem [shape: f32[1,1,128], index: 22, kind: output, shape index: {0}]
  %s23 = inlined_call_operand.vmem [shape: f32[4,128], index: 23, kind: output, shape index: {1}]
  %24 = xla_tuple %s22, %s23
  %s25 = sld [smem:[#allocation0]]
  $region154: #{conv6_forward.1} parent=0
    _
  %s27 = ssub.s32 1, %s25
  %s28 = scalar_select 0, %s27, %s25
  $region1: #{conv6_forward.1} parent=0
    #allocation2 [shape = 'u8[73728]{0}', space=vmem, size = 0x12000, scoped, tag = 'input window, operand 2, single buffered']
    #allocation3 [shape = 's32[1]{0}', space=sflag, size = 0x4, scoped, tag = 'scoped memory for conv6_forward.1']
    #allocation4 [shape = 'u8[294912]{0}', space=vmem, size = 0x48000, scoped, tag = 'input window, operand 4, single buffered']
    #allocation5 [shape = 's32[1]{0}', space=sflag, size = 0x4, scoped, tag = 'scoped memory for conv6_forward.1']
    #allocation6 [shape = 'u8[589824]{0}', space=vmem, size = 0x90000, scoped, tag = 'input window, operand 6, single buffered']
    #allocation7 [shape = 'u8[589824]{0}', space=vmem, size = 0x90000, scoped, tag = 'input window, operand 8, single buffered']
    #allocation8 [shape = 's32[1]{0}', space=sflag, size = 0x4, scoped, tag = 'scoped memory for conv6_forward.1']
    #allocation9 [shape = 'u8[49152]{0}', space=vmem, size = 0xc000, scoped, tag = 'input window, operand 10, single buffered']
    #allocation10 [shape = 'u8[131072]{0}', space=vmem, size = 0x20000, scoped, tag = 'input window, operand 12, single buffered']
    #allocation11 [shape = 's32[1]{0}', space=sflag, size = 0x4, scoped, tag = 'scoped memory for conv6_forward.1']
    #allocation12 [shape = 'u8[65536]{0}', space=vmem, size = 0x10000, scoped, tag = 'input window, operand 14, single buffered']
    #allocation13 [shape = 'u8[524288]{0}', space=vmem, size = 0x80000, scoped, tag = 'input window, operand 16, single buffered']
    #allocation14 [shape = 's32[1]{0}', space=sflag, size = 0x4, scoped, tag = 'scoped memory for conv6_forward.1']
    #allocation15 [shape = 'u8[393216]{0}', space=vmem, size = 0x60000, scoped, tag = 'input window, operand 18, single buffered']
    #allocation16 [shape = 'u8[32768]{0}', space=vmem, size = 0x8000, scoped, tag = 'input window, operand 20, single buffered']
    #allocation17 [shape = 's32[1]{0}', space=sflag, size = 0x4, scoped, tag = 'scoped memory for conv6_forward.1']
    #allocation18 [shape = 'u8[512]{0}', space=vmem, size = 0x400, scoped, tag = 'input window, operand 21, single buffered']
    %29 = vsyncpa [#allocation3], 0
    %30 = vsyncpa [#allocation5], 0
    %31 = vsyncpa [#allocation8], 0
    %32 = vsyncpa [#allocation11], 0
    %33 = vsyncpa [#allocation14], 0
    %34 = vsyncpa [#allocation17], 0
    // Predicated region
    $region2: #{conv6_forward.1} parent=1 // pred_check
      _
    $region3: #{conv6_forward.1} parent=1 // pred_check_branch
      %36 = sbr.rel (0) target = $region5
    $region4: #{conv6_forward.1} parent=1 // pred_region
      _
    $region5: #{conv6_forward.1} parent=1 // pred_fallthru
      _
    // Predicated region
    $region6: #{conv6_forward.1} parent=1 // pred_check
      _
    $region7: #{conv6_forward.1} parent=1 // pred_check_branch
      %38 = sbr.rel (0) target = $region9
    $region8: #{conv6_forward.1} parent=1 // pred_region
      _
    $region9: #{conv6_forward.1} parent=1 // pred_fallthru
      _
    // Predicated region
    $region10: #{conv6_forward.1} parent=1 // pred_check
      _
    $region11: #{conv6_forward.1} parent=1 // pred_check_branch
      %40 = sbr.rel (0) target = $region13
    $region12: #{conv6_forward.1} parent=1 // pred_region
      %s42 = ssub.s32 2304, 2304
      %43 = vsyncadd [#allocation3], %s42
      %s44 = sshll.u32 [#allocation2], 4
      %s45 = int_to_ptr.vmem [resolvable:$true] %s44
      %50 = dma.hbm_to_vmem [thread:$0]  %s2, 2304, %s45, [#allocation3], 192, 192, 12
    $region13: #{conv6_forward.1} parent=1 // pred_fallthru
      _
    // Predicated region
    $region14: #{conv6_forward.1} parent=1 // pred_check
      _
    $region15: #{conv6_forward.1} parent=1 // pred_check_branch
      %52 = sbr.rel (0) target = $region17
    $region16: #{conv6_forward.1} parent=1 // pred_region
      _
    $region17: #{conv6_forward.1} parent=1 // pred_fallthru
      _
    // Predicated region
    $region18: #{conv6_forward.1} parent=1 // pred_check
      _
    $region19: #{conv6_forward.1} parent=1 // pred_check_branch
      %54 = sbr.rel (0) target = $region21
    $region20: #{conv6_forward.1} parent=1 // pred_region
      %s56 = ssub.s32 9216, 9216
      %57 = vsyncadd [#allocation5], %s56
      %s58 = sshll.u32 [#allocation4], 4
      %s59 = int_to_ptr.vmem [resolvable:$true] %s58
      %64 = dma.hbm_to_vmem [thread:$0]  %s4, 9216, %s59, [#allocation5], 192, 192, 12
    $region21: #{conv6_forward.1} parent=1 // pred_fallthru
      _
    // Predicated region
    $region22: #{conv6_forward.1} parent=1 // pred_check
      _
    $region23: #{conv6_forward.1} parent=1 // pred_check_branch
      %66 = sbr.rel (0) target = $region25
    $region24: #{conv6_forward.1} parent=1 // pred_region
      _
    $region25: #{conv6_forward.1} parent=1 // pred_fallthru
      _
    // Predicated region
    $region26: #{conv6_forward.1} parent=1 // pred_check
      _
    $region27: #{conv6_forward.1} parent=1 // pred_check_branch
      %68 = sbr.rel (0) target = $region29
    $region28: #{conv6_forward.1} parent=1 // pred_region
      %s70 = ssub.s32 18432, 18432
      %71 = vsyncadd [#allocation5], %s70
      %s72 = sshll.u32 [#allocation6], 4
      %s73 = int_to_ptr.vmem [resolvable:$true] %s72
      %78 = dma.hbm_to_vmem [thread:$0]  %s6, 18432, %s73, [#allocation5], 384, 384, 24
    $region29: #{conv6_forward.1} parent=1 // pred_fallthru
      _
    // Predicated region
    $region30: #{conv6_forward.1} parent=1 // pred_check
      _
    $region31: #{conv6_forward.1} parent=1 // pred_check_branch
      %80 = sbr.rel (0) target = $region33
    $region32: #{conv6_forward.1} parent=1 // pred_region
      _
    $region33: #{conv6_forward.1} parent=1 // pred_fallthru
      _
    // Predicated region
    $region34: #{conv6_forward.1} parent=1 // pred_check
      _
    $region35: #{conv6_forward.1} parent=1 // pred_check_branch
      %82 = sbr.rel (0) target = $region37
    $region36: #{conv6_forward.1} parent=1 // pred_region
      %s84 = ssub.s32 18432, 18432
      %85 = vsyncadd [#allocation8], %s84
      %s86 = sshll.u32 [#allocation7], 4
      %s87 = int_to_ptr.vmem [resolvable:$true] %s86
      %92 = dma.hbm_to_vmem [thread:$0]  %s8, 18432, %s87, [#allocation8], 192, 192, 12
    $region37: #{conv6_forward.1} parent=1 // pred_fallthru
      _
    // Predicated region
    $region38: #{conv6_forward.1} parent=1 // pred_check
      _
    $region39: #{conv6_forward.1} parent=1 // pred_check_branch
      %94 = sbr.rel (0) target = $region41
    $region40: #{conv6_forward.1} parent=1 // pred_region
      _
    $region41: #{conv6_forward.1} parent=1 // pred_fallthru
      _
    // Predicated region
    $region42: #{conv6_forward.1} parent=1 // pred_check
      _
    $region43: #{conv6_forward.1} parent=1 // pred_check_branch
      %96 = sbr.rel (0) target = $region45
    $region44: #{conv6_forward.1} parent=1 // pred_region
      %s98 = ssub.s32 1536, 1536
      %99 = vsyncadd [#allocation8], %s98
      %s100 = sshll.u32 [#allocation9], 4
      %s101 = int_to_ptr.vmem [resolvable:$true] %s100
      %106 = dma.hbm_to_vmem [thread:$0]  %s10, 1536, %s101, [#allocation8], 128, 128, 8
    $region45: #{conv6_forward.1} parent=1 // pred_fallthru
      _
    // Predicated region
    $region46: #{conv6_forward.1} parent=1 // pred_check
      _
    $region47: #{conv6_forward.1} parent=1 // pred_check_branch
      %108 = sbr.rel (0) target = $region49
    $region48: #{conv6_forward.1} parent=1 // pred_region
      _
    $region49: #{conv6_forward.1} parent=1 // pred_fallthru
      _
    // Predicated region
    $region50: #{conv6_forward.1} parent=1 // pred_check
      _
    $region51: #{conv6_forward.1} parent=1 // pred_check_branch
      %110 = sbr.rel (0) target = $region53
    $region52: #{conv6_forward.1} parent=1 // pred_region
      %s112 = ssub.s32 4096, 4096
      %113 = vsyncadd [#allocation11], %s112
      %s114 = sshll.u32 [#allocation10], 4
      %s115 = int_to_ptr.vmem [resolvable:$true] %s114
      %120 = dma.hbm_to_vmem [thread:$0]  %s12, 4096, %s115, [#allocation11], 128, 128, 8
    $region53: #{conv6_forward.1} parent=1 // pred_fallthru
      _
    // Predicated region
    $region54: #{conv6_forward.1} parent=1 // pred_check
      _
    $region55: #{conv6_forward.1} parent=1 // pred_check_branch
      %122 = sbr.rel (0) target = $region57
    $region56: #{conv6_forward.1} parent=1 // pred_region
      _
    $region57: #{conv6_forward.1} parent=1 // pred_fallthru
      _
    // Predicated region
    $region58: #{conv6_forward.1} parent=1 // pred_check
      _
    $region59: #{conv6_forward.1} parent=1 // pred_check_branch
      %124 = sbr.rel (0) target = $region61
    $region60: #{conv6_forward.1} parent=1 // pred_region
      %s126 = ssub.s32 2048, 2048
      %127 = vsyncadd [#allocation11], %s126
      %s128 = sshll.u32 [#allocation12], 4
      %s129 = int_to_ptr.vmem [resolvable:$true] %s128
      %134 = dma.hbm_to_vmem [thread:$0]  %s14, 2048, %s129, [#allocation11], 64, 64, 4
    $region61: #{conv6_forward.1} parent=1 // pred_fallthru
      _
    // Predicated region
    $region62: #{conv6_forward.1} parent=1 // pred_check
      _
    $region63: #{conv6_forward.1} parent=1 // pred_check_branch
      %136 = sbr.rel (0) target = $region65
    $region64: #{conv6_forward.1} parent=1 // pred_region
      _
    $region65: #{conv6_forward.1} parent=1 // pred_fallthru
      _
    // Predicated region
    $region66: #{conv6_forward.1} parent=1 // pred_check
      _
    $region67: #{conv6_forward.1} parent=1 // pred_check_branch
      %138 = sbr.rel (0) target = $region69
    $region68: #{conv6_forward.1} parent=1 // pred_region
      %s140 = ssub.s32 16384, 16384
      %141 = vsyncadd [#allocation14], %s140
      %s142 = sshll.u32 [#allocation13], 4
      %s143 = int_to_ptr.vmem [resolvable:$true] %s142
      %148 = dma.hbm_to_vmem [thread:$0]  %s16, 16384, %s143, [#allocation14], 256, 256, 16
    $region69: #{conv6_forward.1} parent=1 // pred_fallthru
      _
    // Predicated region
    $region70: #{conv6_forward.1} parent=1 // pred_check
      _
    $region71: #{conv6_forward.1} parent=1 // pred_check_branch
      %150 = sbr.rel (0) target = $region73
    $region72: #{conv6_forward.1} parent=1 // pred_region
      _
    $region73: #{conv6_forward.1} parent=1 // pred_fallthru
      _
    // Predicated region
    $region74: #{conv6_forward.1} parent=1 // pred_check
      _
    $region75: #{conv6_forward.1} parent=1 // pred_check_branch
      %152 = sbr.rel (0) target = $region77
    $region76: #{conv6_forward.1} parent=1 // pred_region
      %s154 = ssub.s32 12288, 12288
      %155 = vsyncadd [#allocation14], %s154
      %s156 = sshll.u32 [#allocation15], 4
      %s157 = int_to_ptr.vmem [resolvable:$true] %s156
      %162 = dma.hbm_to_vmem [thread:$0]  %s18, 12288, %s157, [#allocation14], 256, 256, 16
    $region77: #{conv6_forward.1} parent=1 // pred_fallthru
      _
    // Predicated region
    $region78: #{conv6_forward.1} parent=1 // pred_check
      _
    $region79: #{conv6_forward.1} parent=1 // pred_check_branch
      %164 = sbr.rel (0) target = $region81
    $region80: #{conv6_forward.1} parent=1 // pred_region
      _
    $region81: #{conv6_forward.1} parent=1 // pred_fallthru
      _
    // Predicated region
    $region82: #{conv6_forward.1} parent=1 // pred_check
      _
    $region83: #{conv6_forward.1} parent=1 // pred_check_branch
      %166 = sbr.rel (0) target = $region85
    $region84: #{conv6_forward.1} parent=1 // pred_region
      %s168 = ssub.s32 1024, 1024
      %169 = vsyncadd [#allocation17], %s168
      %s170 = sshll.u32 [#allocation16], 4
      %s171 = int_to_ptr.vmem [resolvable:$true] %s170
      %176 = dma.hbm_to_vmem [thread:$0]  %s20, 1024, %s171, [#allocation17], 64, 64, 4
    $region85: #{conv6_forward.1} parent=1 // pred_fallthru
      _
    // Predicated region
    $region86: #{conv6_forward.1} parent=1 // pred_check
      _
    $region87: #{conv6_forward.1} parent=1 // pred_check_branch
      %178 = sbr.rel (0) target = $region89
    $region88: #{conv6_forward.1} parent=1 // pred_region
      %s180 = ssub.s32 16, 16
      %181 = vsyncadd [#allocation17], %s180
      %s183 = sshll.u32 [#allocation18], 4
      %s184 = int_to_ptr.vmem [resolvable:$true] %s183
      %186 = dma.hbm_to_vmem [thread:$0]  %s21, 16, %s184, [#allocation17]
    $region89: #{conv6_forward.1} parent=1 // pred_fallthru
      _
    // Predicated region
    $region90: #{conv6_forward.1} parent=1 // pred_check
      _
    $region91: #{conv6_forward.1} parent=1 // pred_check_branch
      %188 = sbr.rel (0) target = $region93
    $region92: #{conv6_forward.1} parent=1 // pred_region
      %189 = dma.done [#allocation3], 2304
    $region93: #{conv6_forward.1} parent=1 // pred_fallthru
      _
    // Predicated region
    $region94: #{conv6_forward.1} parent=1 // pred_check
      _
    $region95: #{conv6_forward.1} parent=1 // pred_check_branch
      %191 = sbr.rel (0) target = $region97
    $region96: #{conv6_forward.1} parent=1 // pred_region
      %192 = dma.done [#allocation5], 9216
    $region97: #{conv6_forward.1} parent=1 // pred_fallthru
      _
    // Predicated region
    $region98: #{conv6_forward.1} parent=1 // pred_check
      _
    $region99: #{conv6_forward.1} parent=1 // pred_check_branch
      %194 = sbr.rel (0) target = $region101
    $region100: #{conv6_forward.1} parent=1 // pred_region
      %195 = dma.done [#allocation5], 18432
    $region101: #{conv6_forward.1} parent=1 // pred_fallthru
      _
    // Predicated region
    $region102: #{conv6_forward.1} parent=1 // pred_check
      _
    $region103: #{conv6_forward.1} parent=1 // pred_check_branch
      %197 = sbr.rel (0) target = $region105
    $region104: #{conv6_forward.1} parent=1 // pred_region
      %198 = dma.done [#allocation8], 18432
    $region105: #{conv6_forward.1} parent=1 // pred_fallthru
      _
    // Predicated region
    $region106: #{conv6_forward.1} parent=1 // pred_check
      _
    $region107: #{conv6_forward.1} parent=1 // pred_check_branch
      %200 = sbr.rel (0) target = $region109
    $region108: #{conv6_forward.1} parent=1 // pred_region
      %201 = dma.done [#allocation8], 1536
    $region109: #{conv6_forward.1} parent=1 // pred_fallthru
      _
    // Predicated region
    $region110: #{conv6_forward.1} parent=1 // pred_check
      _
    $region111: #{conv6_forward.1} parent=1 // pred_check_branch
      %203 = sbr.rel (0) target = $region113
    $region112: #{conv6_forward.1} parent=1 // pred_region
      %204 = dma.done [#allocation11], 4096
    $region113: #{conv6_forward.1} parent=1 // pred_fallthru
      _
    // Predicated region
    $region114: #{conv6_forward.1} parent=1 // pred_check
      _
    $region115: #{conv6_forward.1} parent=1 // pred_check_branch
      %206 = sbr.rel (0) target = $region117
    $region116: #{conv6_forward.1} parent=1 // pred_region
      %207 = dma.done [#allocation11], 2048
    $region117: #{conv6_forward.1} parent=1 // pred_fallthru
      _
    // Predicated region
    $region118: #{conv6_forward.1} parent=1 // pred_check
      _
    $region119: #{conv6_forward.1} parent=1 // pred_check_branch
      %209 = sbr.rel (0) target = $region121
    $region120: #{conv6_forward.1} parent=1 // pred_region
      %210 = dma.done [#allocation14], 16384
    $region121: #{conv6_forward.1} parent=1 // pred_fallthru
      _
    // Predicated region
    $region122: #{conv6_forward.1} parent=1 // pred_check
      _
    $region123: #{conv6_forward.1} parent=1 // pred_check_branch
      %212 = sbr.rel (0) target = $region125
    $region124: #{conv6_forward.1} parent=1 // pred_region
      %213 = dma.done [#allocation14], 12288
    $region125: #{conv6_forward.1} parent=1 // pred_fallthru
      _
    // Predicated region
    $region126: #{conv6_forward.1} parent=1 // pred_check
      _
    $region127: #{conv6_forward.1} parent=1 // pred_check_branch
      %215 = sbr.rel (0) target = $region129
    $region128: #{conv6_forward.1} parent=1 // pred_region
      %216 = dma.done [#allocation17], 1024
    $region129: #{conv6_forward.1} parent=1 // pred_fallthru
      _
    // Predicated region
    $region130: #{conv6_forward.1} parent=1 // pred_check
      _
    $region131: #{conv6_forward.1} parent=1 // pred_check_branch
      %218 = sbr.rel (0) target = $region133
    $region132: #{conv6_forward.1} parent=1 // pred_region
      %219 = dma.done [#allocation17], 16
    $region133: #{conv6_forward.1} parent=1 // pred_fallthru
      _
    %p221 = scmp.eq.s32.totalorder 0, 0
    // Predicated region
    $region134: #{conv6_forward.1} parent=1 // pred_check
      %p222 = pneg %p221
    $region135: #{conv6_forward.1} parent=1 // pred_check_branch
      %224 = sbr.rel (%p222) target = $region137
    $region136: #{conv6_forward.1} parent=1 // pred_region
      %v225 = vld [vmem:[%s1] sm:$0xf]
      %226 = vst [vmem:[%s23] sm:$0xf] %v225
    $region137: #{conv6_forward.1} parent=1 // pred_fallthru
      _
    %v227 = vld [vmem:[%s0] sm:$0x1]
    %v228 = vld [vmem:[%s23] sm:$0x1]
    %v229 = vld [vmem:[%s23 + $0x1] sm:$0x1]
    %v230 = vld [vmem:[%s23 + $0x2] sm:$0x1]
    %v231 = vld [vmem:[%s23 + $0x3] sm:$0x1]
    %v232 = vpack.c.bf16 %v227, %v227
    %v233 = vld [vmem:[#allocation2] sm:$0xff]
    %v234 = vld [vmem:[#allocation2 + $0x8] sm:$0xf]
    %v235 = vld [vmem:[#allocation2 + $0xc] sm:$0xff]
    %v236 = vld [vmem:[#allocation2 + $0x14] sm:$0xf]
    %v237 = vld [vmem:[#allocation2 + $0x18] sm:$0xff]
    %v238 = vld [vmem:[#allocation2 + $0x20] sm:$0xf]
    %v239 = vld [vmem:[#allocation2 + $0x24] sm:$0xff]
    %v240 = vld [vmem:[#allocation2 + $0x2c] sm:$0xf]
    %v241 = vld [vmem:[#allocation2 + $0x30] sm:$0xff]
    %v242 = vld [vmem:[#allocation2 + $0x38] sm:$0xf]
    %v243 = vld [vmem:[#allocation2 + $0x3c] sm:$0xff]
    %v244 = vld [vmem:[#allocation2 + $0x44] sm:$0xf]
    %v245 = vld [vmem:[#allocation2 + $0x48] sm:$0xff]
    %v246 = vld [vmem:[#allocation2 + $0x50] sm:$0xf]
    %v247 = vld [vmem:[#allocation2 + $0x54] sm:$0xff]
    %v248 = vld [vmem:[#allocation2 + $0x5c] sm:$0xf]
    %v249 = vld [vmem:[#allocation2 + $0x60] sm:$0xff]
    %v250 = vld [vmem:[#allocation2 + $0x68] sm:$0xf]
    %v251 = vld [vmem:[#allocation2 + $0x6c] sm:$0xff]
    %v252 = vld [vmem:[#allocation2 + $0x74] sm:$0xf]
    %v253 = vld [vmem:[#allocation2 + $0x78] sm:$0xff]
    %v254 = vld [vmem:[#allocation2 + $0x80] sm:$0xf]
    %v255 = vld [vmem:[#allocation2 + $0x84] sm:$0xff]
    %v256 = vld [vmem:[#allocation2 + $0x8c] sm:$0xf]
    %v257 = vld [vmem:[%s3] sm:$0x7]
    %v282 = vunpack.c.l.b16 %v233
    %v283 = vunpack.c.h.b16 %v233
    %v284 = vunpack.c.l.b16 %v234
    %v285 = vunpack.c.l.b16 %v235
    %v286 = vunpack.c.h.b16 %v235
    %v287 = vunpack.c.l.b16 %v236
    %v288 = vunpack.c.l.b16 %v237
    %v289 = vunpack.c.h.b16 %v237
    %v290 = vunpack.c.l.b16 %v238
    %v291 = vunpack.c.l.b16 %v239
    %v292 = vunpack.c.h.b16 %v239
    %v293 = vunpack.c.l.b16 %v240
    %v294 = vunpack.c.l.b16 %v241
    %v295 = vunpack.c.h.b16 %v241
    %v296 = vunpack.c.l.b16 %v242
    %v297 = vunpack.c.l.b16 %v243
    %v298 = vunpack.c.h.b16 %v243
    %v299 = vunpack.c.l.b16 %v244
    %v300 = vunpack.c.l.b16 %v245
    %v301 = vunpack.c.h.b16 %v245
    %v302 = vunpack.c.l.b16 %v246
    %v303 = vunpack.c.l.b16 %v247
    %v304 = vunpack.c.h.b16 %v247
    %v305 = vunpack.c.l.b16 %v248
    %v306 = vunpack.c.l.b16 %v249
    %v307 = vunpack.c.h.b16 %v249
    %v308 = vunpack.c.l.b16 %v250
    %v309 = vunpack.c.l.b16 %v251
    %v310 = vunpack.c.h.b16 %v251
    %v311 = vunpack.c.l.b16 %v252
    %v312 = vunpack.c.l.b16 %v253
    %v313 = vunpack.c.h.b16 %v253
    %v314 = vunpack.c.l.b16 %v254
    %v315 = vunpack.c.l.b16 %v255
    %v316 = vunpack.c.h.b16 %v255
    %v317 = vunpack.c.l.b16 %v256
    %v318 = vpack.c.b16 %v285, %v282
    %v319 = vpack.c.b16 %v286, %v283
    %v320 = vpack.c.b16 %v287, %v284
    %v321 = vpack.c.b16 %v291, %v288
    %v322 = vpack.c.b16 %v292, %v289
    %v323 = vpack.c.b16 %v293, %v290
    %v324 = vpack.c.b16 %v297, %v294
    %v325 = vpack.c.b16 %v298, %v295
    %v326 = vpack.c.b16 %v299, %v296
    %v327 = vpack.c.b16 %v303, %v300
    %v328 = vpack.c.b16 %v304, %v301
    %v329 = vpack.c.b16 %v305, %v302
    %v330 = vpack.c.b16 %v309, %v306
    %v331 = vpack.c.b16 %v310, %v307
    %v332 = vpack.c.b16 %v311, %v308
    %v333 = vpack.c.b16 %v315, %v312
    %v334 = vpack.c.b16 %v316, %v313
    %v335 = vpack.c.b16 %v317, %v314
    %v355 = vlaneseq
    %v356 = vshrl.u32 %v355, 7
    %v357 = vsub.s32 0, %v356
    %v358 = vrot.slane %v257, %v357
    %v359 = vlaneseq
    %v360 = vshrl.u32 %v359, 7
    %v361 = vsub.s32 1, %v360
    %v362 = vrot.slane %v257, %v361
    %v363 = vlaneseq
    %v364 = vshrl.u32 %v363, 7
    %v365 = vsub.s32 2, %v364
    %v366 = vrot.slane %v257, %v365
    %vm370 = vcmask 785408
    %v372 = vsel %vm370, %v232, 0
    %374 = vmatprep.subr.bf16.mxu0 %v319
    %375 = vmatpush1.bf16.msra.mxu0 %v318
    %376 = vmatprep.subr.bf16.mxu0 %v322
    %377 = vmatpush1.bf16.msra.mxu0 %v321
    %378 = vmatprep.subr.bf16.mxu0 %v325
    %379 = vmatpush1.bf16.msra.mxu0 %v324
    %380 = vmatprep.subr.bf16.mxu0 %v328
    %381 = vmatpush1.bf16.msra.mxu0 %v327
    %382 = vmatprep.subr.bf16.mxu0 %v331
    %383 = vmatpush1.bf16.msra.mxu0 %v330
    %384 = vmatprep.subr.bf16.mxu0 %v334
    %385 = vmatpush1.bf16.msra.mxu0 %v333
    %386 = vmatprep.subr.bf16.mxu0 0
    %387 = vmatpush1.bf16.msra.mxu0 0
    %388 = vmatprep.subr.bf16.mxu0 0
    %389 = vmatpush1.bf16.msra.mxu0 0
    %390 = vmatprep.subr.bf16.mxu0 0
    %391 = vmatpush1.bf16.msra.mxu0 0
    %392 = vmatprep.subr.bf16.mxu0 0
    %393 = vmatpush1.bf16.msra.mxu0 0
    %394 = vmatprep.subr.bf16.mxu0 0
    %395 = vmatpush1.bf16.msra.mxu0 0
    %396 = vmatprep.subr.bf16.mxu0 0
    %397 = vmatpush1.bf16.msra.mxu0 0
    %398 = vmatprep.subr.bf16.mxu0 0
    %399 = vmatpush1.bf16.msra.mxu0 0
    %400 = vmatprep.subr.bf16.mxu0 0
    %401 = vmatpush1.bf16.msra.mxu0 0
    %402 = vmatprep.subr.bf16.mxu0 0
    %403 = vmatpush1.bf16.msra.mxu0 0
    %404 = vmatprep.subr.bf16.mxu0 0
    %405 = vmatpush1.bf16.msra.mxu0 0
    %406 = vmatprep.mubr.bf16.mxu0 0
    %407 = vmatmul.mubr.bf16.gmra.mrb[0].mxu0 %v372
    %v408 = vpop.f32.mrb[0].mxu0
    %v409 = vadd.f32 %v358, %v408
    %v410 = vpop.f32.mrb[0].mxu0
    %v411 = vadd.f32 %v362, %v410
    %v412 = vpop.f32.mrb[0].mxu0
    %v413 = vpop.f32.mrb[0].mxu0
    %414 = vdwg.mxu0
    %415 = vmatprep.subr.bf16.mxu0 0
    %416 = vmatpush1.bf16.msra.mxu0 %v320
    %417 = vmatprep.subr.bf16.mxu0 0
    %418 = vmatpush1.bf16.msra.mxu0 %v323
    %419 = vmatprep.subr.bf16.mxu0 0
    %420 = vmatpush1.bf16.msra.mxu0 %v326
    %421 = vmatprep.subr.bf16.mxu0 0
    %422 = vmatpush1.bf16.msra.mxu0 %v329
    %423 = vmatprep.subr.bf16.mxu0 0
    %424 = vmatpush1.bf16.msra.mxu0 %v332
    %425 = vmatprep.subr.bf16.mxu0 0
    %426 = vmatpush1.bf16.msra.mxu0 %v335
    %427 = vmatprep.subr.bf16.mxu0 0
    %428 = vmatpush1.bf16.msra.mxu0 0
    %429 = vmatprep.subr.bf16.mxu0 0
    %430 = vmatpush1.bf16.msra.mxu0 0
    %431 = vmatprep.subr.bf16.mxu0 0
    %432 = vmatpush1.bf16.msra.mxu0 0
    %433 = vmatprep.subr.bf16.mxu0 0
    %434 = vmatpush1.bf16.msra.mxu0 0
    %435 = vmatprep.subr.bf16.mxu0 0
    %436 = vmatpush1.bf16.msra.mxu0 0
    %437 = vmatprep.subr.bf16.mxu0 0
    %438 = vmatpush1.bf16.msra.mxu0 0
    %439 = vmatprep.subr.bf16.mxu0 0
    %440 = vmatpush1.bf16.msra.mxu0 0
    %441 = vmatprep.subr.bf16.mxu0 0
    %442 = vmatpush1.bf16.msra.mxu0 0
    %443 = vmatprep.subr.bf16.mxu0 0
    %444 = vmatpush1.bf16.msra.mxu0 0
    %445 = vmatprep.subr.bf16.mxu0 0
    %446 = vmatpush1.bf16.msra.mxu0 0
    %447 = vmatprep.mubr.bf16.mxu0 0
    %448 = vmatmul.mubr.bf16.gmra.mrb[0].mxu0 %v372
    %v449 = vpop.f32.mrb[0].mxu0
    %v450 = vadd.f32 %v366, %v449
    %v451 = vpop.f32.mrb[0].mxu0
    %v452 = vpop.f32.mrb[0].mxu0
    %v453 = vpop.f32.mrb[0].mxu0
    %454 = vdwg.mxu0
    %vm455 = vcmp.gt.f32.partialorder %v409, 0.0
    %vm456 = vcmp.gt.f32.partialorder %v411, 0.0
    %vm457 = vcmp.gt.f32.partialorder %v450, 0.0
    %v458 = vmul.f32 %v409, 0.1
    %v459 = vmul.f32 %v411, 0.1
    %v460 = vmul.f32 %v450, 0.1
    %v461 = vsel %vm455, %v409, %v458
    %v462 = vsel %vm456, %v411, %v459
    %v463 = vsel %vm457, %v450, %v460
    %v464 = vpack.c.bf16 %v461, %v461
    %v465 = vpack.c.bf16 %v462, %v462
    %v466 = vpack.c.bf16 %v463, %v463
    %v467 = vld [vmem:[#allocation4] sm:$0xff]
    %v468 = vld [vmem:[#allocation4 + $0x8] sm:$0xf]
    %v469 = vld [vmem:[#allocation4 + $0xc] sm:$0xff]
    %v470 = vld [vmem:[#allocation4 + $0x14] sm:$0xf]
    %v471 = vld [vmem:[#allocation4 + $0x18] sm:$0xff]
    %v472 = vld [vmem:[#allocation4 + $0x20] sm:$0xf]
    %v473 = vld [vmem:[#allocation4 + $0x24] sm:$0xff]
    %v474 = vld [vmem:[#allocation4 + $0x2c] sm:$0xf]
    %v475 = vld [vmem:[#allocation4 + $0x30] sm:$0xff]
    %v476 = vld [vmem:[#allocation4 + $0x38] sm:$0xf]
    %v477 = vld [vmem:[#allocation4 + $0x3c] sm:$0xff]
    %v478 = vld [vmem:[#allocation4 + $0x44] sm:$0xf]
    %v479 = vld [vmem:[#allocation4 + $0x48] sm:$0xff]
    %v480 = vld [vmem:[#allocation4 + $0x50] sm:$0xf]
    %v481 = vld [vmem:[#allocation4 + $0x54] sm:$0xff]
    %v482 = vld [vmem:[#allocation4 + $0x5c] sm:$0xf]
    %v483 = vld [vmem:[#allocation4 + $0x60] sm:$0xff]
    %v484 = vld [vmem:[#allocation4 + $0x68] sm:$0xf]
    %v485 = vld [vmem:[#allocation4 + $0x6c] sm:$0xff]
    %v486 = vld [vmem:[#allocation4 + $0x74] sm:$0xf]
    %v487 = vld [vmem:[#allocation4 + $0x78] sm:$0xff]
    %v488 = vld [vmem:[#allocation4 + $0x80] sm:$0xf]
    %v489 = vld [vmem:[#allocation4 + $0x84] sm:$0xff]
    %v490 = vld [vmem:[#allocation4 + $0x8c] sm:$0xf]
    %v491 = vld [vmem:[#allocation4 + $0x90] sm:$0xff]
    %v492 = vld [vmem:[#allocation4 + $0x98] sm:$0xf]
    %v493 = vld [vmem:[#allocation4 + $0x9c] sm:$0xff]
    %v494 = vld [vmem:[#allocation4 + $0xa4] sm:$0xf]
    %v495 = vld [vmem:[#allocation4 + $0xa8] sm:$0xff]
    %v496 = vld [vmem:[#allocation4 + $0xb0] sm:$0xf]
    %v497 = vld [vmem:[#allocation4 + $0xb4] sm:$0xff]
    %v498 = vld [vmem:[#allocation4 + $0xbc] sm:$0xf]
    %v499 = vld [vmem:[#allocation4 + $0xc0] sm:$0xff]
    %v500 = vld [vmem:[#allocation4 + $0xc8] sm:$0xf]
    %v501 = vld [vmem:[#allocation4 + $0xcc] sm:$0xff]
    %v502 = vld [vmem:[#allocation4 + $0xd4] sm:$0xf]
    %v503 = vld [vmem:[#allocation4 + $0xd8] sm:$0xff]
    %v504 = vld [vmem:[#allocation4 + $0xe0] sm:$0xf]
    %v505 = vld [vmem:[#allocation4 + $0xe4] sm:$0xff]
    %v506 = vld [vmem:[#allocation4 + $0xec] sm:$0xf]
    %v507 = vld [vmem:[#allocation4 + $0xf0] sm:$0xff]
    %v508 = vld [vmem:[#allocation4 + $0xf8] sm:$0xf]
    %v509 = vld [vmem:[#allocation4 + $0xfc] sm:$0xff]
    %v510 = vld [vmem:[#allocation4 + $0x104] sm:$0xf]
    %v511 = vld [vmem:[#allocation4 + $0x108] sm:$0xff]
    %v512 = vld [vmem:[#allocation4 + $0x110] sm:$0xf]
    %v513 = vld [vmem:[#allocation4 + $0x114] sm:$0xff]
    %v514 = vld [vmem:[#allocation4 + $0x11c] sm:$0xf]
    %v515 = vld [vmem:[#allocation4 + $0x120] sm:$0xff]
    %v516 = vld [vmem:[#allocation4 + $0x128] sm:$0xf]
    %v517 = vld [vmem:[#allocation4 + $0x12c] sm:$0xff]
    %v518 = vld [vmem:[#allocation4 + $0x134] sm:$0xf]
    %v519 = vld [vmem:[#allocation4 + $0x138] sm:$0xff]
    %v520 = vld [vmem:[#allocation4 + $0x140] sm:$0xf]
    %v521 = vld [vmem:[#allocation4 + $0x144] sm:$0xff]
    %v522 = vld [vmem:[#allocation4 + $0x14c] sm:$0xf]
    %v523 = vld [vmem:[#allocation4 + $0x150] sm:$0xff]
    %v524 = vld [vmem:[#allocation4 + $0x158] sm:$0xf]
    %v525 = vld [vmem:[#allocation4 + $0x15c] sm:$0xff]
    %v526 = vld [vmem:[#allocation4 + $0x164] sm:$0xf]
    %v527 = vld [vmem:[#allocation4 + $0x168] sm:$0xff]
    %v528 = vld [vmem:[#allocation4 + $0x170] sm:$0xf]
    %v529 = vld [vmem:[#allocation4 + $0x174] sm:$0xff]
    %v530 = vld [vmem:[#allocation4 + $0x17c] sm:$0xf]
    %v531 = vld [vmem:[#allocation4 + $0x180] sm:$0xff]
    %v532 = vld [vmem:[#allocation4 + $0x188] sm:$0xf]
    %v533 = vld [vmem:[#allocation4 + $0x18c] sm:$0xff]
    %v534 = vld [vmem:[#allocation4 + $0x194] sm:$0xf]
    %v535 = vld [vmem:[#allocation4 + $0x198] sm:$0xff]
    %v536 = vld [vmem:[#allocation4 + $0x1a0] sm:$0xf]
    %v537 = vld [vmem:[#allocation4 + $0x1a4] sm:$0xff]
    %v538 = vld [vmem:[#allocation4 + $0x1ac] sm:$0xf]
    %v539 = vld [vmem:[#allocation4 + $0x1b0] sm:$0xff]
    %v540 = vld [vmem:[#allocation4 + $0x1b8] sm:$0xf]
    %v541 = vld [vmem:[#allocation4 + $0x1bc] sm:$0xff]
    %v542 = vld [vmem:[#allocation4 + $0x1c4] sm:$0xf]
    %v543 = vld [vmem:[#allocation4 + $0x1c8] sm:$0xff]
    %v544 = vld [vmem:[#allocation4 + $0x1d0] sm:$0xf]
    %v545 = vld [vmem:[#allocation4 + $0x1d4] sm:$0xff]
    %v546 = vld [vmem:[#allocation4 + $0x1dc] sm:$0xf]
    %v547 = vld [vmem:[#allocation4 + $0x1e0] sm:$0xff]
    %v548 = vld [vmem:[#allocation4 + $0x1e8] sm:$0xf]
    %v549 = vld [vmem:[#allocation4 + $0x1ec] sm:$0xff]
    %v550 = vld [vmem:[#allocation4 + $0x1f4] sm:$0xf]
    %v551 = vld [vmem:[#allocation4 + $0x1f8] sm:$0xff]
    %v552 = vld [vmem:[#allocation4 + $0x200] sm:$0xf]
    %v553 = vld [vmem:[#allocation4 + $0x204] sm:$0xff]
    %v554 = vld [vmem:[#allocation4 + $0x20c] sm:$0xf]
    %v555 = vld [vmem:[#allocation4 + $0x210] sm:$0xff]
    %v556 = vld [vmem:[#allocation4 + $0x218] sm:$0xf]
    %v557 = vld [vmem:[#allocation4 + $0x21c] sm:$0xff]
    %v558 = vld [vmem:[#allocation4 + $0x224] sm:$0xf]
    %v559 = vld [vmem:[#allocation4 + $0x228] sm:$0xff]
    %v560 = vld [vmem:[#allocation4 + $0x230] sm:$0xf]
    %v561 = vld [vmem:[#allocation4 + $0x234] sm:$0xff]
    %v562 = vld [vmem:[#allocation4 + $0x23c] sm:$0xf]
    %v563 = vld [vmem:[%s5] sm:$0x7]
    %v660 = vunpack.c.l.b16 %v467
    %v661 = vunpack.c.h.b16 %v467
    %v662 = vunpack.c.l.b16 %v468
    %v663 = vunpack.c.l.b16 %v469
    %v664 = vunpack.c.h.b16 %v469
    %v665 = vunpack.c.l.b16 %v470
    %v666 = vunpack.c.l.b16 %v471
    %v667 = vunpack.c.h.b16 %v471
    %v668 = vunpack.c.l.b16 %v472
    %v669 = vunpack.c.l.b16 %v473
    %v670 = vunpack.c.h.b16 %v473
    %v671 = vunpack.c.l.b16 %v474
    %v672 = vunpack.c.l.b16 %v475
    %v673 = vunpack.c.h.b16 %v475
    %v674 = vunpack.c.l.b16 %v476
    %v675 = vunpack.c.l.b16 %v477
    %v676 = vunpack.c.h.b16 %v477
    %v677 = vunpack.c.l.b16 %v478
    %v678 = vunpack.c.l.b16 %v479
    %v679 = vunpack.c.h.b16 %v479
    %v680 = vunpack.c.l.b16 %v480
    %v681 = vunpack.c.l.b16 %v481
    %v682 = vunpack.c.h.b16 %v481
    %v683 = vunpack.c.l.b16 %v482
    %v684 = vunpack.c.l.b16 %v483
    %v685 = vunpack.c.h.b16 %v483
    %v686 = vunpack.c.l.b16 %v484
    %v687 = vunpack.c.l.b16 %v485
    %v688 = vunpack.c.h.b16 %v485
    %v689 = vunpack.c.l.b16 %v486
    %v690 = vunpack.c.l.b16 %v487
    %v691 = vunpack.c.h.b16 %v487
    %v692 = vunpack.c.l.b16 %v488
    %v693 = vunpack.c.l.b16 %v489
    %v694 = vunpack.c.h.b16 %v489
    %v695 = vunpack.c.l.b16 %v490
    %v696 = vunpack.c.l.b16 %v491
    %v697 = vunpack.c.h.b16 %v491
    %v698 = vunpack.c.l.b16 %v492
    %v699 = vunpack.c.l.b16 %v493
    %v700 = vunpack.c.h.b16 %v493
    %v701 = vunpack.c.l.b16 %v494
    %v702 = vunpack.c.l.b16 %v495
    %v703 = vunpack.c.h.b16 %v495
    %v704 = vunpack.c.l.b16 %v496
    %v705 = vunpack.c.l.b16 %v497
    %v706 = vunpack.c.h.b16 %v497
    %v707 = vunpack.c.l.b16 %v498
    %v708 = vunpack.c.l.b16 %v499
    %v709 = vunpack.c.h.b16 %v499
    %v710 = vunpack.c.l.b16 %v500
    %v711 = vunpack.c.l.b16 %v501
    %v712 = vunpack.c.h.b16 %v501
    %v713 = vunpack.c.l.b16 %v502
    %v714 = vunpack.c.l.b16 %v503
    %v715 = vunpack.c.h.b16 %v503
    %v716 = vunpack.c.l.b16 %v504
    %v717 = vunpack.c.l.b16 %v505
    %v718 = vunpack.c.h.b16 %v505
    %v719 = vunpack.c.l.b16 %v506
    %v720 = vunpack.c.l.b16 %v507
    %v721 = vunpack.c.h.b16 %v507
    %v722 = vunpack.c.l.b16 %v508
    %v723 = vunpack.c.l.b16 %v509
    %v724 = vunpack.c.h.b16 %v509
    %v725 = vunpack.c.l.b16 %v510
    %v726 = vunpack.c.l.b16 %v511
    %v727 = vunpack.c.h.b16 %v511
    %v728 = vunpack.c.l.b16 %v512
    %v729 = vunpack.c.l.b16 %v513
    %v730 = vunpack.c.h.b16 %v513
    %v731 = vunpack.c.l.b16 %v514
    %v732 = vunpack.c.l.b16 %v515
    %v733 = vunpack.c.h.b16 %v515
    %v734 = vunpack.c.l.b16 %v516
    %v735 = vunpack.c.l.b16 %v517
    %v736 = vunpack.c.h.b16 %v517
    %v737 = vunpack.c.l.b16 %v518
    %v738 = vunpack.c.l.b16 %v519
    %v739 = vunpack.c.h.b16 %v519
    %v740 = vunpack.c.l.b16 %v520
    %v741 = vunpack.c.l.b16 %v521
    %v742 = vunpack.c.h.b16 %v521
    %v743 = vunpack.c.l.b16 %v522
    %v744 = vunpack.c.l.b16 %v523
    %v745 = vunpack.c.h.b16 %v523
    %v746 = vunpack.c.l.b16 %v524
    %v747 = vunpack.c.l.b16 %v525
    %v748 = vunpack.c.h.b16 %v525
    %v749 = vunpack.c.l.b16 %v526
    %v750 = vunpack.c.l.b16 %v527
    %v751 = vunpack.c.h.b16 %v527
    %v752 = vunpack.c.l.b16 %v528
    %v753 = vunpack.c.l.b16 %v529
    %v754 = vunpack.c.h.b16 %v529
    %v755 = vunpack.c.l.b16 %v530
    %v756 = vunpack.c.l.b16 %v531
    %v757 = vunpack.c.h.b16 %v531
    %v758 = vunpack.c.l.b16 %v532
    %v759 = vunpack.c.l.b16 %v533
    %v760 = vunpack.c.h.b16 %v533
    %v761 = vunpack.c.l.b16 %v534
    %v762 = vunpack.c.l.b16 %v535
    %v763 = vunpack.c.h.b16 %v535
    %v764 = vunpack.c.l.b16 %v536
    %v765 = vunpack.c.l.b16 %v537
    %v766 = vunpack.c.h.b16 %v537
    %v767 = vunpack.c.l.b16 %v538
    %v768 = vunpack.c.l.b16 %v539
    %v769 = vunpack.c.h.b16 %v539
    %v770 = vunpack.c.l.b16 %v540
    %v771 = vunpack.c.l.b16 %v541
    %v772 = vunpack.c.h.b16 %v541
    %v773 = vunpack.c.l.b16 %v542
    %v774 = vunpack.c.l.b16 %v543
    %v775 = vunpack.c.h.b16 %v543
    %v776 = vunpack.c.l.b16 %v544
    %v777 = vunpack.c.l.b16 %v545
    %v778 = vunpack.c.h.b16 %v545
    %v779 = vunpack.c.l.b16 %v546
    %v780 = vunpack.c.l.b16 %v547
    %v781 = vunpack.c.h.b16 %v547
    %v782 = vunpack.c.l.b16 %v548
    %v783 = vunpack.c.l.b16 %v549
    %v784 = vunpack.c.h.b16 %v549
    %v785 = vunpack.c.l.b16 %v550
    %v786 = vunpack.c.l.b16 %v551
    %v787 = vunpack.c.h.b16 %v551
    %v788 = vunpack.c.l.b16 %v552
    %v789 = vunpack.c.l.b16 %v553
    %v790 = vunpack.c.h.b16 %v553
    %v791 = vunpack.c.l.b16 %v554
    %v792 = vunpack.c.l.b16 %v555
    %v793 = vunpack.c.h.b16 %v555
    %v794 = vunpack.c.l.b16 %v556
    %v795 = vunpack.c.l.b16 %v557
    %v796 = vunpack.c.h.b16 %v557
    %v797 = vunpack.c.l.b16 %v558
    %v798 = vunpack.c.l.b16 %v559
    %v799 = vunpack.c.h.b16 %v559
    %v800 = vunpack.c.l.b16 %v560
    %v801 = vunpack.c.l.b16 %v561
    %v802 = vunpack.c.h.b16 %v561
    %v803 = vunpack.c.l.b16 %v562
    %v804 = vpack.c.b16 %v663, %v660
    %v805 = vpack.c.b16 %v664, %v661
    %v806 = vpack.c.b16 %v665, %v662
    %v807 = vpack.c.b16 %v669, %v666
    %v808 = vpack.c.b16 %v670, %v667
    %v809 = vpack.c.b16 %v671, %v668
    %v810 = vpack.c.b16 %v675, %v672
    %v811 = vpack.c.b16 %v676, %v673
    %v812 = vpack.c.b16 %v677, %v674
    %v813 = vpack.c.b16 %v681, %v678
    %v814 = vpack.c.b16 %v682, %v679
    %v815 = vpack.c.b16 %v683, %v680
    %v816 = vpack.c.b16 %v687, %v684
    %v817 = vpack.c.b16 %v688, %v685
    %v818 = vpack.c.b16 %v689, %v686
    %v819 = vpack.c.b16 %v693, %v690
    %v820 = vpack.c.b16 %v694, %v691
    %v821 = vpack.c.b16 %v695, %v692
    %v822 = vpack.c.b16 %v699, %v696
    %v823 = vpack.c.b16 %v700, %v697
    %v824 = vpack.c.b16 %v701, %v698
    %v825 = vpack.c.b16 %v705, %v702
    %v826 = vpack.c.b16 %v706, %v703
    %v827 = vpack.c.b16 %v707, %v704
    %v828 = vpack.c.b16 %v711, %v708
    %v829 = vpack.c.b16 %v712, %v709
    %v830 = vpack.c.b16 %v713, %v710
    %v831 = vpack.c.b16 %v717, %v714
    %v832 = vpack.c.b16 %v718, %v715
    %v833 = vpack.c.b16 %v719, %v716
    %v834 = vpack.c.b16 %v723, %v720
    %v835 = vpack.c.b16 %v724, %v721
    %v836 = vpack.c.b16 %v725, %v722
    %v837 = vpack.c.b16 %v729, %v726
    %v838 = vpack.c.b16 %v730, %v727
    %v839 = vpack.c.b16 %v731, %v728
    %v840 = vpack.c.b16 %v735, %v732
    %v841 = vpack.c.b16 %v736, %v733
    %v842 = vpack.c.b16 %v737, %v734
    %v843 = vpack.c.b16 %v741, %v738
    %v844 = vpack.c.b16 %v742, %v739
    %v845 = vpack.c.b16 %v743, %v740
    %v846 = vpack.c.b16 %v747, %v744
    %v847 = vpack.c.b16 %v748, %v745
    %v848 = vpack.c.b16 %v749, %v746
    %v849 = vpack.c.b16 %v753, %v750
    %v850 = vpack.c.b16 %v754, %v751
    %v851 = vpack.c.b16 %v755, %v752
    %v852 = vpack.c.b16 %v759, %v756
    %v853 = vpack.c.b16 %v760, %v757
    %v854 = vpack.c.b16 %v761, %v758
    %v855 = vpack.c.b16 %v765, %v762
    %v856 = vpack.c.b16 %v766, %v763
    %v857 = vpack.c.b16 %v767, %v764
    %v858 = vpack.c.b16 %v771, %v768
    %v859 = vpack.c.b16 %v772, %v769
    %v860 = vpack.c.b16 %v773, %v770
    %v861 = vpack.c.b16 %v777, %v774
    %v862 = vpack.c.b16 %v778, %v775
    %v863 = vpack.c.b16 %v779, %v776
    %v864 = vpack.c.b16 %v783, %v780
    %v865 = vpack.c.b16 %v784, %v781
    %v866 = vpack.c.b16 %v785, %v782
    %v867 = vpack.c.b16 %v789, %v786
    %v868 = vpack.c.b16 %v790, %v787
    %v869 = vpack.c.b16 %v791, %v788
    %v870 = vpack.c.b16 %v795, %v792
    %v871 = vpack.c.b16 %v796, %v793
    %v872 = vpack.c.b16 %v797, %v794
    %v873 = vpack.c.b16 %v801, %v798
    %v874 = vpack.c.b16 %v802, %v799
    %v875 = vpack.c.b16 %v803, %v800
    %v949 = vlaneseq
    %v950 = vshrl.u32 %v949, 7
    %v951 = vsub.s32 0, %v950
    %v952 = vrot.slane %v563, %v951
    %v953 = vlaneseq
    %v954 = vshrl.u32 %v953, 7
    %v955 = vsub.s32 1, %v954
    %v956 = vrot.slane %v563, %v955
    %v957 = vlaneseq
    %v958 = vshrl.u32 %v957, 7
    %v959 = vsub.s32 2, %v958
    %v960 = vrot.slane %v563, %v959
    %964 = vmatprep.subr.bf16.mxu0 %v805
    %965 = vmatpush1.bf16.msra.mxu0 %v804
    %966 = vmatprep.subr.bf16.mxu0 %v808
    %967 = vmatpush1.bf16.msra.mxu0 %v807
    %968 = vmatprep.subr.bf16.mxu0 %v811
    %969 = vmatpush1.bf16.msra.mxu0 %v810
    %970 = vmatprep.subr.bf16.mxu0 %v814
    %971 = vmatpush1.bf16.msra.mxu0 %v813
    %972 = vmatprep.subr.bf16.mxu0 %v817
    %973 = vmatpush1.bf16.msra.mxu0 %v816
    %974 = vmatprep.subr.bf16.mxu0 %v820
    %975 = vmatpush1.bf16.msra.mxu0 %v819
    %976 = vmatprep.subr.bf16.mxu0 %v823
    %977 = vmatpush1.bf16.msra.mxu0 %v822
    %978 = vmatprep.subr.bf16.mxu0 %v826
    %979 = vmatpush1.bf16.msra.mxu0 %v825
    %980 = vmatprep.subr.bf16.mxu0 %v829
    %981 = vmatpush1.bf16.msra.mxu0 %v828
    %982 = vmatprep.subr.bf16.mxu0 %v832
    %983 = vmatpush1.bf16.msra.mxu0 %v831
    %984 = vmatprep.subr.bf16.mxu0 %v835
    %985 = vmatpush1.bf16.msra.mxu0 %v834
    %986 = vmatprep.subr.bf16.mxu0 %v838
    %987 = vmatpush1.bf16.msra.mxu0 %v837
    %988 = vmatprep.subr.bf16.mxu0 %v841
    %989 = vmatpush1.bf16.msra.mxu0 %v840
    %990 = vmatprep.subr.bf16.mxu0 %v844
    %991 = vmatpush1.bf16.msra.mxu0 %v843
    %992 = vmatprep.subr.bf16.mxu0 %v847
    %993 = vmatpush1.bf16.msra.mxu0 %v846
    %994 = vmatprep.subr.bf16.mxu0 %v850
    %995 = vmatpush1.bf16.msra.mxu0 %v849
    %996 = vmatprep.mubr.bf16.mxu0 %v465
    %997 = vmatmul.mubr.bf16.gmra.mrb[0].mxu0 %v464
    %v998 = vpop.f32.mrb[0].mxu0
    %v999 = vadd.f32 %v952, %v998
    %v1000 = vpop.f32.mrb[0].mxu0
    %v1001 = vadd.f32 %v956, %v1000
    %v1002 = vpop.f32.mrb[0].mxu0
    %v1003 = vpop.f32.mrb[0].mxu0
    %1004 = vdwg.mxu0
    %1005 = vmatprep.subr.bf16.mxu0 %v853
    %1006 = vmatpush1.bf16.msra.mxu0 %v852
    %1007 = vmatprep.subr.bf16.mxu0 %v856
    %1008 = vmatpush1.bf16.msra.mxu0 %v855
    %1009 = vmatprep.subr.bf16.mxu0 %v859
    %1010 = vmatpush1.bf16.msra.mxu0 %v858
    %1011 = vmatprep.subr.bf16.mxu0 %v862
    %1012 = vmatpush1.bf16.msra.mxu0 %v861
    %1013 = vmatprep.subr.bf16.mxu0 %v865
    %1014 = vmatpush1.bf16.msra.mxu0 %v864
    %1015 = vmatprep.subr.bf16.mxu0 %v868
    %1016 = vmatpush1.bf16.msra.mxu0 %v867
    %1017 = vmatprep.subr.bf16.mxu0 %v871
    %1018 = vmatpush1.bf16.msra.mxu0 %v870
    %1019 = vmatprep.subr.bf16.mxu0 %v874
    %1020 = vmatpush1.bf16.msra.mxu0 %v873
    %1021 = vmatprep.subr.bf16.mxu0 0
    %1022 = vmatpush1.bf16.msra.mxu0 0
    %1023 = vmatprep.subr.bf16.mxu0 0
    %1024 = vmatpush1.bf16.msra.mxu0 0
    %1025 = vmatprep.subr.bf16.mxu0 0
    %1026 = vmatpush1.bf16.msra.mxu0 0
    %1027 = vmatprep.subr.bf16.mxu0 0
    %1028 = vmatpush1.bf16.msra.mxu0 0
    %1029 = vmatprep.subr.bf16.mxu0 0
    %1030 = vmatpush1.bf16.msra.mxu0 0
    %1031 = vmatprep.subr.bf16.mxu0 0
    %1032 = vmatpush1.bf16.msra.mxu0 0
    %1033 = vmatprep.subr.bf16.mxu0 0
    %1034 = vmatpush1.bf16.msra.mxu0 0
    %1035 = vmatprep.subr.bf16.mxu0 0
    %1036 = vmatpush1.bf16.msra.mxu0 0
    %1037 = vmatprep.mubr.bf16.mxu0 0
    %1038 = vmatmul.mubr.bf16.gmra.mrb[0].mxu0 %v466
    %v1039 = vpop.f32.mrb[0].mxu0
    %v1040 = vadd.f32 %v999, %v1039
    %v1041 = vpop.f32.mrb[0].mxu0
    %v1042 = vadd.f32 %v1001, %v1041
    %v1043 = vpop.f32.mrb[0].mxu0
    %v1044 = vpop.f32.mrb[0].mxu0
    %1045 = vdwg.mxu0
    %1046 = vmatprep.subr.bf16.mxu0 0
    %1047 = vmatpush1.bf16.msra.mxu0 %v806
    %1048 = vmatprep.subr.bf16.mxu0 0
    %1049 = vmatpush1.bf16.msra.mxu0 %v809
    %1050 = vmatprep.subr.bf16.mxu0 0
    %1051 = vmatpush1.bf16.msra.mxu0 %v812
    %1052 = vmatprep.subr.bf16.mxu0 0
    %1053 = vmatpush1.bf16.msra.mxu0 %v815
    %1054 = vmatprep.subr.bf16.mxu0 0
    %1055 = vmatpush1.bf16.msra.mxu0 %v818
    %1056 = vmatprep.subr.bf16.mxu0 0
    %1057 = vmatpush1.bf16.msra.mxu0 %v821
    %1058 = vmatprep.subr.bf16.mxu0 0
    %1059 = vmatpush1.bf16.msra.mxu0 %v824
    %1060 = vmatprep.subr.bf16.mxu0 0
    %1061 = vmatpush1.bf16.msra.mxu0 %v827
    %1062 = vmatprep.subr.bf16.mxu0 0
    %1063 = vmatpush1.bf16.msra.mxu0 %v830
    %1064 = vmatprep.subr.bf16.mxu0 0
    %1065 = vmatpush1.bf16.msra.mxu0 %v833
    %1066 = vmatprep.subr.bf16.mxu0 0
    %1067 = vmatpush1.bf16.msra.mxu0 %v836
    %1068 = vmatprep.subr.bf16.mxu0 0
    %1069 = vmatpush1.bf16.msra.mxu0 %v839
    %1070 = vmatprep.subr.bf16.mxu0 0
    %1071 = vmatpush1.bf16.msra.mxu0 %v842
    %1072 = vmatprep.subr.bf16.mxu0 0
    %1073 = vmatpush1.bf16.msra.mxu0 %v845
    %1074 = vmatprep.subr.bf16.mxu0 0
    %1075 = vmatpush1.bf16.msra.mxu0 %v848
    %1076 = vmatprep.subr.bf16.mxu0 0
    %1077 = vmatpush1.bf16.msra.mxu0 %v851
    %1078 = vmatprep.mubr.bf16.mxu0 %v465
    %1079 = vmatmul.mubr.bf16.gmra.mrb[0].mxu0 %v464
    %v1080 = vpop.f32.mrb[0].mxu0
    %v1081 = vadd.f32 %v960, %v1080
    %v1082 = vpop.f32.mrb[0].mxu0
    %v1083 = vpop.f32.mrb[0].mxu0
    %v1084 = vpop.f32.mrb[0].mxu0
    %1085 = vdwg.mxu0
    %1086 = vmatprep.subr.bf16.mxu0 0
    %1087 = vmatpush1.bf16.msra.mxu0 %v854
    %1088 = vmatprep.subr.bf16.mxu0 0
    %1089 = vmatpush1.bf16.msra.mxu0 %v857
    %1090 = vmatprep.subr.bf16.mxu0 0
    %1091 = vmatpush1.bf16.msra.mxu0 %v860
    %1092 = vmatprep.subr.bf16.mxu0 0
    %1093 = vmatpush1.bf16.msra.mxu0 %v863
    %1094 = vmatprep.subr.bf16.mxu0 0
    %1095 = vmatpush1.bf16.msra.mxu0 %v866
    %1096 = vmatprep.subr.bf16.mxu0 0
    %1097 = vmatpush1.bf16.msra.mxu0 %v869
    %1098 = vmatprep.subr.bf16.mxu0 0
    %1099 = vmatpush1.bf16.msra.mxu0 %v872
    %1100 = vmatprep.subr.bf16.mxu0 0
    %1101 = vmatpush1.bf16.msra.mxu0 %v875
    %1102 = vmatprep.subr.bf16.mxu0 0
    %1103 = vmatpush1.bf16.msra.mxu0 0
    %1104 = vmatprep.subr.bf16.mxu0 0
    %1105 = vmatpush1.bf16.msra.mxu0 0
    %1106 = vmatprep.subr.bf16.mxu0 0
    %1107 = vmatpush1.bf16.msra.mxu0 0
    %1108 = vmatprep.subr.bf16.mxu0 0
    %1109 = vmatpush1.bf16.msra.mxu0 0
    %1110 = vmatprep.subr.bf16.mxu0 0
    %1111 = vmatpush1.bf16.msra.mxu0 0
    %1112 = vmatprep.subr.bf16.mxu0 0
    %1113 = vmatpush1.bf16.msra.mxu0 0
    %1114 = vmatprep.subr.bf16.mxu0 0
    %1115 = vmatpush1.bf16.msra.mxu0 0
    %1116 = vmatprep.subr.bf16.mxu0 0
    %1117 = vmatpush1.bf16.msra.mxu0 0
    %1118 = vmatprep.mubr.bf16.mxu0 0
    %1119 = vmatmul.mubr.bf16.gmra.mrb[0].mxu0 %v466
    %v1120 = vpop.f32.mrb[0].mxu0
    %v1121 = vadd.f32 %v1081, %v1120
    %v1122 = vpop.f32.mrb[0].mxu0
    %v1123 = vpop.f32.mrb[0].mxu0
    %v1124 = vpop.f32.mrb[0].mxu0
    %1125 = vdwg.mxu0
    %vm1126 = vcmp.gt.f32.partialorder %v1040, 0.0
    %vm1127 = vcmp.gt.f32.partialorder %v1042, 0.0
    %vm1128 = vcmp.gt.f32.partialorder %v1121, 0.0
    %v1129 = vmul.f32 %v1040, 0.1
    %v1130 = vmul.f32 %v1042, 0.1
    %v1131 = vmul.f32 %v1121, 0.1
    %v1132 = vsel %vm1126, %v1040, %v1129
    %v1133 = vsel %vm1127, %v1042, %v1130
    %v1134 = vsel %vm1128, %v1121, %v1131
    %v1135 = vpack.c.bf16 %v1132, %v1132
    %v1136 = vpack.c.bf16 %v1133, %v1133
    %v1137 = vpack.c.bf16 %v1134, %v1134
    %v1138 = vld [vmem:[#allocation6] sm:$0xff]
    %v1139 = vld [vmem:[#allocation6 + $0x8] sm:$0xff]
    %v1140 = vld [vmem:[#allocation6 + $0x10] sm:$0xff]
    %v1141 = vld [vmem:[#allocation6 + $0x18] sm:$0xff]
    %v1142 = vld [vmem:[#allocation6 + $0x20] sm:$0xff]
    %v1143 = vld [vmem:[#allocation6 + $0x28] sm:$0xff]
    %v1144 = vld [vmem:[#allocation6 + $0x30] sm:$0xff]
    %v1145 = vld [vmem:[#allocation6 + $0x38] sm:$0xff]
    %v1146 = vld [vmem:[#allocation6 + $0x40] sm:$0xff]
    %v1147 = vld [vmem:[#allocation6 + $0x48] sm:$0xff]
    %v1148 = vld [vmem:[#allocation6 + $0x50] sm:$0xff]
    %v1149 = vld [vmem:[#allocation6 + $0x58] sm:$0xff]
    %v1150 = vld [vmem:[#allocation6 + $0x60] sm:$0xff]
    %v1151 = vld [vmem:[#allocation6 + $0x68] sm:$0xff]
    %v1152 = vld [vmem:[#allocation6 + $0x70] sm:$0xff]
    %v1153 = vld [vmem:[#allocation6 + $0x78] sm:$0xff]
    %v1154 = vld [vmem:[#allocation6 + $0x80] sm:$0xff]
    %v1155 = vld [vmem:[#allocation6 + $0x88] sm:$0xff]
    %v1156 = vld [vmem:[#allocation6 + $0x90] sm:$0xff]
    %v1157 = vld [vmem:[#allocation6 + $0x98] sm:$0xff]
    %v1158 = vld [vmem:[#allocation6 + $0xa0] sm:$0xff]
    %v1159 = vld [vmem:[#allocation6 + $0xa8] sm:$0xff]
    %v1160 = vld [vmem:[#allocation6 + $0xb0] sm:$0xff]
    %v1161 = vld [vmem:[#allocation6 + $0xb8] sm:$0xff]
    %v1162 = vld [vmem:[#allocation6 + $0xc0] sm:$0xff]
    %v1163 = vld [vmem:[#allocation6 + $0xc8] sm:$0xff]
    %v1164 = vld [vmem:[#allocation6 + $0xd0] sm:$0xff]
    %v1165 = vld [vmem:[#allocation6 + $0xd8] sm:$0xff]
    %v1166 = vld [vmem:[#allocation6 + $0xe0] sm:$0xff]
    %v1167 = vld [vmem:[#allocation6 + $0xe8] sm:$0xff]
    %v1168 = vld [vmem:[#allocation6 + $0xf0] sm:$0xff]
    %v1169 = vld [vmem:[#allocation6 + $0xf8] sm:$0xff]
    %v1170 = vld [vmem:[#allocation6 + $0x100] sm:$0xff]
    %v1171 = vld [vmem:[#allocation6 + $0x108] sm:$0xff]
    %v1172 = vld [vmem:[#allocation6 + $0x110] sm:$0xff]
    %v1173 = vld [vmem:[#allocation6 + $0x118] sm:$0xff]
    %v1174 = vld [vmem:[#allocation6 + $0x120] sm:$0xff]
    %v1175 = vld [vmem:[#allocation6 + $0x128] sm:$0xff]
    %v1176 = vld [vmem:[#allocation6 + $0x130] sm:$0xff]
    %v1177 = vld [vmem:[#allocation6 + $0x138] sm:$0xff]
    %v1178 = vld [vmem:[#allocation6 + $0x140] sm:$0xff]
    %v1179 = vld [vmem:[#allocation6 + $0x148] sm:$0xff]
    %v1180 = vld [vmem:[#allocation6 + $0x150] sm:$0xff]
    %v1181 = vld [vmem:[#allocation6 + $0x158] sm:$0xff]
    %v1182 = vld [vmem:[#allocation6 + $0x160] sm:$0xff]
    %v1183 = vld [vmem:[#allocation6 + $0x168] sm:$0xff]
    %v1184 = vld [vmem:[#allocation6 + $0x170] sm:$0xff]
    %v1185 = vld [vmem:[#allocation6 + $0x178] sm:$0xff]
    %v1186 = vld [vmem:[#allocation6 + $0x180] sm:$0xff]
    %v1187 = vld [vmem:[#allocation6 + $0x188] sm:$0xff]
    %v1188 = vld [vmem:[#allocation6 + $0x190] sm:$0xff]
    %v1189 = vld [vmem:[#allocation6 + $0x198] sm:$0xff]
    %v1190 = vld [vmem:[#allocation6 + $0x1a0] sm:$0xff]
    %v1191 = vld [vmem:[#allocation6 + $0x1a8] sm:$0xff]
    %v1192 = vld [vmem:[#allocation6 + $0x1b0] sm:$0xff]
    %v1193 = vld [vmem:[#allocation6 + $0x1b8] sm:$0xff]
    %v1194 = vld [vmem:[#allocation6 + $0x1c0] sm:$0xff]
    %v1195 = vld [vmem:[#allocation6 + $0x1c8] sm:$0xff]
    %v1196 = vld [vmem:[#allocation6 + $0x1d0] sm:$0xff]
    %v1197 = vld [vmem:[#allocation6 + $0x1d8] sm:$0xff]
    %v1198 = vld [vmem:[#allocation6 + $0x1e0] sm:$0xff]
    %v1199 = vld [vmem:[#allocation6 + $0x1e8] sm:$0xff]
    %v1200 = vld [vmem:[#allocation6 + $0x1f0] sm:$0xff]
    %v1201 = vld [vmem:[#allocation6 + $0x1f8] sm:$0xff]
    %v1202 = vld [vmem:[#allocation6 + $0x200] sm:$0xff]
    %v1203 = vld [vmem:[#allocation6 + $0x208] sm:$0xff]
    %v1204 = vld [vmem:[#allocation6 + $0x210] sm:$0xff]
    %v1205 = vld [vmem:[#allocation6 + $0x218] sm:$0xff]
    %v1206 = vld [vmem:[#allocation6 + $0x220] sm:$0xff]
    %v1207 = vld [vmem:[#allocation6 + $0x228] sm:$0xff]
    %v1208 = vld [vmem:[#allocation6 + $0x230] sm:$0xff]
    %v1209 = vld [vmem:[#allocation6 + $0x238] sm:$0xff]
    %v1210 = vld [vmem:[#allocation6 + $0x240] sm:$0xff]
    %v1211 = vld [vmem:[#allocation6 + $0x248] sm:$0xff]
    %v1212 = vld [vmem:[#allocation6 + $0x250] sm:$0xff]
    %v1213 = vld [vmem:[#allocation6 + $0x258] sm:$0xff]
    %v1214 = vld [vmem:[#allocation6 + $0x260] sm:$0xff]
    %v1215 = vld [vmem:[#allocation6 + $0x268] sm:$0xff]
    %v1216 = vld [vmem:[#allocation6 + $0x270] sm:$0xff]
    %v1217 = vld [vmem:[#allocation6 + $0x278] sm:$0xff]
    %v1218 = vld [vmem:[#allocation6 + $0x280] sm:$0xff]
    %v1219 = vld [vmem:[#allocation6 + $0x288] sm:$0xff]
    %v1220 = vld [vmem:[#allocation6 + $0x290] sm:$0xff]
    %v1221 = vld [vmem:[#allocation6 + $0x298] sm:$0xff]
    %v1222 = vld [vmem:[#allocation6 + $0x2a0] sm:$0xff]
    %v1223 = vld [vmem:[#allocation6 + $0x2a8] sm:$0xff]
    %v1224 = vld [vmem:[#allocation6 + $0x2b0] sm:$0xff]
    %v1225 = vld [vmem:[#allocation6 + $0x2b8] sm:$0xff]
    %v1226 = vld [vmem:[#allocation6 + $0x2c0] sm:$0xff]
    %v1227 = vld [vmem:[#allocation6 + $0x2c8] sm:$0xff]
    %v1228 = vld [vmem:[#allocation6 + $0x2d0] sm:$0xff]
    %v1229 = vld [vmem:[#allocation6 + $0x2d8] sm:$0xff]
    %v1230 = vld [vmem:[#allocation6 + $0x2e0] sm:$0xff]
    %v1231 = vld [vmem:[#allocation6 + $0x2e8] sm:$0xff]
    %v1232 = vld [vmem:[#allocation6 + $0x2f0] sm:$0xff]
    %v1233 = vld [vmem:[#allocation6 + $0x2f8] sm:$0xff]
    %v1234 = vld [vmem:[#allocation6 + $0x300] sm:$0xff]
    %v1235 = vld [vmem:[#allocation6 + $0x308] sm:$0xff]
    %v1236 = vld [vmem:[#allocation6 + $0x310] sm:$0xff]
    %v1237 = vld [vmem:[#allocation6 + $0x318] sm:$0xff]
    %v1238 = vld [vmem:[#allocation6 + $0x320] sm:$0xff]
    %v1239 = vld [vmem:[#allocation6 + $0x328] sm:$0xff]
    %v1240 = vld [vmem:[#allocation6 + $0x330] sm:$0xff]
    %v1241 = vld [vmem:[#allocation6 + $0x338] sm:$0xff]
    %v1242 = vld [vmem:[#allocation6 + $0x340] sm:$0xff]
    %v1243 = vld [vmem:[#allocation6 + $0x348] sm:$0xff]
    %v1244 = vld [vmem:[#allocation6 + $0x350] sm:$0xff]
    %v1245 = vld [vmem:[#allocation6 + $0x358] sm:$0xff]
    %v1246 = vld [vmem:[#allocation6 + $0x360] sm:$0xff]
    %v1247 = vld [vmem:[#allocation6 + $0x368] sm:$0xff]
    %v1248 = vld [vmem:[#allocation6 + $0x370] sm:$0xff]
    %v1249 = vld [vmem:[#allocation6 + $0x378] sm:$0xff]
    %v1250 = vld [vmem:[#allocation6 + $0x380] sm:$0xff]
    %v1251 = vld [vmem:[#allocation6 + $0x388] sm:$0xff]
    %v1252 = vld [vmem:[#allocation6 + $0x390] sm:$0xff]
    %v1253 = vld [vmem:[#allocation6 + $0x398] sm:$0xff]
    %v1254 = vld [vmem:[#allocation6 + $0x3a0] sm:$0xff]
    %v1255 = vld [vmem:[#allocation6 + $0x3a8] sm:$0xff]
    %v1256 = vld [vmem:[#allocation6 + $0x3b0] sm:$0xff]
    %v1257 = vld [vmem:[#allocation6 + $0x3b8] sm:$0xff]
    %v1258 = vld [vmem:[#allocation6 + $0x3c0] sm:$0xff]
    %v1259 = vld [vmem:[#allocation6 + $0x3c8] sm:$0xff]
    %v1260 = vld [vmem:[#allocation6 + $0x3d0] sm:$0xff]
    %v1261 = vld [vmem:[#allocation6 + $0x3d8] sm:$0xff]
    %v1262 = vld [vmem:[#allocation6 + $0x3e0] sm:$0xff]
    %v1263 = vld [vmem:[#allocation6 + $0x3e8] sm:$0xff]
    %v1264 = vld [vmem:[#allocation6 + $0x3f0] sm:$0xff]
    %v1265 = vld [vmem:[#allocation6 + $0x3f8] sm:$0xff]
    %v1266 = vld [vmem:[#allocation6 + $0x400] sm:$0xff]
    %v1267 = vld [vmem:[#allocation6 + $0x408] sm:$0xff]
    %v1268 = vld [vmem:[#allocation6 + $0x410] sm:$0xff]
    %v1269 = vld [vmem:[#allocation6 + $0x418] sm:$0xff]
    %v1270 = vld [vmem:[#allocation6 + $0x420] sm:$0xff]
    %v1271 = vld [vmem:[#allocation6 + $0x428] sm:$0xff]
    %v1272 = vld [vmem:[#allocation6 + $0x430] sm:$0xff]
    %v1273 = vld [vmem:[#allocation6 + $0x438] sm:$0xff]
    %v1274 = vld [vmem:[#allocation6 + $0x440] sm:$0xff]
    %v1275 = vld [vmem:[#allocation6 + $0x448] sm:$0xff]
    %v1276 = vld [vmem:[#allocation6 + $0x450] sm:$0xff]
    %v1277 = vld [vmem:[#allocation6 + $0x458] sm:$0xff]
    %v1278 = vld [vmem:[#allocation6 + $0x460] sm:$0xff]
    %v1279 = vld [vmem:[#allocation6 + $0x468] sm:$0xff]
    %v1280 = vld [vmem:[#allocation6 + $0x470] sm:$0xff]
    %v1281 = vld [vmem:[#allocation6 + $0x478] sm:$0xff]
    %v1282 = vld [vmem:[%s7] sm:$0x3f]
    %v1427 = vunpack.c.l.b16 %v1138
    %v1428 = vunpack.c.h.b16 %v1138
    %v1429 = vunpack.c.l.b16 %v1139
    %v1430 = vunpack.c.h.b16 %v1139
    %v1431 = vunpack.c.l.b16 %v1140
    %v1432 = vunpack.c.h.b16 %v1140
    %v1433 = vunpack.c.l.b16 %v1141
    %v1434 = vunpack.c.h.b16 %v1141
    %v1435 = vunpack.c.l.b16 %v1142
    %v1436 = vunpack.c.h.b16 %v1142
    %v1437 = vunpack.c.l.b16 %v1143
    %v1438 = vunpack.c.h.b16 %v1143
    %v1439 = vunpack.c.l.b16 %v1144
    %v1440 = vunpack.c.h.b16 %v1144
    %v1441 = vunpack.c.l.b16 %v1145
    %v1442 = vunpack.c.h.b16 %v1145
    %v1443 = vunpack.c.l.b16 %v1146
    %v1444 = vunpack.c.h.b16 %v1146
    %v1445 = vunpack.c.l.b16 %v1147
    %v1446 = vunpack.c.h.b16 %v1147
    %v1447 = vunpack.c.l.b16 %v1148
    %v1448 = vunpack.c.h.b16 %v1148
    %v1449 = vunpack.c.l.b16 %v1149
    %v1450 = vunpack.c.h.b16 %v1149
    %v1451 = vunpack.c.l.b16 %v1150
    %v1452 = vunpack.c.h.b16 %v1150
    %v1453 = vunpack.c.l.b16 %v1151
    %v1454 = vunpack.c.h.b16 %v1151
    %v1455 = vunpack.c.l.b16 %v1152
    %v1456 = vunpack.c.h.b16 %v1152
    %v1457 = vunpack.c.l.b16 %v1153
    %v1458 = vunpack.c.h.b16 %v1153
    %v1459 = vunpack.c.l.b16 %v1154
    %v1460 = vunpack.c.h.b16 %v1154
    %v1461 = vunpack.c.l.b16 %v1155
    %v1462 = vunpack.c.h.b16 %v1155
    %v1463 = vunpack.c.l.b16 %v1156
    %v1464 = vunpack.c.h.b16 %v1156
    %v1465 = vunpack.c.l.b16 %v1157
    %v1466 = vunpack.c.h.b16 %v1157
    %v1467 = vunpack.c.l.b16 %v1158
    %v1468 = vunpack.c.h.b16 %v1158
    %v1469 = vunpack.c.l.b16 %v1159
    %v1470 = vunpack.c.h.b16 %v1159
    %v1471 = vunpack.c.l.b16 %v1160
    %v1472 = vunpack.c.h.b16 %v1160
    %v1473 = vunpack.c.l.b16 %v1161
    %v1474 = vunpack.c.h.b16 %v1161
    %v1475 = vunpack.c.l.b16 %v1162
    %v1476 = vunpack.c.h.b16 %v1162
    %v1477 = vunpack.c.l.b16 %v1163
    %v1478 = vunpack.c.h.b16 %v1163
    %v1479 = vunpack.c.l.b16 %v1164
    %v1480 = vunpack.c.h.b16 %v1164
    %v1481 = vunpack.c.l.b16 %v1165
    %v1482 = vunpack.c.h.b16 %v1165
    %v1483 = vunpack.c.l.b16 %v1166
    %v1484 = vunpack.c.h.b16 %v1166
    %v1485 = vunpack.c.l.b16 %v1167
    %v1486 = vunpack.c.h.b16 %v1167
    %v1487 = vunpack.c.l.b16 %v1168
    %v1488 = vunpack.c.h.b16 %v1168
    %v1489 = vunpack.c.l.b16 %v1169
    %v1490 = vunpack.c.h.b16 %v1169
    %v1491 = vunpack.c.l.b16 %v1170
    %v1492 = vunpack.c.h.b16 %v1170
    %v1493 = vunpack.c.l.b16 %v1171
    %v1494 = vunpack.c.h.b16 %v1171
    %v1495 = vunpack.c.l.b16 %v1172
    %v1496 = vunpack.c.h.b16 %v1172
    %v1497 = vunpack.c.l.b16 %v1173
    %v1498 = vunpack.c.h.b16 %v1173
    %v1499 = vunpack.c.l.b16 %v1174
    %v1500 = vunpack.c.h.b16 %v1174
    %v1501 = vunpack.c.l.b16 %v1175
    %v1502 = vunpack.c.h.b16 %v1175
    %v1503 = vunpack.c.l.b16 %v1176
    %v1504 = vunpack.c.h.b16 %v1176
    %v1505 = vunpack.c.l.b16 %v1177
    %v1506 = vunpack.c.h.b16 %v1177
    %v1507 = vunpack.c.l.b16 %v1178
    %v1508 = vunpack.c.h.b16 %v1178
    %v1509 = vunpack.c.l.b16 %v1179
    %v1510 = vunpack.c.h.b16 %v1179
    %v1511 = vunpack.c.l.b16 %v1180
    %v1512 = vunpack.c.h.b16 %v1180
    %v1513 = vunpack.c.l.b16 %v1181
    %v1514 = vunpack.c.h.b16 %v1181
    %v1515 = vunpack.c.l.b16 %v1182
    %v1516 = vunpack.c.h.b16 %v1182
    %v1517 = vunpack.c.l.b16 %v1183
    %v1518 = vunpack.c.h.b16 %v1183
    %v1519 = vunpack.c.l.b16 %v1184
    %v1520 = vunpack.c.h.b16 %v1184
    %v1521 = vunpack.c.l.b16 %v1185
    %v1522 = vunpack.c.h.b16 %v1185
    %v1523 = vunpack.c.l.b16 %v1186
    %v1524 = vunpack.c.h.b16 %v1186
    %v1525 = vunpack.c.l.b16 %v1187
    %v1526 = vunpack.c.h.b16 %v1187
    %v1527 = vunpack.c.l.b16 %v1188
    %v1528 = vunpack.c.h.b16 %v1188
    %v1529 = vunpack.c.l.b16 %v1189
    %v1530 = vunpack.c.h.b16 %v1189
    %v1531 = vunpack.c.l.b16 %v1190
    %v1532 = vunpack.c.h.b16 %v1190
    %v1533 = vunpack.c.l.b16 %v1191
    %v1534 = vunpack.c.h.b16 %v1191
    %v1535 = vunpack.c.l.b16 %v1192
    %v1536 = vunpack.c.h.b16 %v1192
    %v1537 = vunpack.c.l.b16 %v1193
    %v1538 = vunpack.c.h.b16 %v1193
    %v1539 = vunpack.c.l.b16 %v1194
    %v1540 = vunpack.c.h.b16 %v1194
    %v1541 = vunpack.c.l.b16 %v1195
    %v1542 = vunpack.c.h.b16 %v1195
    %v1543 = vunpack.c.l.b16 %v1196
    %v1544 = vunpack.c.h.b16 %v1196
    %v1545 = vunpack.c.l.b16 %v1197
    %v1546 = vunpack.c.h.b16 %v1197
    %v1547 = vunpack.c.l.b16 %v1198
    %v1548 = vunpack.c.h.b16 %v1198
    %v1549 = vunpack.c.l.b16 %v1199
    %v1550 = vunpack.c.h.b16 %v1199
    %v1551 = vunpack.c.l.b16 %v1200
    %v1552 = vunpack.c.h.b16 %v1200
    %v1553 = vunpack.c.l.b16 %v1201
    %v1554 = vunpack.c.h.b16 %v1201
    %v1555 = vunpack.c.l.b16 %v1202
    %v1556 = vunpack.c.h.b16 %v1202
    %v1557 = vunpack.c.l.b16 %v1203
    %v1558 = vunpack.c.h.b16 %v1203
    %v1559 = vunpack.c.l.b16 %v1204
    %v1560 = vunpack.c.h.b16 %v1204
    %v1561 = vunpack.c.l.b16 %v1205
    %v1562 = vunpack.c.h.b16 %v1205
    %v1563 = vunpack.c.l.b16 %v1206
    %v1564 = vunpack.c.h.b16 %v1206
    %v1565 = vunpack.c.l.b16 %v1207
    %v1566 = vunpack.c.h.b16 %v1207
    %v1567 = vunpack.c.l.b16 %v1208
    %v1568 = vunpack.c.h.b16 %v1208
    %v1569 = vunpack.c.l.b16 %v1209
    %v1570 = vunpack.c.h.b16 %v1209
    %v1571 = vunpack.c.l.b16 %v1210
    %v1572 = vunpack.c.h.b16 %v1210
    %v1573 = vunpack.c.l.b16 %v1211
    %v1574 = vunpack.c.h.b16 %v1211
    %v1575 = vunpack.c.l.b16 %v1212
    %v1576 = vunpack.c.h.b16 %v1212
    %v1577 = vunpack.c.l.b16 %v1213
    %v1578 = vunpack.c.h.b16 %v1213
    %v1579 = vunpack.c.l.b16 %v1214
    %v1580 = vunpack.c.h.b16 %v1214
    %v1581 = vunpack.c.l.b16 %v1215
    %v1582 = vunpack.c.h.b16 %v1215
    %v1583 = vunpack.c.l.b16 %v1216
    %v1584 = vunpack.c.h.b16 %v1216
    %v1585 = vunpack.c.l.b16 %v1217
    %v1586 = vunpack.c.h.b16 %v1217
    %v1587 = vunpack.c.l.b16 %v1218
    %v1588 = vunpack.c.h.b16 %v1218
    %v1589 = vunpack.c.l.b16 %v1219
    %v1590 = vunpack.c.h.b16 %v1219
    %v1591 = vunpack.c.l.b16 %v1220
    %v1592 = vunpack.c.h.b16 %v1220
    %v1593 = vunpack.c.l.b16 %v1221
    %v1594 = vunpack.c.h.b16 %v1221
    %v1595 = vunpack.c.l.b16 %v1222
    %v1596 = vunpack.c.h.b16 %v1222
    %v1597 = vunpack.c.l.b16 %v1223
    %v1598 = vunpack.c.h.b16 %v1223
    %v1599 = vunpack.c.l.b16 %v1224
    %v1600 = vunpack.c.h.b16 %v1224
    %v1601 = vunpack.c.l.b16 %v1225
    %v1602 = vunpack.c.h.b16 %v1225
    %v1603 = vunpack.c.l.b16 %v1226
    %v1604 = vunpack.c.h.b16 %v1226
    %v1605 = vunpack.c.l.b16 %v1227
    %v1606 = vunpack.c.h.b16 %v1227
    %v1607 = vunpack.c.l.b16 %v1228
    %v1608 = vunpack.c.h.b16 %v1228
    %v1609 = vunpack.c.l.b16 %v1229
    %v1610 = vunpack.c.h.b16 %v1229
    %v1611 = vunpack.c.l.b16 %v1230
    %v1612 = vunpack.c.h.b16 %v1230
    %v1613 = vunpack.c.l.b16 %v1231
    %v1614 = vunpack.c.h.b16 %v1231
    %v1615 = vunpack.c.l.b16 %v1232
    %v1616 = vunpack.c.h.b16 %v1232
    %v1617 = vunpack.c.l.b16 %v1233
    %v1618 = vunpack.c.h.b16 %v1233
    %v1619 = vunpack.c.l.b16 %v1234
    %v1620 = vunpack.c.h.b16 %v1234
    %v1621 = vunpack.c.l.b16 %v1235
    %v1622 = vunpack.c.h.b16 %v1235
    %v1623 = vunpack.c.l.b16 %v1236
    %v1624 = vunpack.c.h.b16 %v1236
    %v1625 = vunpack.c.l.b16 %v1237
    %v1626 = vunpack.c.h.b16 %v1237
    %v1627 = vunpack.c.l.b16 %v1238
    %v1628 = vunpack.c.h.b16 %v1238
    %v1629 = vunpack.c.l.b16 %v1239
    %v1630 = vunpack.c.h.b16 %v1239
    %v1631 = vunpack.c.l.b16 %v1240
    %v1632 = vunpack.c.h.b16 %v1240
    %v1633 = vunpack.c.l.b16 %v1241
    %v1634 = vunpack.c.h.b16 %v1241
    %v1635 = vunpack.c.l.b16 %v1242
    %v1636 = vunpack.c.h.b16 %v1242
    %v1637 = vunpack.c.l.b16 %v1243
    %v1638 = vunpack.c.h.b16 %v1243
    %v1639 = vunpack.c.l.b16 %v1244
    %v1640 = vunpack.c.h.b16 %v1244
    %v1641 = vunpack.c.l.b16 %v1245
    %v1642 = vunpack.c.h.b16 %v1245
    %v1643 = vunpack.c.l.b16 %v1246
    %v1644 = vunpack.c.h.b16 %v1246
    %v1645 = vunpack.c.l.b16 %v1247
    %v1646 = vunpack.c.h.b16 %v1247
    %v1647 = vunpack.c.l.b16 %v1248
    %v1648 = vunpack.c.h.b16 %v1248
    %v1649 = vunpack.c.l.b16 %v1249
    %v1650 = vunpack.c.h.b16 %v1249
    %v1651 = vunpack.c.l.b16 %v1250
    %v1652 = vunpack.c.h.b16 %v1250
    %v1653 = vunpack.c.l.b16 %v1251
    %v1654 = vunpack.c.h.b16 %v1251
    %v1655 = vunpack.c.l.b16 %v1252
    %v1656 = vunpack.c.h.b16 %v1252
    %v1657 = vunpack.c.l.b16 %v1253
    %v1658 = vunpack.c.h.b16 %v1253
    %v1659 = vunpack.c.l.b16 %v1254
    %v1660 = vunpack.c.h.b16 %v1254
    %v1661 = vunpack.c.l.b16 %v1255
    %v1662 = vunpack.c.h.b16 %v1255
    %v1663 = vunpack.c.l.b16 %v1256
    %v1664 = vunpack.c.h.b16 %v1256
    %v1665 = vunpack.c.l.b16 %v1257
    %v1666 = vunpack.c.h.b16 %v1257
    %v1667 = vunpack.c.l.b16 %v1258
    %v1668 = vunpack.c.h.b16 %v1258
    %v1669 = vunpack.c.l.b16 %v1259
    %v1670 = vunpack.c.h.b16 %v1259
    %v1671 = vunpack.c.l.b16 %v1260
    %v1672 = vunpack.c.h.b16 %v1260
    %v1673 = vunpack.c.l.b16 %v1261
    %v1674 = vunpack.c.h.b16 %v1261
    %v1675 = vunpack.c.l.b16 %v1262
    %v1676 = vunpack.c.h.b16 %v1262
    %v1677 = vunpack.c.l.b16 %v1263
    %v1678 = vunpack.c.h.b16 %v1263
    %v1679 = vunpack.c.l.b16 %v1264
    %v1680 = vunpack.c.h.b16 %v1264
    %v1681 = vunpack.c.l.b16 %v1265
    %v1682 = vunpack.c.h.b16 %v1265
    %v1683 = vunpack.c.l.b16 %v1266
    %v1684 = vunpack.c.h.b16 %v1266
    %v1685 = vunpack.c.l.b16 %v1267
    %v1686 = vunpack.c.h.b16 %v1267
    %v1687 = vunpack.c.l.b16 %v1268
    %v1688 = vunpack.c.h.b16 %v1268
    %v1689 = vunpack.c.l.b16 %v1269
    %v1690 = vunpack.c.h.b16 %v1269
    %v1691 = vunpack.c.l.b16 %v1270
    %v1692 = vunpack.c.h.b16 %v1270
    %v1693 = vunpack.c.l.b16 %v1271
    %v1694 = vunpack.c.h.b16 %v1271
    %v1695 = vunpack.c.l.b16 %v1272
    %v1696 = vunpack.c.h.b16 %v1272
    %v1697 = vunpack.c.l.b16 %v1273
    %v1698 = vunpack.c.h.b16 %v1273
    %v1699 = vunpack.c.l.b16 %v1274
    %v1700 = vunpack.c.h.b16 %v1274
    %v1701 = vunpack.c.l.b16 %v1275
    %v1702 = vunpack.c.h.b16 %v1275
    %v1703 = vunpack.c.l.b16 %v1276
    %v1704 = vunpack.c.h.b16 %v1276
    %v1705 = vunpack.c.l.b16 %v1277
    %v1706 = vunpack.c.h.b16 %v1277
    %v1707 = vunpack.c.l.b16 %v1278
    %v1708 = vunpack.c.h.b16 %v1278
    %v1709 = vunpack.c.l.b16 %v1279
    %v1710 = vunpack.c.h.b16 %v1279
    %v1711 = vunpack.c.l.b16 %v1280
    %v1712 = vunpack.c.h.b16 %v1280
    %v1713 = vunpack.c.l.b16 %v1281
    %v1714 = vunpack.c.h.b16 %v1281
    %v1715 = vpack.c.b16 %v1433, %v1427
    %v1716 = vpack.c.b16 %v1434, %v1428
    %v1717 = vpack.c.b16 %v1435, %v1429
    %v1718 = vpack.c.b16 %v1436, %v1430
    %v1719 = vpack.c.b16 %v1437, %v1431
    %v1720 = vpack.c.b16 %v1438, %v1432
    %v1721 = vpack.c.b16 %v1445, %v1439
    %v1722 = vpack.c.b16 %v1446, %v1440
    %v1723 = vpack.c.b16 %v1447, %v1441
    %v1724 = vpack.c.b16 %v1448, %v1442
    %v1725 = vpack.c.b16 %v1449, %v1443
    %v1726 = vpack.c.b16 %v1450, %v1444
    %v1727 = vpack.c.b16 %v1457, %v1451
    %v1728 = vpack.c.b16 %v1458, %v1452
    %v1729 = vpack.c.b16 %v1459, %v1453
    %v1730 = vpack.c.b16 %v1460, %v1454
    %v1731 = vpack.c.b16 %v1461, %v1455
    %v1732 = vpack.c.b16 %v1462, %v1456
    %v1733 = vpack.c.b16 %v1469, %v1463
    %v1734 = vpack.c.b16 %v1470, %v1464
    %v1735 = vpack.c.b16 %v1471, %v1465
    %v1736 = vpack.c.b16 %v1472, %v1466
    %v1737 = vpack.c.b16 %v1473, %v1467
    %v1738 = vpack.c.b16 %v1474, %v1468
    %v1739 = vpack.c.b16 %v1481, %v1475
    %v1740 = vpack.c.b16 %v1482, %v1476
    %v1741 = vpack.c.b16 %v1483, %v1477
    %v1742 = vpack.c.b16 %v1484, %v1478
    %v1743 = vpack.c.b16 %v1485, %v1479
    %v1744 = vpack.c.b16 %v1486, %v1480
    %v1745 = vpack.c.b16 %v1493, %v1487
    %v1746 = vpack.c.b16 %v1494, %v1488
    %v1747 = vpack.c.b16 %v1495, %v1489
    %v1748 = vpack.c.b16 %v1496, %v1490
    %v1749 = vpack.c.b16 %v1497, %v1491
    %v1750 = vpack.c.b16 %v1498, %v1492
    %v1751 = vpack.c.b16 %v1505, %v1499
    %v1752 = vpack.c.b16 %v1506, %v1500
    %v1753 = vpack.c.b16 %v1507, %v1501
    %v1754 = vpack.c.b16 %v1508, %v1502
    %v1755 = vpack.c.b16 %v1509, %v1503
    %v1756 = vpack.c.b16 %v1510, %v1504
    %v1757 = vpack.c.b16 %v1517, %v1511
    %v1758 = vpack.c.b16 %v1518, %v1512
    %v1759 = vpack.c.b16 %v1519, %v1513
    %v1760 = vpack.c.b16 %v1520, %v1514
    %v1761 = vpack.c.b16 %v1521, %v1515
    %v1762 = vpack.c.b16 %v1522, %v1516
    %v1763 = vpack.c.b16 %v1529, %v1523
    %v1764 = vpack.c.b16 %v1530, %v1524
    %v1765 = vpack.c.b16 %v1531, %v1525
    %v1766 = vpack.c.b16 %v1532, %v1526
    %v1767 = vpack.c.b16 %v1533, %v1527
    %v1768 = vpack.c.b16 %v1534, %v1528
    %v1769 = vpack.c.b16 %v1541, %v1535
    %v1770 = vpack.c.b16 %v1542, %v1536
    %v1771 = vpack.c.b16 %v1543, %v1537
    %v1772 = vpack.c.b16 %v1544, %v1538
    %v1773 = vpack.c.b16 %v1545, %v1539
    %v1774 = vpack.c.b16 %v1546, %v1540
    %v1775 = vpack.c.b16 %v1553, %v1547
    %v1776 = vpack.c.b16 %v1554, %v1548
    %v1777 = vpack.c.b16 %v1555, %v1549
    %v1778 = vpack.c.b16 %v1556, %v1550
    %v1779 = vpack.c.b16 %v1557, %v1551
    %v1780 = vpack.c.b16 %v1558, %v1552
    %v1781 = vpack.c.b16 %v1565, %v1559
    %v1782 = vpack.c.b16 %v1566, %v1560
    %v1783 = vpack.c.b16 %v1567, %v1561
    %v1784 = vpack.c.b16 %v1568, %v1562
    %v1785 = vpack.c.b16 %v1569, %v1563
    %v1786 = vpack.c.b16 %v1570, %v1564
    %v1787 = vpack.c.b16 %v1577, %v1571
    %v1788 = vpack.c.b16 %v1578, %v1572
    %v1789 = vpack.c.b16 %v1579, %v1573
    %v1790 = vpack.c.b16 %v1580, %v1574
    %v1791 = vpack.c.b16 %v1581, %v1575
    %v1792 = vpack.c.b16 %v1582, %v1576
    %v1793 = vpack.c.b16 %v1589, %v1583
    %v1794 = vpack.c.b16 %v1590, %v1584
    %v1795 = vpack.c.b16 %v1591, %v1585
    %v1796 = vpack.c.b16 %v1592, %v1586
    %v1797 = vpack.c.b16 %v1593, %v1587
    %v1798 = vpack.c.b16 %v1594, %v1588
    %v1799 = vpack.c.b16 %v1601, %v1595
    %v1800 = vpack.c.b16 %v1602, %v1596
    %v1801 = vpack.c.b16 %v1603, %v1597
    %v1802 = vpack.c.b16 %v1604, %v1598
    %v1803 = vpack.c.b16 %v1605, %v1599
    %v1804 = vpack.c.b16 %v1606, %v1600
    %v1805 = vpack.c.b16 %v1613, %v1607
    %v1806 = vpack.c.b16 %v1614, %v1608
    %v1807 = vpack.c.b16 %v1615, %v1609
    %v1808 = vpack.c.b16 %v1616, %v1610
    %v1809 = vpack.c.b16 %v1617, %v1611
    %v1810 = vpack.c.b16 %v1618, %v1612
    %v1811 = vpack.c.b16 %v1625, %v1619
    %v1812 = vpack.c.b16 %v1626, %v1620
    %v1813 = vpack.c.b16 %v1627, %v1621
    %v1814 = vpack.c.b16 %v1628, %v1622
    %v1815 = vpack.c.b16 %v1629, %v1623
    %v1816 = vpack.c.b16 %v1630, %v1624
    %v1817 = vpack.c.b16 %v1637, %v1631
    %v1818 = vpack.c.b16 %v1638, %v1632
    %v1819 = vpack.c.b16 %v1639, %v1633
    %v1820 = vpack.c.b16 %v1640, %v1634
    %v1821 = vpack.c.b16 %v1641, %v1635
    %v1822 = vpack.c.b16 %v1642, %v1636
    %v1823 = vpack.c.b16 %v1649, %v1643
    %v1824 = vpack.c.b16 %v1650, %v1644
    %v1825 = vpack.c.b16 %v1651, %v1645
    %v1826 = vpack.c.b16 %v1652, %v1646
    %v1827 = vpack.c.b16 %v1653, %v1647
    %v1828 = vpack.c.b16 %v1654, %v1648
    %v1829 = vpack.c.b16 %v1661, %v1655
    %v1830 = vpack.c.b16 %v1662, %v1656
    %v1831 = vpack.c.b16 %v1663, %v1657
    %v1832 = vpack.c.b16 %v1664, %v1658
    %v1833 = vpack.c.b16 %v1665, %v1659
    %v1834 = vpack.c.b16 %v1666, %v1660
    %v1835 = vpack.c.b16 %v1673, %v1667
    %v1836 = vpack.c.b16 %v1674, %v1668
    %v1837 = vpack.c.b16 %v1675, %v1669
    %v1838 = vpack.c.b16 %v1676, %v1670
    %v1839 = vpack.c.b16 %v1677, %v1671
    %v1840 = vpack.c.b16 %v1678, %v1672
    %v1841 = vpack.c.b16 %v1685, %v1679
    %v1842 = vpack.c.b16 %v1686, %v1680
    %v1843 = vpack.c.b16 %v1687, %v1681
    %v1844 = vpack.c.b16 %v1688, %v1682
    %v1845 = vpack.c.b16 %v1689, %v1683
    %v1846 = vpack.c.b16 %v1690, %v1684
    %v1847 = vpack.c.b16 %v1697, %v1691
    %v1848 = vpack.c.b16 %v1698, %v1692
    %v1849 = vpack.c.b16 %v1699, %v1693
    %v1850 = vpack.c.b16 %v1700, %v1694
    %v1851 = vpack.c.b16 %v1701, %v1695
    %v1852 = vpack.c.b16 %v1702, %v1696
    %v1853 = vpack.c.b16 %v1709, %v1703
    %v1854 = vpack.c.b16 %v1710, %v1704
    %v1855 = vpack.c.b16 %v1711, %v1705
    %v1856 = vpack.c.b16 %v1712, %v1706
    %v1857 = vpack.c.b16 %v1713, %v1707
    %v1858 = vpack.c.b16 %v1714, %v1708
    %v2004 = vlaneseq
    %v2005 = vshrl.u32 %v2004, 7
    %v2006 = vsub.s32 0, %v2005
    %v2007 = vrot.slane %v1282, %v2006
    %v2008 = vlaneseq
    %v2009 = vshrl.u32 %v2008, 7
    %v2010 = vsub.s32 1, %v2009
    %v2011 = vrot.slane %v1282, %v2010
    %v2012 = vlaneseq
    %v2013 = vshrl.u32 %v2012, 7
    %v2014 = vsub.s32 2, %v2013
    %v2015 = vrot.slane %v1282, %v2014
    %v2016 = vlaneseq
    %v2017 = vshrl.u32 %v2016, 7
    %v2018 = vsub.s32 3, %v2017
    %v2019 = vrot.slane %v1282, %v2018
    %v2020 = vlaneseq
    %v2021 = vshrl.u32 %v2020, 7
    %v2022 = vsub.s32 4, %v2021
    %v2023 = vrot.slane %v1282, %v2022
    %v2024 = vlaneseq
    %v2025 = vshrl.u32 %v2024, 7
    %v2026 = vsub.s32 5, %v2025
    %v2027 = vrot.slane %v1282, %v2026
    %2034 = vmatprep.subr.bf16.mxu0 %v1716
    %2035 = vmatpush1.bf16.msra.mxu0 %v1715
    %2036 = vmatprep.subr.bf16.mxu0 %v1722
    %2037 = vmatpush1.bf16.msra.mxu0 %v1721
    %2038 = vmatprep.subr.bf16.mxu0 %v1728
    %2039 = vmatpush1.bf16.msra.mxu0 %v1727
    %2040 = vmatprep.subr.bf16.mxu0 %v1734
    %2041 = vmatpush1.bf16.msra.mxu0 %v1733
    %2042 = vmatprep.subr.bf16.mxu0 %v1740
    %2043 = vmatpush1.bf16.msra.mxu0 %v1739
    %2044 = vmatprep.subr.bf16.mxu0 %v1746
    %2045 = vmatpush1.bf16.msra.mxu0 %v1745
    %2046 = vmatprep.subr.bf16.mxu0 %v1752
    %2047 = vmatpush1.bf16.msra.mxu0 %v1751
    %2048 = vmatprep.subr.bf16.mxu0 %v1758
    %2049 = vmatpush1.bf16.msra.mxu0 %v1757
    %2050 = vmatprep.subr.bf16.mxu0 %v1764
    %2051 = vmatpush1.bf16.msra.mxu0 %v1763
    %2052 = vmatprep.subr.bf16.mxu0 %v1770
    %2053 = vmatpush1.bf16.msra.mxu0 %v1769
    %2054 = vmatprep.subr.bf16.mxu0 %v1776
    %2055 = vmatpush1.bf16.msra.mxu0 %v1775
    %2056 = vmatprep.subr.bf16.mxu0 %v1782
    %2057 = vmatpush1.bf16.msra.mxu0 %v1781
    %2058 = vmatprep.subr.bf16.mxu0 %v1788
    %2059 = vmatpush1.bf16.msra.mxu0 %v1787
    %2060 = vmatprep.subr.bf16.mxu0 %v1794
    %2061 = vmatpush1.bf16.msra.mxu0 %v1793
    %2062 = vmatprep.subr.bf16.mxu0 %v1800
    %2063 = vmatpush1.bf16.msra.mxu0 %v1799
    %2064 = vmatprep.subr.bf16.mxu0 %v1806
    %2065 = vmatpush1.bf16.msra.mxu0 %v1805
    %2066 = vmatprep.mubr.bf16.mxu0 %v1136
    %2067 = vmatmul.mubr.bf16.gmra.mrb[0].mxu0 %v1135
    %v2068 = vpop.f32.mrb[0].mxu0
    %v2069 = vadd.f32 %v2007, %v2068
    %v2070 = vpop.f32.mrb[0].mxu0
    %v2071 = vadd.f32 %v2011, %v2070
    %v2072 = vpop.f32.mrb[0].mxu0
    %v2073 = vpop.f32.mrb[0].mxu0
    %2074 = vdwg.mxu0
    %2075 = vmatprep.subr.bf16.mxu0 %v1812
    %2076 = vmatpush1.bf16.msra.mxu0 %v1811
    %2077 = vmatprep.subr.bf16.mxu0 %v1818
    %2078 = vmatpush1.bf16.msra.mxu0 %v1817
    %2079 = vmatprep.subr.bf16.mxu0 %v1824
    %2080 = vmatpush1.bf16.msra.mxu0 %v1823
    %2081 = vmatprep.subr.bf16.mxu0 %v1830
    %2082 = vmatpush1.bf16.msra.mxu0 %v1829
    %2083 = vmatprep.subr.bf16.mxu0 %v1836
    %2084 = vmatpush1.bf16.msra.mxu0 %v1835
    %2085 = vmatprep.subr.bf16.mxu0 %v1842
    %2086 = vmatpush1.bf16.msra.mxu0 %v1841
    %2087 = vmatprep.subr.bf16.mxu0 %v1848
    %2088 = vmatpush1.bf16.msra.mxu0 %v1847
    %2089 = vmatprep.subr.bf16.mxu0 %v1854
    %2090 = vmatpush1.bf16.msra.mxu0 %v1853
    %2091 = vmatprep.subr.bf16.mxu0 0
    %2092 = vmatpush1.bf16.msra.mxu0 0
    %2093 = vmatprep.subr.bf16.mxu0 0
    %2094 = vmatpush1.bf16.msra.mxu0 0
    %2095 = vmatprep.subr.bf16.mxu0 0
    %2096 = vmatpush1.bf16.msra.mxu0 0
    %2097 = vmatprep.subr.bf16.mxu0 0
    %2098 = vmatpush1.bf16.msra.mxu0 0
    %2099 = vmatprep.subr.bf16.mxu0 0
    %2100 = vmatpush1.bf16.msra.mxu0 0
    %2101 = vmatprep.subr.bf16.mxu0 0
    %2102 = vmatpush1.bf16.msra.mxu0 0
    %2103 = vmatprep.subr.bf16.mxu0 0
    %2104 = vmatpush1.bf16.msra.mxu0 0
    %2105 = vmatprep.subr.bf16.mxu0 0
    %2106 = vmatpush1.bf16.msra.mxu0 0
    %2107 = vmatprep.mubr.bf16.mxu0 0
    %2108 = vmatmul.mubr.bf16.gmra.mrb[0].mxu0 %v1137
    %v2109 = vpop.f32.mrb[0].mxu0
    %v2110 = vadd.f32 %v2069, %v2109
    %v2111 = vpop.f32.mrb[0].mxu0
    %v2112 = vadd.f32 %v2071, %v2111
    %v2113 = vpop.f32.mrb[0].mxu0
    %v2114 = vpop.f32.mrb[0].mxu0
    %2115 = vdwg.mxu0
    %2116 = vmatprep.subr.bf16.mxu0 %v1718
    %2117 = vmatpush1.bf16.msra.mxu0 %v1717
    %2118 = vmatprep.subr.bf16.mxu0 %v1724
    %2119 = vmatpush1.bf16.msra.mxu0 %v1723
    %2120 = vmatprep.subr.bf16.mxu0 %v1730
    %2121 = vmatpush1.bf16.msra.mxu0 %v1729
    %2122 = vmatprep.subr.bf16.mxu0 %v1736
    %2123 = vmatpush1.bf16.msra.mxu0 %v1735
    %2124 = vmatprep.subr.bf16.mxu0 %v1742
    %2125 = vmatpush1.bf16.msra.mxu0 %v1741
    %2126 = vmatprep.subr.bf16.mxu0 %v1748
    %2127 = vmatpush1.bf16.msra.mxu0 %v1747
    %2128 = vmatprep.subr.bf16.mxu0 %v1754
    %2129 = vmatpush1.bf16.msra.mxu0 %v1753
    %2130 = vmatprep.subr.bf16.mxu0 %v1760
    %2131 = vmatpush1.bf16.msra.mxu0 %v1759
    %2132 = vmatprep.subr.bf16.mxu0 %v1766
    %2133 = vmatpush1.bf16.msra.mxu0 %v1765
    %2134 = vmatprep.subr.bf16.mxu0 %v1772
    %2135 = vmatpush1.bf16.msra.mxu0 %v1771
    %2136 = vmatprep.subr.bf16.mxu0 %v1778
    %2137 = vmatpush1.bf16.msra.mxu0 %v1777
    %2138 = vmatprep.subr.bf16.mxu0 %v1784
    %2139 = vmatpush1.bf16.msra.mxu0 %v1783
    %2140 = vmatprep.subr.bf16.mxu0 %v1790
    %2141 = vmatpush1.bf16.msra.mxu0 %v1789
    %2142 = vmatprep.subr.bf16.mxu0 %v1796
    %2143 = vmatpush1.bf16.msra.mxu0 %v1795
    %2144 = vmatprep.subr.bf16.mxu0 %v1802
    %2145 = vmatpush1.bf16.msra.mxu0 %v1801
    %2146 = vmatprep.subr.bf16.mxu0 %v1808
    %2147 = vmatpush1.bf16.msra.mxu0 %v1807
    %2148 = vmatprep.mubr.bf16.mxu0 %v1136
    %2149 = vmatmul.mubr.bf16.gmra.mrb[0].mxu0 %v1135
    %v2150 = vpop.f32.mrb[0].mxu0
    %v2151 = vadd.f32 %v2015, %v2150
    %v2152 = vpop.f32.mrb[0].mxu0
    %v2153 = vadd.f32 %v2019, %v2152
    %v2154 = vpop.f32.mrb[0].mxu0
    %v2155 = vpop.f32.mrb[0].mxu0
    %2156 = vdwg.mxu0
    %2157 = vmatprep.subr.bf16.mxu0 %v1814
    %2158 = vmatpush1.bf16.msra.mxu0 %v1813
    %2159 = vmatprep.subr.bf16.mxu0 %v1820
    %2160 = vmatpush1.bf16.msra.mxu0 %v1819
    %2161 = vmatprep.subr.bf16.mxu0 %v1826
    %2162 = vmatpush1.bf16.msra.mxu0 %v1825
    %2163 = vmatprep.subr.bf16.mxu0 %v1832
    %2164 = vmatpush1.bf16.msra.mxu0 %v1831
    %2165 = vmatprep.subr.bf16.mxu0 %v1838
    %2166 = vmatpush1.bf16.msra.mxu0 %v1837
    %2167 = vmatprep.subr.bf16.mxu0 %v1844
    %2168 = vmatpush1.bf16.msra.mxu0 %v1843
    %2169 = vmatprep.subr.bf16.mxu0 %v1850
    %2170 = vmatpush1.bf16.msra.mxu0 %v1849
    %2171 = vmatprep.subr.bf16.mxu0 %v1856
    %2172 = vmatpush1.bf16.msra.mxu0 %v1855
    %2173 = vmatprep.subr.bf16.mxu0 0
    %2174 = vmatpush1.bf16.msra.mxu0 0
    %2175 = vmatprep.subr.bf16.mxu0 0
    %2176 = vmatpush1.bf16.msra.mxu0 0
    %2177 = vmatprep.subr.bf16.mxu0 0
    %2178 = vmatpush1.bf16.msra.mxu0 0
    %2179 = vmatprep.subr.bf16.mxu0 0
    %2180 = vmatpush1.bf16.msra.mxu0 0
    %2181 = vmatprep.subr.bf16.mxu0 0
    %2182 = vmatpush1.bf16.msra.mxu0 0
    %2183 = vmatprep.subr.bf16.mxu0 0
    %2184 = vmatpush1.bf16.msra.mxu0 0
    %2185 = vmatprep.subr.bf16.mxu0 0
    %2186 = vmatpush1.bf16.msra.mxu0 0
    %2187 = vmatprep.subr.bf16.mxu0 0
    %2188 = vmatpush1.bf16.msra.mxu0 0
    %2189 = vmatprep.mubr.bf16.mxu0 0
    %2190 = vmatmul.mubr.bf16.gmra.mrb[0].mxu0 %v1137
    %v2191 = vpop.f32.mrb[0].mxu0
    %v2192 = vadd.f32 %v2151, %v2191
    %v2193 = vpop.f32.mrb[0].mxu0
    %v2194 = vadd.f32 %v2153, %v2193
    %v2195 = vpop.f32.mrb[0].mxu0
    %v2196 = vpop.f32.mrb[0].mxu0
    %2197 = vdwg.mxu0
    %2198 = vmatprep.subr.bf16.mxu0 %v1720
    %2199 = vmatpush1.bf16.msra.mxu0 %v1719
    %2200 = vmatprep.subr.bf16.mxu0 %v1726
    %2201 = vmatpush1.bf16.msra.mxu0 %v1725
    %2202 = vmatprep.subr.bf16.mxu0 %v1732
    %2203 = vmatpush1.bf16.msra.mxu0 %v1731
    %2204 = vmatprep.subr.bf16.mxu0 %v1738
    %2205 = vmatpush1.bf16.msra.mxu0 %v1737
    %2206 = vmatprep.subr.bf16.mxu0 %v1744
    %2207 = vmatpush1.bf16.msra.mxu0 %v1743
    %2208 = vmatprep.subr.bf16.mxu0 %v1750
    %2209 = vmatpush1.bf16.msra.mxu0 %v1749
    %2210 = vmatprep.subr.bf16.mxu0 %v1756
    %2211 = vmatpush1.bf16.msra.mxu0 %v1755
    %2212 = vmatprep.subr.bf16.mxu0 %v1762
    %2213 = vmatpush1.bf16.msra.mxu0 %v1761
    %2214 = vmatprep.subr.bf16.mxu0 %v1768
    %2215 = vmatpush1.bf16.msra.mxu0 %v1767
    %2216 = vmatprep.subr.bf16.mxu0 %v1774
    %2217 = vmatpush1.bf16.msra.mxu0 %v1773
    %2218 = vmatprep.subr.bf16.mxu0 %v1780
    %2219 = vmatpush1.bf16.msra.mxu0 %v1779
    %2220 = vmatprep.subr.bf16.mxu0 %v1786
    %2221 = vmatpush1.bf16.msra.mxu0 %v1785
    %2222 = vmatprep.subr.bf16.mxu0 %v1792
    %2223 = vmatpush1.bf16.msra.mxu0 %v1791
    %2224 = vmatprep.subr.bf16.mxu0 %v1798
    %2225 = vmatpush1.bf16.msra.mxu0 %v1797
    %2226 = vmatprep.subr.bf16.mxu0 %v1804
    %2227 = vmatpush1.bf16.msra.mxu0 %v1803
    %2228 = vmatprep.subr.bf16.mxu0 %v1810
    %2229 = vmatpush1.bf16.msra.mxu0 %v1809
    %2230 = vmatprep.mubr.bf16.mxu0 %v1136
    %2231 = vmatmul.mubr.bf16.gmra.mrb[0].mxu0 %v1135
    %v2232 = vpop.f32.mrb[0].mxu0
    %v2233 = vadd.f32 %v2023, %v2232
    %v2234 = vpop.f32.mrb[0].mxu0
    %v2235 = vadd.f32 %v2027, %v2234
    %v2236 = vpop.f32.mrb[0].mxu0
    %v2237 = vpop.f32.mrb[0].mxu0
    %2238 = vdwg.mxu0
    %2239 = vmatprep.subr.bf16.mxu0 %v1816
    %2240 = vmatpush1.bf16.msra.mxu0 %v1815
    %2241 = vmatprep.subr.bf16.mxu0 %v1822
    %2242 = vmatpush1.bf16.msra.mxu0 %v1821
    %2243 = vmatprep.subr.bf16.mxu0 %v1828
    %2244 = vmatpush1.bf16.msra.mxu0 %v1827
    %2245 = vmatprep.subr.bf16.mxu0 %v1834
    %2246 = vmatpush1.bf16.msra.mxu0 %v1833
    %2247 = vmatprep.subr.bf16.mxu0 %v1840
    %2248 = vmatpush1.bf16.msra.mxu0 %v1839
    %2249 = vmatprep.subr.bf16.mxu0 %v1846
    %2250 = vmatpush1.bf16.msra.mxu0 %v1845
    %2251 = vmatprep.subr.bf16.mxu0 %v1852
    %2252 = vmatpush1.bf16.msra.mxu0 %v1851
    %2253 = vmatprep.subr.bf16.mxu0 %v1858
    %2254 = vmatpush1.bf16.msra.mxu0 %v1857
    %2255 = vmatprep.subr.bf16.mxu0 0
    %2256 = vmatpush1.bf16.msra.mxu0 0
    %2257 = vmatprep.subr.bf16.mxu0 0
    %2258 = vmatpush1.bf16.msra.mxu0 0
    %2259 = vmatprep.subr.bf16.mxu0 0
    %2260 = vmatpush1.bf16.msra.mxu0 0
    %2261 = vmatprep.subr.bf16.mxu0 0
    %2262 = vmatpush1.bf16.msra.mxu0 0
    %2263 = vmatprep.subr.bf16.mxu0 0
    %2264 = vmatpush1.bf16.msra.mxu0 0
    %2265 = vmatprep.subr.bf16.mxu0 0
    %2266 = vmatpush1.bf16.msra.mxu0 0
    %2267 = vmatprep.subr.bf16.mxu0 0
    %2268 = vmatpush1.bf16.msra.mxu0 0
    %2269 = vmatprep.subr.bf16.mxu0 0
    %2270 = vmatpush1.bf16.msra.mxu0 0
    %2271 = vmatprep.mubr.bf16.mxu0 0
    %2272 = vmatmul.mubr.bf16.gmra.mrb[0].mxu0 %v1137
    %v2273 = vpop.f32.mrb[0].mxu0
    %v2274 = vadd.f32 %v2233, %v2273
    %v2275 = vpop.f32.mrb[0].mxu0
    %v2276 = vadd.f32 %v2235, %v2275
    %v2277 = vpop.f32.mrb[0].mxu0
    %v2278 = vpop.f32.mrb[0].mxu0
    %2279 = vdwg.mxu0
    %vm2280 = vcmp.gt.f32.partialorder %v2110, 0.0
    %vm2281 = vcmp.gt.f32.partialorder %v2112, 0.0
    %vm2282 = vcmp.gt.f32.partialorder %v2192, 0.0
    %vm2283 = vcmp.gt.f32.partialorder %v2194, 0.0
    %vm2284 = vcmp.gt.f32.partialorder %v2274, 0.0
    %vm2285 = vcmp.gt.f32.partialorder %v2276, 0.0
    %v2286 = vmul.f32 %v2110, 0.1
    %v2287 = vmul.f32 %v2112, 0.1
    %v2288 = vmul.f32 %v2192, 0.1
    %v2289 = vmul.f32 %v2194, 0.1
    %v2290 = vmul.f32 %v2274, 0.1
    %v2291 = vmul.f32 %v2276, 0.1
    %v2292 = vsel %vm2280, %v2110, %v2286
    %v2293 = vsel %vm2281, %v2112, %v2287
    %v2294 = vsel %vm2282, %v2192, %v2288
    %v2295 = vsel %vm2283, %v2194, %v2289
    %v2296 = vsel %vm2284, %v2274, %v2290
    %v2297 = vsel %vm2285, %v2276, %v2291
    %v2298 = vpack.c.bf16 %v2292, %v2292
    %v2299 = vpack.c.bf16 %v2293, %v2293
    %v2300 = vpack.c.bf16 %v2294, %v2294
    %v2301 = vpack.c.bf16 %v2295, %v2295
    %v2302 = vpack.c.bf16 %v2296, %v2296
    %v2303 = vpack.c.bf16 %v2297, %v2297
    %v2304 = vld [vmem:[#allocation7] sm:$0xff]
    %v2305 = vld [vmem:[#allocation7 + $0x8] sm:$0xf]
    %v2306 = vld [vmem:[#allocation7 + $0xc] sm:$0xff]
    %v2307 = vld [vmem:[#allocation7 + $0x14] sm:$0xf]
    %v2308 = vld [vmem:[#allocation7 + $0x18] sm:$0xff]
    %v2309 = vld [vmem:[#allocation7 + $0x20] sm:$0xf]
    %v2310 = vld [vmem:[#allocation7 + $0x24] sm:$0xff]
    %v2311 = vld [vmem:[#allocation7 + $0x2c] sm:$0xf]
    %v2312 = vld [vmem:[#allocation7 + $0x30] sm:$0xff]
    %v2313 = vld [vmem:[#allocation7 + $0x38] sm:$0xf]
    %v2314 = vld [vmem:[#allocation7 + $0x3c] sm:$0xff]
    %v2315 = vld [vmem:[#allocation7 + $0x44] sm:$0xf]
    %v2316 = vld [vmem:[#allocation7 + $0x48] sm:$0xff]
    %v2317 = vld [vmem:[#allocation7 + $0x50] sm:$0xf]
    %v2318 = vld [vmem:[#allocation7 + $0x54] sm:$0xff]
    %v2319 = vld [vmem:[#allocation7 + $0x5c] sm:$0xf]
    %v2320 = vld [vmem:[#allocation7 + $0x60] sm:$0xff]
    %v2321 = vld [vmem:[#allocation7 + $0x68] sm:$0xf]
    %v2322 = vld [vmem:[#allocation7 + $0x6c] sm:$0xff]
    %v2323 = vld [vmem:[#allocation7 + $0x74] sm:$0xf]
    %v2324 = vld [vmem:[#allocation7 + $0x78] sm:$0xff]
    %v2325 = vld [vmem:[#allocation7 + $0x80] sm:$0xf]
    %v2326 = vld [vmem:[#allocation7 + $0x84] sm:$0xff]
    %v2327 = vld [vmem:[#allocation7 + $0x8c] sm:$0xf]
    %v2328 = vld [vmem:[#allocation7 + $0x90] sm:$0xff]
    %v2329 = vld [vmem:[#allocation7 + $0x98] sm:$0xf]
    %v2330 = vld [vmem:[#allocation7 + $0x9c] sm:$0xff]
    %v2331 = vld [vmem:[#allocation7 + $0xa4] sm:$0xf]
    %v2332 = vld [vmem:[#allocation7 + $0xa8] sm:$0xff]
    %v2333 = vld [vmem:[#allocation7 + $0xb0] sm:$0xf]
    %v2334 = vld [vmem:[#allocation7 + $0xb4] sm:$0xff]
    %v2335 = vld [vmem:[#allocation7 + $0xbc] sm:$0xf]
    %v2336 = vld [vmem:[#allocation7 + $0xc0] sm:$0xff]
    %v2337 = vld [vmem:[#allocation7 + $0xc8] sm:$0xf]
    %v2338 = vld [vmem:[#allocation7 + $0xcc] sm:$0xff]
    %v2339 = vld [vmem:[#allocation7 + $0xd4] sm:$0xf]
    %v2340 = vld [vmem:[#allocation7 + $0xd8] sm:$0xff]
    %v2341 = vld [vmem:[#allocation7 + $0xe0] sm:$0xf]
    %v2342 = vld [vmem:[#allocation7 + $0xe4] sm:$0xff]
    %v2343 = vld [vmem:[#allocation7 + $0xec] sm:$0xf]
    %v2344 = vld [vmem:[#allocation7 + $0xf0] sm:$0xff]
    %v2345 = vld [vmem:[#allocation7 + $0xf8] sm:$0xf]
    %v2346 = vld [vmem:[#allocation7 + $0xfc] sm:$0xff]
    %v2347 = vld [vmem:[#allocation7 + $0x104] sm:$0xf]
    %v2348 = vld [vmem:[#allocation7 + $0x108] sm:$0xff]
    %v2349 = vld [vmem:[#allocation7 + $0x110] sm:$0xf]
    %v2350 = vld [vmem:[#allocation7 + $0x114] sm:$0xff]
    %v2351 = vld [vmem:[#allocation7 + $0x11c] sm:$0xf]
    %v2352 = vld [vmem:[#allocation7 + $0x120] sm:$0xff]
    %v2353 = vld [vmem:[#allocation7 + $0x128] sm:$0xf]
    %v2354 = vld [vmem:[#allocation7 + $0x12c] sm:$0xff]
    %v2355 = vld [vmem:[#allocation7 + $0x134] sm:$0xf]
    %v2356 = vld [vmem:[#allocation7 + $0x138] sm:$0xff]
    %v2357 = vld [vmem:[#allocation7 + $0x140] sm:$0xf]
    %v2358 = vld [vmem:[#allocation7 + $0x144] sm:$0xff]
    %v2359 = vld [vmem:[#allocation7 + $0x14c] sm:$0xf]
    %v2360 = vld [vmem:[#allocation7 + $0x150] sm:$0xff]
    %v2361 = vld [vmem:[#allocation7 + $0x158] sm:$0xf]
    %v2362 = vld [vmem:[#allocation7 + $0x15c] sm:$0xff]
    %v2363 = vld [vmem:[#allocation7 + $0x164] sm:$0xf]
    %v2364 = vld [vmem:[#allocation7 + $0x168] sm:$0xff]
    %v2365 = vld [vmem:[#allocation7 + $0x170] sm:$0xf]
    %v2366 = vld [vmem:[#allocation7 + $0x174] sm:$0xff]
    %v2367 = vld [vmem:[#allocation7 + $0x17c] sm:$0xf]
    %v2368 = vld [vmem:[#allocation7 + $0x180] sm:$0xff]
    %v2369 = vld [vmem:[#allocation7 + $0x188] sm:$0xf]
    %v2370 = vld [vmem:[#allocation7 + $0x18c] sm:$0xff]
    %v2371 = vld [vmem:[#allocation7 + $0x194] sm:$0xf]
    %v2372 = vld [vmem:[#allocation7 + $0x198] sm:$0xff]
    %v2373 = vld [vmem:[#allocation7 + $0x1a0] sm:$0xf]
    %v2374 = vld [vmem:[#allocation7 + $0x1a4] sm:$0xff]
    %v2375 = vld [vmem:[#allocation7 + $0x1ac] sm:$0xf]
    %v2376 = vld [vmem:[#allocation7 + $0x1b0] sm:$0xff]
    %v2377 = vld [vmem:[#allocation7 + $0x1b8] sm:$0xf]
    %v2378 = vld [vmem:[#allocation7 + $0x1bc] sm:$0xff]
    %v2379 = vld [vmem:[#allocation7 + $0x1c4] sm:$0xf]
    %v2380 = vld [vmem:[#allocation7 + $0x1c8] sm:$0xff]
    %v2381 = vld [vmem:[#allocation7 + $0x1d0] sm:$0xf]
    %v2382 = vld [vmem:[#allocation7 + $0x1d4] sm:$0xff]
    %v2383 = vld [vmem:[#allocation7 + $0x1dc] sm:$0xf]
    %v2384 = vld [vmem:[#allocation7 + $0x1e0] sm:$0xff]
    %v2385 = vld [vmem:[#allocation7 + $0x1e8] sm:$0xf]
    %v2386 = vld [vmem:[#allocation7 + $0x1ec] sm:$0xff]
    %v2387 = vld [vmem:[#allocation7 + $0x1f4] sm:$0xf]
    %v2388 = vld [vmem:[#allocation7 + $0x1f8] sm:$0xff]
    %v2389 = vld [vmem:[#allocation7 + $0x200] sm:$0xf]
    %v2390 = vld [vmem:[#allocation7 + $0x204] sm:$0xff]
    %v2391 = vld [vmem:[#allocation7 + $0x20c] sm:$0xf]
    %v2392 = vld [vmem:[#allocation7 + $0x210] sm:$0xff]
    %v2393 = vld [vmem:[#allocation7 + $0x218] sm:$0xf]
    %v2394 = vld [vmem:[#allocation7 + $0x21c] sm:$0xff]
    %v2395 = vld [vmem:[#allocation7 + $0x224] sm:$0xf]
    %v2396 = vld [vmem:[#allocation7 + $0x228] sm:$0xff]
    %v2397 = vld [vmem:[#allocation7 + $0x230] sm:$0xf]
    %v2398 = vld [vmem:[#allocation7 + $0x234] sm:$0xff]
    %v2399 = vld [vmem:[#allocation7 + $0x23c] sm:$0xf]
    %v2400 = vld [vmem:[#allocation7 + $0x240] sm:$0xff]
    %v2401 = vld [vmem:[#allocation7 + $0x248] sm:$0xf]
    %v2402 = vld [vmem:[#allocation7 + $0x24c] sm:$0xff]
    %v2403 = vld [vmem:[#allocation7 + $0x254] sm:$0xf]
    %v2404 = vld [vmem:[#allocation7 + $0x258] sm:$0xff]
    %v2405 = vld [vmem:[#allocation7 + $0x260] sm:$0xf]
    %v2406 = vld [vmem:[#allocation7 + $0x264] sm:$0xff]
    %v2407 = vld [vmem:[#allocation7 + $0x26c] sm:$0xf]
    %v2408 = vld [vmem:[#allocation7 + $0x270] sm:$0xff]
    %v2409 = vld [vmem:[#allocation7 + $0x278] sm:$0xf]
    %v2410 = vld [vmem:[#allocation7 + $0x27c] sm:$0xff]
    %v2411 = vld [vmem:[#allocation7 + $0x284] sm:$0xf]
    %v2412 = vld [vmem:[#allocation7 + $0x288] sm:$0xff]
    %v2413 = vld [vmem:[#allocation7 + $0x290] sm:$0xf]
    %v2414 = vld [vmem:[#allocation7 + $0x294] sm:$0xff]
    %v2415 = vld [vmem:[#allocation7 + $0x29c] sm:$0xf]
    %v2416 = vld [vmem:[#allocation7 + $0x2a0] sm:$0xff]
    %v2417 = vld [vmem:[#allocation7 + $0x2a8] sm:$0xf]
    %v2418 = vld [vmem:[#allocation7 + $0x2ac] sm:$0xff]
    %v2419 = vld [vmem:[#allocation7 + $0x2b4] sm:$0xf]
    %v2420 = vld [vmem:[#allocation7 + $0x2b8] sm:$0xff]
    %v2421 = vld [vmem:[#allocation7 + $0x2c0] sm:$0xf]
    %v2422 = vld [vmem:[#allocation7 + $0x2c4] sm:$0xff]
    %v2423 = vld [vmem:[#allocation7 + $0x2cc] sm:$0xf]
    %v2424 = vld [vmem:[#allocation7 + $0x2d0] sm:$0xff]
    %v2425 = vld [vmem:[#allocation7 + $0x2d8] sm:$0xf]
    %v2426 = vld [vmem:[#allocation7 + $0x2dc] sm:$0xff]
    %v2427 = vld [vmem:[#allocation7 + $0x2e4] sm:$0xf]
    %v2428 = vld [vmem:[#allocation7 + $0x2e8] sm:$0xff]
    %v2429 = vld [vmem:[#allocation7 + $0x2f0] sm:$0xf]
    %v2430 = vld [vmem:[#allocation7 + $0x2f4] sm:$0xff]
    %v2431 = vld [vmem:[#allocation7 + $0x2fc] sm:$0xf]
    %v2432 = vld [vmem:[#allocation7 + $0x300] sm:$0xff]
    %v2433 = vld [vmem:[#allocation7 + $0x308] sm:$0xf]
    %v2434 = vld [vmem:[#allocation7 + $0x30c] sm:$0xff]
    %v2435 = vld [vmem:[#allocation7 + $0x314] sm:$0xf]
    %v2436 = vld [vmem:[#allocation7 + $0x318] sm:$0xff]
    %v2437 = vld [vmem:[#allocation7 + $0x320] sm:$0xf]
    %v2438 = vld [vmem:[#allocation7 + $0x324] sm:$0xff]
    %v2439 = vld [vmem:[#allocation7 + $0x32c] sm:$0xf]
    %v2440 = vld [vmem:[#allocation7 + $0x330] sm:$0xff]
    %v2441 = vld [vmem:[#allocation7 + $0x338] sm:$0xf]
    %v2442 = vld [vmem:[#allocation7 + $0x33c] sm:$0xff]
    %v2443 = vld [vmem:[#allocation7 + $0x344] sm:$0xf]
    %v2444 = vld [vmem:[#allocation7 + $0x348] sm:$0xff]
    %v2445 = vld [vmem:[#allocation7 + $0x350] sm:$0xf]
    %v2446 = vld [vmem:[#allocation7 + $0x354] sm:$0xff]
    %v2447 = vld [vmem:[#allocation7 + $0x35c] sm:$0xf]
    %v2448 = vld [vmem:[#allocation7 + $0x360] sm:$0xff]
    %v2449 = vld [vmem:[#allocation7 + $0x368] sm:$0xf]
    %v2450 = vld [vmem:[#allocation7 + $0x36c] sm:$0xff]
    %v2451 = vld [vmem:[#allocation7 + $0x374] sm:$0xf]
    %v2452 = vld [vmem:[#allocation7 + $0x378] sm:$0xff]
    %v2453 = vld [vmem:[#allocation7 + $0x380] sm:$0xf]
    %v2454 = vld [vmem:[#allocation7 + $0x384] sm:$0xff]
    %v2455 = vld [vmem:[#allocation7 + $0x38c] sm:$0xf]
    %v2456 = vld [vmem:[#allocation7 + $0x390] sm:$0xff]
    %v2457 = vld [vmem:[#allocation7 + $0x398] sm:$0xf]
    %v2458 = vld [vmem:[#allocation7 + $0x39c] sm:$0xff]
    %v2459 = vld [vmem:[#allocation7 + $0x3a4] sm:$0xf]
    %v2460 = vld [vmem:[#allocation7 + $0x3a8] sm:$0xff]
    %v2461 = vld [vmem:[#allocation7 + $0x3b0] sm:$0xf]
    %v2462 = vld [vmem:[#allocation7 + $0x3b4] sm:$0xff]
    %v2463 = vld [vmem:[#allocation7 + $0x3bc] sm:$0xf]
    %v2464 = vld [vmem:[#allocation7 + $0x3c0] sm:$0xff]
    %v2465 = vld [vmem:[#allocation7 + $0x3c8] sm:$0xf]
    %v2466 = vld [vmem:[#allocation7 + $0x3cc] sm:$0xff]
    %v2467 = vld [vmem:[#allocation7 + $0x3d4] sm:$0xf]
    %v2468 = vld [vmem:[#allocation7 + $0x3d8] sm:$0xff]
    %v2469 = vld [vmem:[#allocation7 + $0x3e0] sm:$0xf]
    %v2470 = vld [vmem:[#allocation7 + $0x3e4] sm:$0xff]
    %v2471 = vld [vmem:[#allocation7 + $0x3ec] sm:$0xf]
    %v2472 = vld [vmem:[#allocation7 + $0x3f0] sm:$0xff]
    %v2473 = vld [vmem:[#allocation7 + $0x3f8] sm:$0xf]
    %v2474 = vld [vmem:[#allocation7 + $0x3fc] sm:$0xff]
    %v2475 = vld [vmem:[#allocation7 + $0x404] sm:$0xf]
    %v2476 = vld [vmem:[#allocation7 + $0x408] sm:$0xff]
    %v2477 = vld [vmem:[#allocation7 + $0x410] sm:$0xf]
    %v2478 = vld [vmem:[#allocation7 + $0x414] sm:$0xff]
    %v2479 = vld [vmem:[#allocation7 + $0x41c] sm:$0xf]
    %v2480 = vld [vmem:[#allocation7 + $0x420] sm:$0xff]
    %v2481 = vld [vmem:[#allocation7 + $0x428] sm:$0xf]
    %v2482 = vld [vmem:[#allocation7 + $0x42c] sm:$0xff]
    %v2483 = vld [vmem:[#allocation7 + $0x434] sm:$0xf]
    %v2484 = vld [vmem:[#allocation7 + $0x438] sm:$0xff]
    %v2485 = vld [vmem:[#allocation7 + $0x440] sm:$0xf]
    %v2486 = vld [vmem:[#allocation7 + $0x444] sm:$0xff]
    %v2487 = vld [vmem:[#allocation7 + $0x44c] sm:$0xf]
    %v2488 = vld [vmem:[#allocation7 + $0x450] sm:$0xff]
    %v2489 = vld [vmem:[#allocation7 + $0x458] sm:$0xf]
    %v2490 = vld [vmem:[#allocation7 + $0x45c] sm:$0xff]
    %v2491 = vld [vmem:[#allocation7 + $0x464] sm:$0xf]
    %v2492 = vld [vmem:[#allocation7 + $0x468] sm:$0xff]
    %v2493 = vld [vmem:[#allocation7 + $0x470] sm:$0xf]
    %v2494 = vld [vmem:[#allocation7 + $0x474] sm:$0xff]
    %v2495 = vld [vmem:[#allocation7 + $0x47c] sm:$0xf]
    %v2496 = vld [vmem:[%s9] sm:$0x7]
    %v2689 = vunpack.c.l.b16 %v2304
    %v2690 = vunpack.c.h.b16 %v2304
    %v2691 = vunpack.c.l.b16 %v2305
    %v2692 = vunpack.c.l.b16 %v2306
    %v2693 = vunpack.c.h.b16 %v2306
    %v2694 = vunpack.c.l.b16 %v2307
    %v2695 = vunpack.c.l.b16 %v2308
    %v2696 = vunpack.c.h.b16 %v2308
    %v2697 = vunpack.c.l.b16 %v2309
    %v2698 = vunpack.c.l.b16 %v2310
    %v2699 = vunpack.c.h.b16 %v2310
    %v2700 = vunpack.c.l.b16 %v2311
    %v2701 = vunpack.c.l.b16 %v2312
    %v2702 = vunpack.c.h.b16 %v2312
    %v2703 = vunpack.c.l.b16 %v2313
    %v2704 = vunpack.c.l.b16 %v2314
    %v2705 = vunpack.c.h.b16 %v2314
    %v2706 = vunpack.c.l.b16 %v2315
    %v2707 = vunpack.c.l.b16 %v2316
    %v2708 = vunpack.c.h.b16 %v2316
    %v2709 = vunpack.c.l.b16 %v2317
    %v2710 = vunpack.c.l.b16 %v2318
    %v2711 = vunpack.c.h.b16 %v2318
    %v2712 = vunpack.c.l.b16 %v2319
    %v2713 = vunpack.c.l.b16 %v2320
    %v2714 = vunpack.c.h.b16 %v2320
    %v2715 = vunpack.c.l.b16 %v2321
    %v2716 = vunpack.c.l.b16 %v2322
    %v2717 = vunpack.c.h.b16 %v2322
    %v2718 = vunpack.c.l.b16 %v2323
    %v2719 = vunpack.c.l.b16 %v2324
    %v2720 = vunpack.c.h.b16 %v2324
    %v2721 = vunpack.c.l.b16 %v2325
    %v2722 = vunpack.c.l.b16 %v2326
    %v2723 = vunpack.c.h.b16 %v2326
    %v2724 = vunpack.c.l.b16 %v2327
    %v2725 = vunpack.c.l.b16 %v2328
    %v2726 = vunpack.c.h.b16 %v2328
    %v2727 = vunpack.c.l.b16 %v2329
    %v2728 = vunpack.c.l.b16 %v2330
    %v2729 = vunpack.c.h.b16 %v2330
    %v2730 = vunpack.c.l.b16 %v2331
    %v2731 = vunpack.c.l.b16 %v2332
    %v2732 = vunpack.c.h.b16 %v2332
    %v2733 = vunpack.c.l.b16 %v2333
    %v2734 = vunpack.c.l.b16 %v2334
    %v2735 = vunpack.c.h.b16 %v2334
    %v2736 = vunpack.c.l.b16 %v2335
    %v2737 = vunpack.c.l.b16 %v2336
    %v2738 = vunpack.c.h.b16 %v2336
    %v2739 = vunpack.c.l.b16 %v2337
    %v2740 = vunpack.c.l.b16 %v2338
    %v2741 = vunpack.c.h.b16 %v2338
    %v2742 = vunpack.c.l.b16 %v2339
    %v2743 = vunpack.c.l.b16 %v2340
    %v2744 = vunpack.c.h.b16 %v2340
    %v2745 = vunpack.c.l.b16 %v2341
    %v2746 = vunpack.c.l.b16 %v2342
    %v2747 = vunpack.c.h.b16 %v2342
    %v2748 = vunpack.c.l.b16 %v2343
    %v2749 = vunpack.c.l.b16 %v2344
    %v2750 = vunpack.c.h.b16 %v2344
    %v2751 = vunpack.c.l.b16 %v2345
    %v2752 = vunpack.c.l.b16 %v2346
    %v2753 = vunpack.c.h.b16 %v2346
    %v2754 = vunpack.c.l.b16 %v2347
    %v2755 = vunpack.c.l.b16 %v2348
    %v2756 = vunpack.c.h.b16 %v2348
    %v2757 = vunpack.c.l.b16 %v2349
    %v2758 = vunpack.c.l.b16 %v2350
    %v2759 = vunpack.c.h.b16 %v2350
    %v2760 = vunpack.c.l.b16 %v2351
    %v2761 = vunpack.c.l.b16 %v2352
    %v2762 = vunpack.c.h.b16 %v2352
    %v2763 = vunpack.c.l.b16 %v2353
    %v2764 = vunpack.c.l.b16 %v2354
    %v2765 = vunpack.c.h.b16 %v2354
    %v2766 = vunpack.c.l.b16 %v2355
    %v2767 = vunpack.c.l.b16 %v2356
    %v2768 = vunpack.c.h.b16 %v2356
    %v2769 = vunpack.c.l.b16 %v2357
    %v2770 = vunpack.c.l.b16 %v2358
    %v2771 = vunpack.c.h.b16 %v2358
    %v2772 = vunpack.c.l.b16 %v2359
    %v2773 = vunpack.c.l.b16 %v2360
    %v2774 = vunpack.c.h.b16 %v2360
    %v2775 = vunpack.c.l.b16 %v2361
    %v2776 = vunpack.c.l.b16 %v2362
    %v2777 = vunpack.c.h.b16 %v2362
    %v2778 = vunpack.c.l.b16 %v2363
    %v2779 = vunpack.c.l.b16 %v2364
    %v2780 = vunpack.c.h.b16 %v2364
    %v2781 = vunpack.c.l.b16 %v2365
    %v2782 = vunpack.c.l.b16 %v2366
    %v2783 = vunpack.c.h.b16 %v2366
    %v2784 = vunpack.c.l.b16 %v2367
    %v2785 = vunpack.c.l.b16 %v2368
    %v2786 = vunpack.c.h.b16 %v2368
    %v2787 = vunpack.c.l.b16 %v2369
    %v2788 = vunpack.c.l.b16 %v2370
    %v2789 = vunpack.c.h.b16 %v2370
    %v2790 = vunpack.c.l.b16 %v2371
    %v2791 = vunpack.c.l.b16 %v2372
    %v2792 = vunpack.c.h.b16 %v2372
    %v2793 = vunpack.c.l.b16 %v2373
    %v2794 = vunpack.c.l.b16 %v2374
    %v2795 = vunpack.c.h.b16 %v2374
    %v2796 = vunpack.c.l.b16 %v2375
    %v2797 = vunpack.c.l.b16 %v2376
    %v2798 = vunpack.c.h.b16 %v2376
    %v2799 = vunpack.c.l.b16 %v2377
    %v2800 = vunpack.c.l.b16 %v2378
    %v2801 = vunpack.c.h.b16 %v2378
    %v2802 = vunpack.c.l.b16 %v2379
    %v2803 = vunpack.c.l.b16 %v2380
    %v2804 = vunpack.c.h.b16 %v2380
    %v2805 = vunpack.c.l.b16 %v2381
    %v2806 = vunpack.c.l.b16 %v2382
    %v2807 = vunpack.c.h.b16 %v2382
    %v2808 = vunpack.c.l.b16 %v2383
    %v2809 = vunpack.c.l.b16 %v2384
    %v2810 = vunpack.c.h.b16 %v2384
    %v2811 = vunpack.c.l.b16 %v2385
    %v2812 = vunpack.c.l.b16 %v2386
    %v2813 = vunpack.c.h.b16 %v2386
    %v2814 = vunpack.c.l.b16 %v2387
    %v2815 = vunpack.c.l.b16 %v2388
    %v2816 = vunpack.c.h.b16 %v2388
    %v2817 = vunpack.c.l.b16 %v2389
    %v2818 = vunpack.c.l.b16 %v2390
    %v2819 = vunpack.c.h.b16 %v2390
    %v2820 = vunpack.c.l.b16 %v2391
    %v2821 = vunpack.c.l.b16 %v2392
    %v2822 = vunpack.c.h.b16 %v2392
    %v2823 = vunpack.c.l.b16 %v2393
    %v2824 = vunpack.c.l.b16 %v2394
    %v2825 = vunpack.c.h.b16 %v2394
    %v2826 = vunpack.c.l.b16 %v2395
    %v2827 = vunpack.c.l.b16 %v2396
    %v2828 = vunpack.c.h.b16 %v2396
    %v2829 = vunpack.c.l.b16 %v2397
    %v2830 = vunpack.c.l.b16 %v2398
    %v2831 = vunpack.c.h.b16 %v2398
    %v2832 = vunpack.c.l.b16 %v2399
    %v2833 = vunpack.c.l.b16 %v2400
    %v2834 = vunpack.c.h.b16 %v2400
    %v2835 = vunpack.c.l.b16 %v2401
    %v2836 = vunpack.c.l.b16 %v2402
    %v2837 = vunpack.c.h.b16 %v2402
    %v2838 = vunpack.c.l.b16 %v2403
    %v2839 = vunpack.c.l.b16 %v2404
    %v2840 = vunpack.c.h.b16 %v2404
    %v2841 = vunpack.c.l.b16 %v2405
    %v2842 = vunpack.c.l.b16 %v2406
    %v2843 = vunpack.c.h.b16 %v2406
    %v2844 = vunpack.c.l.b16 %v2407
    %v2845 = vunpack.c.l.b16 %v2408
    %v2846 = vunpack.c.h.b16 %v2408
    %v2847 = vunpack.c.l.b16 %v2409
    %v2848 = vunpack.c.l.b16 %v2410
    %v2849 = vunpack.c.h.b16 %v2410
    %v2850 = vunpack.c.l.b16 %v2411
    %v2851 = vunpack.c.l.b16 %v2412
    %v2852 = vunpack.c.h.b16 %v2412
    %v2853 = vunpack.c.l.b16 %v2413
    %v2854 = vunpack.c.l.b16 %v2414
    %v2855 = vunpack.c.h.b16 %v2414
    %v2856 = vunpack.c.l.b16 %v2415
    %v2857 = vunpack.c.l.b16 %v2416
    %v2858 = vunpack.c.h.b16 %v2416
    %v2859 = vunpack.c.l.b16 %v2417
    %v2860 = vunpack.c.l.b16 %v2418
    %v2861 = vunpack.c.h.b16 %v2418
    %v2862 = vunpack.c.l.b16 %v2419
    %v2863 = vunpack.c.l.b16 %v2420
    %v2864 = vunpack.c.h.b16 %v2420
    %v2865 = vunpack.c.l.b16 %v2421
    %v2866 = vunpack.c.l.b16 %v2422
    %v2867 = vunpack.c.h.b16 %v2422
    %v2868 = vunpack.c.l.b16 %v2423
    %v2869 = vunpack.c.l.b16 %v2424
    %v2870 = vunpack.c.h.b16 %v2424
    %v2871 = vunpack.c.l.b16 %v2425
    %v2872 = vunpack.c.l.b16 %v2426
    %v2873 = vunpack.c.h.b16 %v2426
    %v2874 = vunpack.c.l.b16 %v2427
    %v2875 = vunpack.c.l.b16 %v2428
    %v2876 = vunpack.c.h.b16 %v2428
    %v2877 = vunpack.c.l.b16 %v2429
    %v2878 = vunpack.c.l.b16 %v2430
    %v2879 = vunpack.c.h.b16 %v2430
    %v2880 = vunpack.c.l.b16 %v2431
    %v2881 = vunpack.c.l.b16 %v2432
    %v2882 = vunpack.c.h.b16 %v2432
    %v2883 = vunpack.c.l.b16 %v2433
    %v2884 = vunpack.c.l.b16 %v2434
    %v2885 = vunpack.c.h.b16 %v2434
    %v2886 = vunpack.c.l.b16 %v2435
    %v2887 = vunpack.c.l.b16 %v2436
    %v2888 = vunpack.c.h.b16 %v2436
    %v2889 = vunpack.c.l.b16 %v2437
    %v2890 = vunpack.c.l.b16 %v2438
    %v2891 = vunpack.c.h.b16 %v2438
    %v2892 = vunpack.c.l.b16 %v2439
    %v2893 = vunpack.c.l.b16 %v2440
    %v2894 = vunpack.c.h.b16 %v2440
    %v2895 = vunpack.c.l.b16 %v2441
    %v2896 = vunpack.c.l.b16 %v2442
    %v2897 = vunpack.c.h.b16 %v2442
    %v2898 = vunpack.c.l.b16 %v2443
    %v2899 = vunpack.c.l.b16 %v2444
    %v2900 = vunpack.c.h.b16 %v2444
    %v2901 = vunpack.c.l.b16 %v2445
    %v2902 = vunpack.c.l.b16 %v2446
    %v2903 = vunpack.c.h.b16 %v2446
    %v2904 = vunpack.c.l.b16 %v2447
    %v2905 = vunpack.c.l.b16 %v2448
    %v2906 = vunpack.c.h.b16 %v2448
    %v2907 = vunpack.c.l.b16 %v2449
    %v2908 = vunpack.c.l.b16 %v2450
    %v2909 = vunpack.c.h.b16 %v2450
    %v2910 = vunpack.c.l.b16 %v2451
    %v2911 = vunpack.c.l.b16 %v2452
    %v2912 = vunpack.c.h.b16 %v2452
    %v2913 = vunpack.c.l.b16 %v2453
    %v2914 = vunpack.c.l.b16 %v2454
    %v2915 = vunpack.c.h.b16 %v2454
    %v2916 = vunpack.c.l.b16 %v2455
    %v2917 = vunpack.c.l.b16 %v2456
    %v2918 = vunpack.c.h.b16 %v2456
    %v2919 = vunpack.c.l.b16 %v2457
    %v2920 = vunpack.c.l.b16 %v2458
    %v2921 = vunpack.c.h.b16 %v2458
    %v2922 = vunpack.c.l.b16 %v2459
    %v2923 = vunpack.c.l.b16 %v2460
    %v2924 = vunpack.c.h.b16 %v2460
    %v2925 = vunpack.c.l.b16 %v2461
    %v2926 = vunpack.c.l.b16 %v2462
    %v2927 = vunpack.c.h.b16 %v2462
    %v2928 = vunpack.c.l.b16 %v2463
    %v2929 = vunpack.c.l.b16 %v2464
    %v2930 = vunpack.c.h.b16 %v2464
    %v2931 = vunpack.c.l.b16 %v2465
    %v2932 = vunpack.c.l.b16 %v2466
    %v2933 = vunpack.c.h.b16 %v2466
    %v2934 = vunpack.c.l.b16 %v2467
    %v2935 = vunpack.c.l.b16 %v2468
    %v2936 = vunpack.c.h.b16 %v2468
    %v2937 = vunpack.c.l.b16 %v2469
    %v2938 = vunpack.c.l.b16 %v2470
    %v2939 = vunpack.c.h.b16 %v2470
    %v2940 = vunpack.c.l.b16 %v2471
    %v2941 = vunpack.c.l.b16 %v2472
    %v2942 = vunpack.c.h.b16 %v2472
    %v2943 = vunpack.c.l.b16 %v2473
    %v2944 = vunpack.c.l.b16 %v2474
    %v2945 = vunpack.c.h.b16 %v2474
    %v2946 = vunpack.c.l.b16 %v2475
    %v2947 = vunpack.c.l.b16 %v2476
    %v2948 = vunpack.c.h.b16 %v2476
    %v2949 = vunpack.c.l.b16 %v2477
    %v2950 = vunpack.c.l.b16 %v2478
    %v2951 = vunpack.c.h.b16 %v2478
    %v2952 = vunpack.c.l.b16 %v2479
    %v2953 = vunpack.c.l.b16 %v2480
    %v2954 = vunpack.c.h.b16 %v2480
    %v2955 = vunpack.c.l.b16 %v2481
    %v2956 = vunpack.c.l.b16 %v2482
    %v2957 = vunpack.c.h.b16 %v2482
    %v2958 = vunpack.c.l.b16 %v2483
    %v2959 = vunpack.c.l.b16 %v2484
    %v2960 = vunpack.c.h.b16 %v2484
    %v2961 = vunpack.c.l.b16 %v2485
    %v2962 = vunpack.c.l.b16 %v2486
    %v2963 = vunpack.c.h.b16 %v2486
    %v2964 = vunpack.c.l.b16 %v2487
    %v2965 = vunpack.c.l.b16 %v2488
    %v2966 = vunpack.c.h.b16 %v2488
    %v2967 = vunpack.c.l.b16 %v2489
    %v2968 = vunpack.c.l.b16 %v2490
    %v2969 = vunpack.c.h.b16 %v2490
    %v2970 = vunpack.c.l.b16 %v2491
    %v2971 = vunpack.c.l.b16 %v2492
    %v2972 = vunpack.c.h.b16 %v2492
    %v2973 = vunpack.c.l.b16 %v2493
    %v2974 = vunpack.c.l.b16 %v2494
    %v2975 = vunpack.c.h.b16 %v2494
    %v2976 = vunpack.c.l.b16 %v2495
    %v2977 = vpack.c.b16 %v2692, %v2689
    %v2978 = vpack.c.b16 %v2693, %v2690
    %v2979 = vpack.c.b16 %v2694, %v2691
    %v2980 = vpack.c.b16 %v2698, %v2695
    %v2981 = vpack.c.b16 %v2699, %v2696
    %v2982 = vpack.c.b16 %v2700, %v2697
    %v2983 = vpack.c.b16 %v2704, %v2701
    %v2984 = vpack.c.b16 %v2705, %v2702
    %v2985 = vpack.c.b16 %v2706, %v2703
    %v2986 = vpack.c.b16 %v2710, %v2707
    %v2987 = vpack.c.b16 %v2711, %v2708
    %v2988 = vpack.c.b16 %v2712, %v2709
    %v2989 = vpack.c.b16 %v2716, %v2713
    %v2990 = vpack.c.b16 %v2717, %v2714
    %v2991 = vpack.c.b16 %v2718, %v2715
    %v2992 = vpack.c.b16 %v2722, %v2719
    %v2993 = vpack.c.b16 %v2723, %v2720
    %v2994 = vpack.c.b16 %v2724, %v2721
    %v2995 = vpack.c.b16 %v2728, %v2725
    %v2996 = vpack.c.b16 %v2729, %v2726
    %v2997 = vpack.c.b16 %v2730, %v2727
    %v2998 = vpack.c.b16 %v2734, %v2731
    %v2999 = vpack.c.b16 %v2735, %v2732
    %v3000 = vpack.c.b16 %v2736, %v2733
    %v3001 = vpack.c.b16 %v2740, %v2737
    %v3002 = vpack.c.b16 %v2741, %v2738
    %v3003 = vpack.c.b16 %v2742, %v2739
    %v3004 = vpack.c.b16 %v2746, %v2743
    %v3005 = vpack.c.b16 %v2747, %v2744
    %v3006 = vpack.c.b16 %v2748, %v2745
    %v3007 = vpack.c.b16 %v2752, %v2749
    %v3008 = vpack.c.b16 %v2753, %v2750
    %v3009 = vpack.c.b16 %v2754, %v2751
    %v3010 = vpack.c.b16 %v2758, %v2755
    %v3011 = vpack.c.b16 %v2759, %v2756
    %v3012 = vpack.c.b16 %v2760, %v2757
    %v3013 = vpack.c.b16 %v2764, %v2761
    %v3014 = vpack.c.b16 %v2765, %v2762
    %v3015 = vpack.c.b16 %v2766, %v2763
    %v3016 = vpack.c.b16 %v2770, %v2767
    %v3017 = vpack.c.b16 %v2771, %v2768
    %v3018 = vpack.c.b16 %v2772, %v2769
    %v3019 = vpack.c.b16 %v2776, %v2773
    %v3020 = vpack.c.b16 %v2777, %v2774
    %v3021 = vpack.c.b16 %v2778, %v2775
    %v3022 = vpack.c.b16 %v2782, %v2779
    %v3023 = vpack.c.b16 %v2783, %v2780
    %v3024 = vpack.c.b16 %v2784, %v2781
    %v3025 = vpack.c.b16 %v2788, %v2785
    %v3026 = vpack.c.b16 %v2789, %v2786
    %v3027 = vpack.c.b16 %v2790, %v2787
    %v3028 = vpack.c.b16 %v2794, %v2791
    %v3029 = vpack.c.b16 %v2795, %v2792
    %v3030 = vpack.c.b16 %v2796, %v2793
    %v3031 = vpack.c.b16 %v2800, %v2797
    %v3032 = vpack.c.b16 %v2801, %v2798
    %v3033 = vpack.c.b16 %v2802, %v2799
    %v3034 = vpack.c.b16 %v2806, %v2803
    %v3035 = vpack.c.b16 %v2807, %v2804
    %v3036 = vpack.c.b16 %v2808, %v2805
    %v3037 = vpack.c.b16 %v2812, %v2809
    %v3038 = vpack.c.b16 %v2813, %v2810
    %v3039 = vpack.c.b16 %v2814, %v2811
    %v3040 = vpack.c.b16 %v2818, %v2815
    %v3041 = vpack.c.b16 %v2819, %v2816
    %v3042 = vpack.c.b16 %v2820, %v2817
    %v3043 = vpack.c.b16 %v2824, %v2821
    %v3044 = vpack.c.b16 %v2825, %v2822
    %v3045 = vpack.c.b16 %v2826, %v2823
    %v3046 = vpack.c.b16 %v2830, %v2827
    %v3047 = vpack.c.b16 %v2831, %v2828
    %v3048 = vpack.c.b16 %v2832, %v2829
    %v3049 = vpack.c.b16 %v2836, %v2833
    %v3050 = vpack.c.b16 %v2837, %v2834
    %v3051 = vpack.c.b16 %v2838, %v2835
    %v3052 = vpack.c.b16 %v2842, %v2839
    %v3053 = vpack.c.b16 %v2843, %v2840
    %v3054 = vpack.c.b16 %v2844, %v2841
    %v3055 = vpack.c.b16 %v2848, %v2845
    %v3056 = vpack.c.b16 %v2849, %v2846
    %v3057 = vpack.c.b16 %v2850, %v2847
    %v3058 = vpack.c.b16 %v2854, %v2851
    %v3059 = vpack.c.b16 %v2855, %v2852
    %v3060 = vpack.c.b16 %v2856, %v2853
    %v3061 = vpack.c.b16 %v2860, %v2857
    %v3062 = vpack.c.b16 %v2861, %v2858
    %v3063 = vpack.c.b16 %v2862, %v2859
    %v3064 = vpack.c.b16 %v2866, %v2863
    %v3065 = vpack.c.b16 %v2867, %v2864
    %v3066 = vpack.c.b16 %v2868, %v2865
    %v3067 = vpack.c.b16 %v2872, %v2869
    %v3068 = vpack.c.b16 %v2873, %v2870
    %v3069 = vpack.c.b16 %v2874, %v2871
    %v3070 = vpack.c.b16 %v2878, %v2875
    %v3071 = vpack.c.b16 %v2879, %v2876
    %v3072 = vpack.c.b16 %v2880, %v2877
    %v3073 = vpack.c.b16 %v2884, %v2881
    %v3074 = vpack.c.b16 %v2885, %v2882
    %v3075 = vpack.c.b16 %v2886, %v2883
    %v3076 = vpack.c.b16 %v2890, %v2887
    %v3077 = vpack.c.b16 %v2891, %v2888
    %v3078 = vpack.c.b16 %v2892, %v2889
    %v3079 = vpack.c.b16 %v2896, %v2893
    %v3080 = vpack.c.b16 %v2897, %v2894
    %v3081 = vpack.c.b16 %v2898, %v2895
    %v3082 = vpack.c.b16 %v2902, %v2899
    %v3083 = vpack.c.b16 %v2903, %v2900
    %v3084 = vpack.c.b16 %v2904, %v2901
    %v3085 = vpack.c.b16 %v2908, %v2905
    %v3086 = vpack.c.b16 %v2909, %v2906
    %v3087 = vpack.c.b16 %v2910, %v2907
    %v3088 = vpack.c.b16 %v2914, %v2911
    %v3089 = vpack.c.b16 %v2915, %v2912
    %v3090 = vpack.c.b16 %v2916, %v2913
    %v3091 = vpack.c.b16 %v2920, %v2917
    %v3092 = vpack.c.b16 %v2921, %v2918
    %v3093 = vpack.c.b16 %v2922, %v2919
    %v3094 = vpack.c.b16 %v2926, %v2923
    %v3095 = vpack.c.b16 %v2927, %v2924
    %v3096 = vpack.c.b16 %v2928, %v2925
    %v3097 = vpack.c.b16 %v2932, %v2929
    %v3098 = vpack.c.b16 %v2933, %v2930
    %v3099 = vpack.c.b16 %v2934, %v2931
    %v3100 = vpack.c.b16 %v2938, %v2935
    %v3101 = vpack.c.b16 %v2939, %v2936
    %v3102 = vpack.c.b16 %v2940, %v2937
    %v3103 = vpack.c.b16 %v2944, %v2941
    %v3104 = vpack.c.b16 %v2945, %v2942
    %v3105 = vpack.c.b16 %v2946, %v2943
    %v3106 = vpack.c.b16 %v2950, %v2947
    %v3107 = vpack.c.b16 %v2951, %v2948
    %v3108 = vpack.c.b16 %v2952, %v2949
    %v3109 = vpack.c.b16 %v2956, %v2953
    %v3110 = vpack.c.b16 %v2957, %v2954
    %v3111 = vpack.c.b16 %v2958, %v2955
    %v3112 = vpack.c.b16 %v2962, %v2959
    %v3113 = vpack.c.b16 %v2963, %v2960
    %v3114 = vpack.c.b16 %v2964, %v2961
    %v3115 = vpack.c.b16 %v2968, %v2965
    %v3116 = vpack.c.b16 %v2969, %v2966
    %v3117 = vpack.c.b16 %v2970, %v2967
    %v3118 = vpack.c.b16 %v2974, %v2971
    %v3119 = vpack.c.b16 %v2975, %v2972
    %v3120 = vpack.c.b16 %v2976, %v2973
    %v3266 = vlaneseq
    %v3267 = vshrl.u32 %v3266, 7
    %v3268 = vsub.s32 0, %v3267
    %v3269 = vrot.slane %v2496, %v3268
    %v3270 = vlaneseq
    %v3271 = vshrl.u32 %v3270, 7
    %v3272 = vsub.s32 1, %v3271
    %v3273 = vrot.slane %v2496, %v3272
    %v3274 = vlaneseq
    %v3275 = vshrl.u32 %v3274, 7
    %v3276 = vsub.s32 2, %v3275
    %v3277 = vrot.slane %v2496, %v3276
    %3281 = vmatprep.subr.bf16.mxu0 %v2978
    %3282 = vmatpush1.bf16.msra.mxu0 %v2977
    %3283 = vmatprep.subr.bf16.mxu0 %v2981
    %3284 = vmatpush1.bf16.msra.mxu0 %v2980
    %3285 = vmatprep.subr.bf16.mxu0 %v2984
    %3286 = vmatpush1.bf16.msra.mxu0 %v2983
    %3287 = vmatprep.subr.bf16.mxu0 %v2987
    %3288 = vmatpush1.bf16.msra.mxu0 %v2986
    %3289 = vmatprep.subr.bf16.mxu0 %v2990
    %3290 = vmatpush1.bf16.msra.mxu0 %v2989
    %3291 = vmatprep.subr.bf16.mxu0 %v2993
    %3292 = vmatpush1.bf16.msra.mxu0 %v2992
    %3293 = vmatprep.subr.bf16.mxu0 %v2996
    %3294 = vmatpush1.bf16.msra.mxu0 %v2995
    %3295 = vmatprep.subr.bf16.mxu0 %v2999
    %3296 = vmatpush1.bf16.msra.mxu0 %v2998
    %3297 = vmatprep.subr.bf16.mxu0 %v3002
    %3298 = vmatpush1.bf16.msra.mxu0 %v3001
    %3299 = vmatprep.subr.bf16.mxu0 %v3005
    %3300 = vmatpush1.bf16.msra.mxu0 %v3004
    %3301 = vmatprep.subr.bf16.mxu0 %v3008
    %3302 = vmatpush1.bf16.msra.mxu0 %v3007
    %3303 = vmatprep.subr.bf16.mxu0 %v3011
    %3304 = vmatpush1.bf16.msra.mxu0 %v3010
    %3305 = vmatprep.subr.bf16.mxu0 %v3014
    %3306 = vmatpush1.bf16.msra.mxu0 %v3013
    %3307 = vmatprep.subr.bf16.mxu0 %v3017
    %3308 = vmatpush1.bf16.msra.mxu0 %v3016
    %3309 = vmatprep.subr.bf16.mxu0 %v3020
    %3310 = vmatpush1.bf16.msra.mxu0 %v3019
    %3311 = vmatprep.subr.bf16.mxu0 %v3023
    %3312 = vmatpush1.bf16.msra.mxu0 %v3022
    %3313 = vmatprep.mubr.bf16.mxu0 %v2299
    %3314 = vmatmul.mubr.bf16.gmra.mrb[0].mxu0 %v2298
    %v3315 = vpop.f32.mrb[0].mxu0
    %v3316 = vadd.f32 %v3269, %v3315
    %v3317 = vpop.f32.mrb[0].mxu0
    %v3318 = vadd.f32 %v3273, %v3317
    %v3319 = vpop.f32.mrb[0].mxu0
    %v3320 = vpop.f32.mrb[0].mxu0
    %3321 = vdwg.mxu0
    %3322 = vmatprep.subr.bf16.mxu0 %v3026
    %3323 = vmatpush1.bf16.msra.mxu0 %v3025
    %3324 = vmatprep.subr.bf16.mxu0 %v3029
    %3325 = vmatpush1.bf16.msra.mxu0 %v3028
    %3326 = vmatprep.subr.bf16.mxu0 %v3032
    %3327 = vmatpush1.bf16.msra.mxu0 %v3031
    %3328 = vmatprep.subr.bf16.mxu0 %v3035
    %3329 = vmatpush1.bf16.msra.mxu0 %v3034
    %3330 = vmatprep.subr.bf16.mxu0 %v3038
    %3331 = vmatpush1.bf16.msra.mxu0 %v3037
    %3332 = vmatprep.subr.bf16.mxu0 %v3041
    %3333 = vmatpush1.bf16.msra.mxu0 %v3040
    %3334 = vmatprep.subr.bf16.mxu0 %v3044
    %3335 = vmatpush1.bf16.msra.mxu0 %v3043
    %3336 = vmatprep.subr.bf16.mxu0 %v3047
    %3337 = vmatpush1.bf16.msra.mxu0 %v3046
    %3338 = vmatprep.subr.bf16.mxu0 %v3050
    %3339 = vmatpush1.bf16.msra.mxu0 %v3049
    %3340 = vmatprep.subr.bf16.mxu0 %v3053
    %3341 = vmatpush1.bf16.msra.mxu0 %v3052
    %3342 = vmatprep.subr.bf16.mxu0 %v3056
    %3343 = vmatpush1.bf16.msra.mxu0 %v3055
    %3344 = vmatprep.subr.bf16.mxu0 %v3059
    %3345 = vmatpush1.bf16.msra.mxu0 %v3058
    %3346 = vmatprep.subr.bf16.mxu0 %v3062
    %3347 = vmatpush1.bf16.msra.mxu0 %v3061
    %3348 = vmatprep.subr.bf16.mxu0 %v3065
    %3349 = vmatpush1.bf16.msra.mxu0 %v3064
    %3350 = vmatprep.subr.bf16.mxu0 %v3068
    %3351 = vmatpush1.bf16.msra.mxu0 %v3067
    %3352 = vmatprep.subr.bf16.mxu0 %v3071
    %3353 = vmatpush1.bf16.msra.mxu0 %v3070
    %3354 = vmatprep.mubr.bf16.mxu0 %v2301
    %3355 = vmatmul.mubr.bf16.gmra.mrb[0].mxu0 %v2300
    %v3356 = vpop.f32.mrb[0].mxu0
    %v3357 = vadd.f32 %v3316, %v3356
    %v3358 = vpop.f32.mrb[0].mxu0
    %v3359 = vadd.f32 %v3318, %v3358
    %v3360 = vpop.f32.mrb[0].mxu0
    %v3361 = vpop.f32.mrb[0].mxu0
    %3362 = vdwg.mxu0
    %3363 = vmatprep.subr.bf16.mxu0 %v3074
    %3364 = vmatpush1.bf16.msra.mxu0 %v3073
    %3365 = vmatprep.subr.bf16.mxu0 %v3077
    %3366 = vmatpush1.bf16.msra.mxu0 %v3076
    %3367 = vmatprep.subr.bf16.mxu0 %v3080
    %3368 = vmatpush1.bf16.msra.mxu0 %v3079
    %3369 = vmatprep.subr.bf16.mxu0 %v3083
    %3370 = vmatpush1.bf16.msra.mxu0 %v3082
    %3371 = vmatprep.subr.bf16.mxu0 %v3086
    %3372 = vmatpush1.bf16.msra.mxu0 %v3085
    %3373 = vmatprep.subr.bf16.mxu0 %v3089
    %3374 = vmatpush1.bf16.msra.mxu0 %v3088
    %3375 = vmatprep.subr.bf16.mxu0 %v3092
    %3376 = vmatpush1.bf16.msra.mxu0 %v3091
    %3377 = vmatprep.subr.bf16.mxu0 %v3095
    %3378 = vmatpush1.bf16.msra.mxu0 %v3094
    %3379 = vmatprep.subr.bf16.mxu0 %v3098
    %3380 = vmatpush1.bf16.msra.mxu0 %v3097
    %3381 = vmatprep.subr.bf16.mxu0 %v3101
    %3382 = vmatpush1.bf16.msra.mxu0 %v3100
    %3383 = vmatprep.subr.bf16.mxu0 %v3104
    %3384 = vmatpush1.bf16.msra.mxu0 %v3103
    %3385 = vmatprep.subr.bf16.mxu0 %v3107
    %3386 = vmatpush1.bf16.msra.mxu0 %v3106
    %3387 = vmatprep.subr.bf16.mxu0 %v3110
    %3388 = vmatpush1.bf16.msra.mxu0 %v3109
    %3389 = vmatprep.subr.bf16.mxu0 %v3113
    %3390 = vmatpush1.bf16.msra.mxu0 %v3112
    %3391 = vmatprep.subr.bf16.mxu0 %v3116
    %3392 = vmatpush1.bf16.msra.mxu0 %v3115
    %3393 = vmatprep.subr.bf16.mxu0 %v3119
    %3394 = vmatpush1.bf16.msra.mxu0 %v3118
    %3395 = vmatprep.mubr.bf16.mxu0 %v2303
    %3396 = vmatmul.mubr.bf16.gmra.mrb[0].mxu0 %v2302
    %v3397 = vpop.f32.mrb[0].mxu0
    %v3398 = vadd.f32 %v3357, %v3397
    %v3399 = vpop.f32.mrb[0].mxu0
    %v3400 = vadd.f32 %v3359, %v3399
    %v3401 = vpop.f32.mrb[0].mxu0
    %v3402 = vpop.f32.mrb[0].mxu0
    %3403 = vdwg.mxu0
    %3404 = vmatprep.subr.bf16.mxu0 0
    %3405 = vmatpush1.bf16.msra.mxu0 %v2979
    %3406 = vmatprep.subr.bf16.mxu0 0
    %3407 = vmatpush1.bf16.msra.mxu0 %v2982
    %3408 = vmatprep.subr.bf16.mxu0 0
    %3409 = vmatpush1.bf16.msra.mxu0 %v2985
    %3410 = vmatprep.subr.bf16.mxu0 0
    %3411 = vmatpush1.bf16.msra.mxu0 %v2988
    %3412 = vmatprep.subr.bf16.mxu0 0
    %3413 = vmatpush1.bf16.msra.mxu0 %v2991
    %3414 = vmatprep.subr.bf16.mxu0 0
    %3415 = vmatpush1.bf16.msra.mxu0 %v2994
    %3416 = vmatprep.subr.bf16.mxu0 0
    %3417 = vmatpush1.bf16.msra.mxu0 %v2997
    %3418 = vmatprep.subr.bf16.mxu0 0
    %3419 = vmatpush1.bf16.msra.mxu0 %v3000
    %3420 = vmatprep.subr.bf16.mxu0 0
    %3421 = vmatpush1.bf16.msra.mxu0 %v3003
    %3422 = vmatprep.subr.bf16.mxu0 0
    %3423 = vmatpush1.bf16.msra.mxu0 %v3006
    %3424 = vmatprep.subr.bf16.mxu0 0
    %3425 = vmatpush1.bf16.msra.mxu0 %v3009
    %3426 = vmatprep.subr.bf16.mxu0 0
    %3427 = vmatpush1.bf16.msra.mxu0 %v3012
    %3428 = vmatprep.subr.bf16.mxu0 0
    %3429 = vmatpush1.bf16.msra.mxu0 %v3015
    %3430 = vmatprep.subr.bf16.mxu0 0
    %3431 = vmatpush1.bf16.msra.mxu0 %v3018
    %3432 = vmatprep.subr.bf16.mxu0 0
    %3433 = vmatpush1.bf16.msra.mxu0 %v3021
    %3434 = vmatprep.subr.bf16.mxu0 0
    %3435 = vmatpush1.bf16.msra.mxu0 %v3024
    %3436 = vmatprep.mubr.bf16.mxu0 %v2299
    %3437 = vmatmul.mubr.bf16.gmra.mrb[0].mxu0 %v2298
    %v3438 = vpop.f32.mrb[0].mxu0
    %v3439 = vadd.f32 %v3277, %v3438
    %v3440 = vpop.f32.mrb[0].mxu0
    %v3441 = vpop.f32.mrb[0].mxu0
    %v3442 = vpop.f32.mrb[0].mxu0
    %3443 = vdwg.mxu0
    %3444 = vmatprep.subr.bf16.mxu0 0
    %3445 = vmatpush1.bf16.msra.mxu0 %v3027
    %3446 = vmatprep.subr.bf16.mxu0 0
    %3447 = vmatpush1.bf16.msra.mxu0 %v3030
    %3448 = vmatprep.subr.bf16.mxu0 0
    %3449 = vmatpush1.bf16.msra.mxu0 %v3033
    %3450 = vmatprep.subr.bf16.mxu0 0
    %3451 = vmatpush1.bf16.msra.mxu0 %v3036
    %3452 = vmatprep.subr.bf16.mxu0 0
    %3453 = vmatpush1.bf16.msra.mxu0 %v3039
    %3454 = vmatprep.subr.bf16.mxu0 0
    %3455 = vmatpush1.bf16.msra.mxu0 %v3042
    %3456 = vmatprep.subr.bf16.mxu0 0
    %3457 = vmatpush1.bf16.msra.mxu0 %v3045
    %3458 = vmatprep.subr.bf16.mxu0 0
    %3459 = vmatpush1.bf16.msra.mxu0 %v3048
    %3460 = vmatprep.subr.bf16.mxu0 0
    %3461 = vmatpush1.bf16.msra.mxu0 %v3051
    %3462 = vmatprep.subr.bf16.mxu0 0
    %3463 = vmatpush1.bf16.msra.mxu0 %v3054
    %3464 = vmatprep.subr.bf16.mxu0 0
    %3465 = vmatpush1.bf16.msra.mxu0 %v3057
    %3466 = vmatprep.subr.bf16.mxu0 0
    %3467 = vmatpush1.bf16.msra.mxu0 %v3060
    %3468 = vmatprep.subr.bf16.mxu0 0
    %3469 = vmatpush1.bf16.msra.mxu0 %v3063
    %3470 = vmatprep.subr.bf16.mxu0 0
    %3471 = vmatpush1.bf16.msra.mxu0 %v3066
    %3472 = vmatprep.subr.bf16.mxu0 0
    %3473 = vmatpush1.bf16.msra.mxu0 %v3069
    %3474 = vmatprep.subr.bf16.mxu0 0
    %3475 = vmatpush1.bf16.msra.mxu0 %v3072
    %3476 = vmatprep.mubr.bf16.mxu0 %v2301
    %3477 = vmatmul.mubr.bf16.gmra.mrb[0].mxu0 %v2300
    %v3478 = vpop.f32.mrb[0].mxu0
    %v3479 = vadd.f32 %v3439, %v3478
    %v3480 = vpop.f32.mrb[0].mxu0
    %v3481 = vpop.f32.mrb[0].mxu0
    %v3482 = vpop.f32.mrb[0].mxu0
    %3483 = vdwg.mxu0
    %3484 = vmatprep.subr.bf16.mxu0 0
    %3485 = vmatpush1.bf16.msra.mxu0 %v3075
    %3486 = vmatprep.subr.bf16.mxu0 0
    %3487 = vmatpush1.bf16.msra.mxu0 %v3078
    %3488 = vmatprep.subr.bf16.mxu0 0
    %3489 = vmatpush1.bf16.msra.mxu0 %v3081
    %3490 = vmatprep.subr.bf16.mxu0 0
    %3491 = vmatpush1.bf16.msra.mxu0 %v3084
    %3492 = vmatprep.subr.bf16.mxu0 0
    %3493 = vmatpush1.bf16.msra.mxu0 %v3087
    %3494 = vmatprep.subr.bf16.mxu0 0
    %3495 = vmatpush1.bf16.msra.mxu0 %v3090
    %3496 = vmatprep.subr.bf16.mxu0 0
    %3497 = vmatpush1.bf16.msra.mxu0 %v3093
    %3498 = vmatprep.subr.bf16.mxu0 0
    %3499 = vmatpush1.bf16.msra.mxu0 %v3096
    %3500 = vmatprep.subr.bf16.mxu0 0
    %3501 = vmatpush1.bf16.msra.mxu0 %v3099
    %3502 = vmatprep.subr.bf16.mxu0 0
    %3503 = vmatpush1.bf16.msra.mxu0 %v3102
    %3504 = vmatprep.subr.bf16.mxu0 0
    %3505 = vmatpush1.bf16.msra.mxu0 %v3105
    %3506 = vmatprep.subr.bf16.mxu0 0
    %3507 = vmatpush1.bf16.msra.mxu0 %v3108
    %3508 = vmatprep.subr.bf16.mxu0 0
    %3509 = vmatpush1.bf16.msra.mxu0 %v3111
    %3510 = vmatprep.subr.bf16.mxu0 0
    %3511 = vmatpush1.bf16.msra.mxu0 %v3114
    %3512 = vmatprep.subr.bf16.mxu0 0
    %3513 = vmatpush1.bf16.msra.mxu0 %v3117
    %3514 = vmatprep.subr.bf16.mxu0 0
    %3515 = vmatpush1.bf16.msra.mxu0 %v3120
    %3516 = vmatprep.mubr.bf16.mxu0 %v2303
    %3517 = vmatmul.mubr.bf16.gmra.mrb[0].mxu0 %v2302
    %v3518 = vpop.f32.mrb[0].mxu0
    %v3519 = vadd.f32 %v3479, %v3518
    %v3520 = vpop.f32.mrb[0].mxu0
    %v3521 = vpop.f32.mrb[0].mxu0
    %v3522 = vpop.f32.mrb[0].mxu0
    %3523 = vdwg.mxu0
    %vm3524 = vcmp.gt.f32.partialorder %v3398, 0.0
    %vm3525 = vcmp.gt.f32.partialorder %v3400, 0.0
    %vm3526 = vcmp.gt.f32.partialorder %v3519, 0.0
    %v3527 = vmul.f32 %v3398, 0.1
    %v3528 = vmul.f32 %v3400, 0.1
    %v3529 = vmul.f32 %v3519, 0.1
    %v3530 = vsel %vm3524, %v3398, %v3527
    %v3531 = vsel %vm3525, %v3400, %v3528
    %v3532 = vsel %vm3526, %v3519, %v3529
    %v3533 = vpack.c.bf16 %v3530, %v3530
    %v3534 = vpack.c.bf16 %v3531, %v3531
    %v3535 = vpack.c.bf16 %v3532, %v3532
    %v3536 = vpack.c.bf16 %v230, %v230
    %v3537 = vld [vmem:[#allocation13] sm:$0xff]
    %v3538 = vld [vmem:[#allocation13 + $0x8] sm:$0xff]
    %v3539 = vld [vmem:[#allocation13 + $0x10] sm:$0xff]
    %v3540 = vld [vmem:[#allocation13 + $0x18] sm:$0xff]
    %v3541 = vld [vmem:[#allocation13 + $0x20] sm:$0xff]
    %v3542 = vld [vmem:[#allocation13 + $0x28] sm:$0xff]
    %v3543 = vld [vmem:[#allocation13 + $0x30] sm:$0xff]
    %v3544 = vld [vmem:[#allocation13 + $0x38] sm:$0xff]
    %v3545 = vld [vmem:[#allocation13 + $0x40] sm:$0xff]
    %v3546 = vld [vmem:[#allocation13 + $0x48] sm:$0xff]
    %v3547 = vld [vmem:[#allocation13 + $0x50] sm:$0xff]
    %v3548 = vld [vmem:[#allocation13 + $0x58] sm:$0xff]
    %v3549 = vld [vmem:[#allocation13 + $0x60] sm:$0xff]
    %v3550 = vld [vmem:[#allocation13 + $0x68] sm:$0xff]
    %v3551 = vld [vmem:[#allocation13 + $0x70] sm:$0xff]
    %v3552 = vld [vmem:[#allocation13 + $0x78] sm:$0xff]
    %v3553 = vld [vmem:[#allocation13 + $0x80] sm:$0xff]
    %v3554 = vld [vmem:[#allocation13 + $0x88] sm:$0xff]
    %v3555 = vld [vmem:[#allocation13 + $0x90] sm:$0xff]
    %v3556 = vld [vmem:[#allocation13 + $0x98] sm:$0xff]
    %v3557 = vld [vmem:[#allocation13 + $0xa0] sm:$0xff]
    %v3558 = vld [vmem:[#allocation13 + $0xa8] sm:$0xff]
    %v3559 = vld [vmem:[#allocation13 + $0xb0] sm:$0xff]
    %v3560 = vld [vmem:[#allocation13 + $0xb8] sm:$0xff]
    %v3561 = vld [vmem:[#allocation13 + $0xc0] sm:$0xff]
    %v3562 = vld [vmem:[#allocation13 + $0xc8] sm:$0xff]
    %v3563 = vld [vmem:[#allocation13 + $0xd0] sm:$0xff]
    %v3564 = vld [vmem:[#allocation13 + $0xd8] sm:$0xff]
    %v3565 = vld [vmem:[#allocation13 + $0xe0] sm:$0xff]
    %v3566 = vld [vmem:[#allocation13 + $0xe8] sm:$0xff]
    %v3567 = vld [vmem:[#allocation13 + $0xf0] sm:$0xff]
    %v3568 = vld [vmem:[#allocation13 + $0xf8] sm:$0xff]
    %v3569 = vld [vmem:[#allocation13 + $0x100] sm:$0xff]
    %v3570 = vld [vmem:[#allocation13 + $0x108] sm:$0xff]
    %v3571 = vld [vmem:[#allocation13 + $0x110] sm:$0xff]
    %v3572 = vld [vmem:[#allocation13 + $0x118] sm:$0xff]
    %v3573 = vld [vmem:[#allocation13 + $0x120] sm:$0xff]
    %v3574 = vld [vmem:[#allocation13 + $0x128] sm:$0xff]
    %v3575 = vld [vmem:[#allocation13 + $0x130] sm:$0xff]
    %v3576 = vld [vmem:[#allocation13 + $0x138] sm:$0xff]
    %v3577 = vld [vmem:[#allocation13 + $0x140] sm:$0xff]
    %v3578 = vld [vmem:[#allocation13 + $0x148] sm:$0xff]
    %v3579 = vld [vmem:[#allocation13 + $0x150] sm:$0xff]
    %v3580 = vld [vmem:[#allocation13 + $0x158] sm:$0xff]
    %v3581 = vld [vmem:[#allocation13 + $0x160] sm:$0xff]
    %v3582 = vld [vmem:[#allocation13 + $0x168] sm:$0xff]
    %v3583 = vld [vmem:[#allocation13 + $0x170] sm:$0xff]
    %v3584 = vld [vmem:[#allocation13 + $0x178] sm:$0xff]
    %v3585 = vld [vmem:[#allocation13 + $0x180] sm:$0xff]
    %v3586 = vld [vmem:[#allocation13 + $0x188] sm:$0xff]
    %v3587 = vld [vmem:[#allocation13 + $0x190] sm:$0xff]
    %v3588 = vld [vmem:[#allocation13 + $0x198] sm:$0xff]
    %v3589 = vld [vmem:[#allocation13 + $0x1a0] sm:$0xff]
    %v3590 = vld [vmem:[#allocation13 + $0x1a8] sm:$0xff]
    %v3591 = vld [vmem:[#allocation13 + $0x1b0] sm:$0xff]
    %v3592 = vld [vmem:[#allocation13 + $0x1b8] sm:$0xff]
    %v3593 = vld [vmem:[#allocation13 + $0x1c0] sm:$0xff]
    %v3594 = vld [vmem:[#allocation13 + $0x1c8] sm:$0xff]
    %v3595 = vld [vmem:[#allocation13 + $0x1d0] sm:$0xff]
    %v3596 = vld [vmem:[#allocation13 + $0x1d8] sm:$0xff]
    %v3597 = vld [vmem:[#allocation13 + $0x1e0] sm:$0xff]
    %v3598 = vld [vmem:[#allocation13 + $0x1e8] sm:$0xff]
    %v3599 = vld [vmem:[#allocation13 + $0x1f0] sm:$0xff]
    %v3600 = vld [vmem:[#allocation13 + $0x1f8] sm:$0xff]
    %v3601 = vld [vmem:[#allocation13 + $0x200] sm:$0xff]
    %v3602 = vld [vmem:[#allocation13 + $0x208] sm:$0xff]
    %v3603 = vld [vmem:[#allocation13 + $0x210] sm:$0xff]
    %v3604 = vld [vmem:[#allocation13 + $0x218] sm:$0xff]
    %v3605 = vld [vmem:[#allocation13 + $0x220] sm:$0xff]
    %v3606 = vld [vmem:[#allocation13 + $0x228] sm:$0xff]
    %v3607 = vld [vmem:[#allocation13 + $0x230] sm:$0xff]
    %v3608 = vld [vmem:[#allocation13 + $0x238] sm:$0xff]
    %v3609 = vld [vmem:[#allocation13 + $0x240] sm:$0xff]
    %v3610 = vld [vmem:[#allocation13 + $0x248] sm:$0xff]
    %v3611 = vld [vmem:[#allocation13 + $0x250] sm:$0xff]
    %v3612 = vld [vmem:[#allocation13 + $0x258] sm:$0xff]
    %v3613 = vld [vmem:[#allocation13 + $0x260] sm:$0xff]
    %v3614 = vld [vmem:[#allocation13 + $0x268] sm:$0xff]
    %v3615 = vld [vmem:[#allocation13 + $0x270] sm:$0xff]
    %v3616 = vld [vmem:[#allocation13 + $0x278] sm:$0xff]
    %v3617 = vld [vmem:[#allocation13 + $0x280] sm:$0xff]
    %v3618 = vld [vmem:[#allocation13 + $0x288] sm:$0xff]
    %v3619 = vld [vmem:[#allocation13 + $0x290] sm:$0xff]
    %v3620 = vld [vmem:[#allocation13 + $0x298] sm:$0xff]
    %v3621 = vld [vmem:[#allocation13 + $0x2a0] sm:$0xff]
    %v3622 = vld [vmem:[#allocation13 + $0x2a8] sm:$0xff]
    %v3623 = vld [vmem:[#allocation13 + $0x2b0] sm:$0xff]
    %v3624 = vld [vmem:[#allocation13 + $0x2b8] sm:$0xff]
    %v3625 = vld [vmem:[#allocation13 + $0x2c0] sm:$0xff]
    %v3626 = vld [vmem:[#allocation13 + $0x2c8] sm:$0xff]
    %v3627 = vld [vmem:[#allocation13 + $0x2d0] sm:$0xff]
    %v3628 = vld [vmem:[#allocation13 + $0x2d8] sm:$0xff]
    %v3629 = vld [vmem:[#allocation13 + $0x2e0] sm:$0xff]
    %v3630 = vld [vmem:[#allocation13 + $0x2e8] sm:$0xff]
    %v3631 = vld [vmem:[#allocation13 + $0x2f0] sm:$0xff]
    %v3632 = vld [vmem:[#allocation13 + $0x2f8] sm:$0xff]
    %v3633 = vld [vmem:[#allocation13 + $0x300] sm:$0xff]
    %v3634 = vld [vmem:[#allocation13 + $0x308] sm:$0xff]
    %v3635 = vld [vmem:[#allocation13 + $0x310] sm:$0xff]
    %v3636 = vld [vmem:[#allocation13 + $0x318] sm:$0xff]
    %v3637 = vld [vmem:[#allocation13 + $0x320] sm:$0xff]
    %v3638 = vld [vmem:[#allocation13 + $0x328] sm:$0xff]
    %v3639 = vld [vmem:[#allocation13 + $0x330] sm:$0xff]
    %v3640 = vld [vmem:[#allocation13 + $0x338] sm:$0xff]
    %v3641 = vld [vmem:[#allocation13 + $0x340] sm:$0xff]
    %v3642 = vld [vmem:[#allocation13 + $0x348] sm:$0xff]
    %v3643 = vld [vmem:[#allocation13 + $0x350] sm:$0xff]
    %v3644 = vld [vmem:[#allocation13 + $0x358] sm:$0xff]
    %v3645 = vld [vmem:[#allocation13 + $0x360] sm:$0xff]
    %v3646 = vld [vmem:[#allocation13 + $0x368] sm:$0xff]
    %v3647 = vld [vmem:[#allocation13 + $0x370] sm:$0xff]
    %v3648 = vld [vmem:[#allocation13 + $0x378] sm:$0xff]
    %v3649 = vld [vmem:[#allocation13 + $0x380] sm:$0xff]
    %v3650 = vld [vmem:[#allocation13 + $0x388] sm:$0xff]
    %v3651 = vld [vmem:[#allocation13 + $0x390] sm:$0xff]
    %v3652 = vld [vmem:[#allocation13 + $0x398] sm:$0xff]
    %v3653 = vld [vmem:[#allocation13 + $0x3a0] sm:$0xff]
    %v3654 = vld [vmem:[#allocation13 + $0x3a8] sm:$0xff]
    %v3655 = vld [vmem:[#allocation13 + $0x3b0] sm:$0xff]
    %v3656 = vld [vmem:[#allocation13 + $0x3b8] sm:$0xff]
    %v3657 = vld [vmem:[#allocation13 + $0x3c0] sm:$0xff]
    %v3658 = vld [vmem:[#allocation13 + $0x3c8] sm:$0xff]
    %v3659 = vld [vmem:[#allocation13 + $0x3d0] sm:$0xff]
    %v3660 = vld [vmem:[#allocation13 + $0x3d8] sm:$0xff]
    %v3661 = vld [vmem:[#allocation13 + $0x3e0] sm:$0xff]
    %v3662 = vld [vmem:[#allocation13 + $0x3e8] sm:$0xff]
    %v3663 = vld [vmem:[#allocation13 + $0x3f0] sm:$0xff]
    %v3664 = vld [vmem:[#allocation13 + $0x3f8] sm:$0xff]
    %v3665 = vld [vmem:[%s17] sm:$0xf]
    %v3794 = vunpack.c.l.b16 %v3537
    %v3795 = vunpack.c.h.b16 %v3537
    %v3796 = vunpack.c.l.b16 %v3538
    %v3797 = vunpack.c.h.b16 %v3538
    %v3798 = vunpack.c.l.b16 %v3539
    %v3799 = vunpack.c.h.b16 %v3539
    %v3800 = vunpack.c.l.b16 %v3540
    %v3801 = vunpack.c.h.b16 %v3540
    %v3802 = vunpack.c.l.b16 %v3541
    %v3803 = vunpack.c.h.b16 %v3541
    %v3804 = vunpack.c.l.b16 %v3542
    %v3805 = vunpack.c.h.b16 %v3542
    %v3806 = vunpack.c.l.b16 %v3543
    %v3807 = vunpack.c.h.b16 %v3543
    %v3808 = vunpack.c.l.b16 %v3544
    %v3809 = vunpack.c.h.b16 %v3544
    %v3810 = vunpack.c.l.b16 %v3545
    %v3811 = vunpack.c.h.b16 %v3545
    %v3812 = vunpack.c.l.b16 %v3546
    %v3813 = vunpack.c.h.b16 %v3546
    %v3814 = vunpack.c.l.b16 %v3547
    %v3815 = vunpack.c.h.b16 %v3547
    %v3816 = vunpack.c.l.b16 %v3548
    %v3817 = vunpack.c.h.b16 %v3548
    %v3818 = vunpack.c.l.b16 %v3549
    %v3819 = vunpack.c.h.b16 %v3549
    %v3820 = vunpack.c.l.b16 %v3550
    %v3821 = vunpack.c.h.b16 %v3550
    %v3822 = vunpack.c.l.b16 %v3551
    %v3823 = vunpack.c.h.b16 %v3551
    %v3824 = vunpack.c.l.b16 %v3552
    %v3825 = vunpack.c.h.b16 %v3552
    %v3826 = vunpack.c.l.b16 %v3553
    %v3827 = vunpack.c.h.b16 %v3553
    %v3828 = vunpack.c.l.b16 %v3554
    %v3829 = vunpack.c.h.b16 %v3554
    %v3830 = vunpack.c.l.b16 %v3555
    %v3831 = vunpack.c.h.b16 %v3555
    %v3832 = vunpack.c.l.b16 %v3556
    %v3833 = vunpack.c.h.b16 %v3556
    %v3834 = vunpack.c.l.b16 %v3557
    %v3835 = vunpack.c.h.b16 %v3557
    %v3836 = vunpack.c.l.b16 %v3558
    %v3837 = vunpack.c.h.b16 %v3558
    %v3838 = vunpack.c.l.b16 %v3559
    %v3839 = vunpack.c.h.b16 %v3559
    %v3840 = vunpack.c.l.b16 %v3560
    %v3841 = vunpack.c.h.b16 %v3560
    %v3842 = vunpack.c.l.b16 %v3561
    %v3843 = vunpack.c.h.b16 %v3561
    %v3844 = vunpack.c.l.b16 %v3562
    %v3845 = vunpack.c.h.b16 %v3562
    %v3846 = vunpack.c.l.b16 %v3563
    %v3847 = vunpack.c.h.b16 %v3563
    %v3848 = vunpack.c.l.b16 %v3564
    %v3849 = vunpack.c.h.b16 %v3564
    %v3850 = vunpack.c.l.b16 %v3565
    %v3851 = vunpack.c.h.b16 %v3565
    %v3852 = vunpack.c.l.b16 %v3566
    %v3853 = vunpack.c.h.b16 %v3566
    %v3854 = vunpack.c.l.b16 %v3567
    %v3855 = vunpack.c.h.b16 %v3567
    %v3856 = vunpack.c.l.b16 %v3568
    %v3857 = vunpack.c.h.b16 %v3568
    %v3858 = vunpack.c.l.b16 %v3569
    %v3859 = vunpack.c.h.b16 %v3569
    %v3860 = vunpack.c.l.b16 %v3570
    %v3861 = vunpack.c.h.b16 %v3570
    %v3862 = vunpack.c.l.b16 %v3571
    %v3863 = vunpack.c.h.b16 %v3571
    %v3864 = vunpack.c.l.b16 %v3572
    %v3865 = vunpack.c.h.b16 %v3572
    %v3866 = vunpack.c.l.b16 %v3573
    %v3867 = vunpack.c.h.b16 %v3573
    %v3868 = vunpack.c.l.b16 %v3574
    %v3869 = vunpack.c.h.b16 %v3574
    %v3870 = vunpack.c.l.b16 %v3575
    %v3871 = vunpack.c.h.b16 %v3575
    %v3872 = vunpack.c.l.b16 %v3576
    %v3873 = vunpack.c.h.b16 %v3576
    %v3874 = vunpack.c.l.b16 %v3577
    %v3875 = vunpack.c.h.b16 %v3577
    %v3876 = vunpack.c.l.b16 %v3578
    %v3877 = vunpack.c.h.b16 %v3578
    %v3878 = vunpack.c.l.b16 %v3579
    %v3879 = vunpack.c.h.b16 %v3579
    %v3880 = vunpack.c.l.b16 %v3580
    %v3881 = vunpack.c.h.b16 %v3580
    %v3882 = vunpack.c.l.b16 %v3581
    %v3883 = vunpack.c.h.b16 %v3581
    %v3884 = vunpack.c.l.b16 %v3582
    %v3885 = vunpack.c.h.b16 %v3582
    %v3886 = vunpack.c.l.b16 %v3583
    %v3887 = vunpack.c.h.b16 %v3583
    %v3888 = vunpack.c.l.b16 %v3584
    %v3889 = vunpack.c.h.b16 %v3584
    %v3890 = vunpack.c.l.b16 %v3585
    %v3891 = vunpack.c.h.b16 %v3585
    %v3892 = vunpack.c.l.b16 %v3586
    %v3893 = vunpack.c.h.b16 %v3586
    %v3894 = vunpack.c.l.b16 %v3587
    %v3895 = vunpack.c.h.b16 %v3587
    %v3896 = vunpack.c.l.b16 %v3588
    %v3897 = vunpack.c.h.b16 %v3588
    %v3898 = vunpack.c.l.b16 %v3589
    %v3899 = vunpack.c.h.b16 %v3589
    %v3900 = vunpack.c.l.b16 %v3590
    %v3901 = vunpack.c.h.b16 %v3590
    %v3902 = vunpack.c.l.b16 %v3591
    %v3903 = vunpack.c.h.b16 %v3591
    %v3904 = vunpack.c.l.b16 %v3592
    %v3905 = vunpack.c.h.b16 %v3592
    %v3906 = vunpack.c.l.b16 %v3593
    %v3907 = vunpack.c.h.b16 %v3593
    %v3908 = vunpack.c.l.b16 %v3594
    %v3909 = vunpack.c.h.b16 %v3594
    %v3910 = vunpack.c.l.b16 %v3595
    %v3911 = vunpack.c.h.b16 %v3595
    %v3912 = vunpack.c.l.b16 %v3596
    %v3913 = vunpack.c.h.b16 %v3596
    %v3914 = vunpack.c.l.b16 %v3597
    %v3915 = vunpack.c.h.b16 %v3597
    %v3916 = vunpack.c.l.b16 %v3598
    %v3917 = vunpack.c.h.b16 %v3598
    %v3918 = vunpack.c.l.b16 %v3599
    %v3919 = vunpack.c.h.b16 %v3599
    %v3920 = vunpack.c.l.b16 %v3600
    %v3921 = vunpack.c.h.b16 %v3600
    %v3922 = vunpack.c.l.b16 %v3601
    %v3923 = vunpack.c.h.b16 %v3601
    %v3924 = vunpack.c.l.b16 %v3602
    %v3925 = vunpack.c.h.b16 %v3602
    %v3926 = vunpack.c.l.b16 %v3603
    %v3927 = vunpack.c.h.b16 %v3603
    %v3928 = vunpack.c.l.b16 %v3604
    %v3929 = vunpack.c.h.b16 %v3604
    %v3930 = vunpack.c.l.b16 %v3605
    %v3931 = vunpack.c.h.b16 %v3605
    %v3932 = vunpack.c.l.b16 %v3606
    %v3933 = vunpack.c.h.b16 %v3606
    %v3934 = vunpack.c.l.b16 %v3607
    %v3935 = vunpack.c.h.b16 %v3607
    %v3936 = vunpack.c.l.b16 %v3608
    %v3937 = vunpack.c.h.b16 %v3608
    %v3938 = vunpack.c.l.b16 %v3609
    %v3939 = vunpack.c.h.b16 %v3609
    %v3940 = vunpack.c.l.b16 %v3610
    %v3941 = vunpack.c.h.b16 %v3610
    %v3942 = vunpack.c.l.b16 %v3611
    %v3943 = vunpack.c.h.b16 %v3611
    %v3944 = vunpack.c.l.b16 %v3612
    %v3945 = vunpack.c.h.b16 %v3612
    %v3946 = vunpack.c.l.b16 %v3613
    %v3947 = vunpack.c.h.b16 %v3613
    %v3948 = vunpack.c.l.b16 %v3614
    %v3949 = vunpack.c.h.b16 %v3614
    %v3950 = vunpack.c.l.b16 %v3615
    %v3951 = vunpack.c.h.b16 %v3615
    %v3952 = vunpack.c.l.b16 %v3616
    %v3953 = vunpack.c.h.b16 %v3616
    %v3954 = vunpack.c.l.b16 %v3617
    %v3955 = vunpack.c.h.b16 %v3617
    %v3956 = vunpack.c.l.b16 %v3618
    %v3957 = vunpack.c.h.b16 %v3618
    %v3958 = vunpack.c.l.b16 %v3619
    %v3959 = vunpack.c.h.b16 %v3619
    %v3960 = vunpack.c.l.b16 %v3620
    %v3961 = vunpack.c.h.b16 %v3620
    %v3962 = vunpack.c.l.b16 %v3621
    %v3963 = vunpack.c.h.b16 %v3621
    %v3964 = vunpack.c.l.b16 %v3622
    %v3965 = vunpack.c.h.b16 %v3622
    %v3966 = vunpack.c.l.b16 %v3623
    %v3967 = vunpack.c.h.b16 %v3623
    %v3968 = vunpack.c.l.b16 %v3624
    %v3969 = vunpack.c.h.b16 %v3624
    %v3970 = vunpack.c.l.b16 %v3625
    %v3971 = vunpack.c.h.b16 %v3625
    %v3972 = vunpack.c.l.b16 %v3626
    %v3973 = vunpack.c.h.b16 %v3626
    %v3974 = vunpack.c.l.b16 %v3627
    %v3975 = vunpack.c.h.b16 %v3627
    %v3976 = vunpack.c.l.b16 %v3628
    %v3977 = vunpack.c.h.b16 %v3628
    %v3978 = vunpack.c.l.b16 %v3629
    %v3979 = vunpack.c.h.b16 %v3629
    %v3980 = vunpack.c.l.b16 %v3630
    %v3981 = vunpack.c.h.b16 %v3630
    %v3982 = vunpack.c.l.b16 %v3631
    %v3983 = vunpack.c.h.b16 %v3631
    %v3984 = vunpack.c.l.b16 %v3632
    %v3985 = vunpack.c.h.b16 %v3632
    %v3986 = vunpack.c.l.b16 %v3633
    %v3987 = vunpack.c.h.b16 %v3633
    %v3988 = vunpack.c.l.b16 %v3634
    %v3989 = vunpack.c.h.b16 %v3634
    %v3990 = vunpack.c.l.b16 %v3635
    %v3991 = vunpack.c.h.b16 %v3635
    %v3992 = vunpack.c.l.b16 %v3636
    %v3993 = vunpack.c.h.b16 %v3636
    %v3994 = vunpack.c.l.b16 %v3637
    %v3995 = vunpack.c.h.b16 %v3637
    %v3996 = vunpack.c.l.b16 %v3638
    %v3997 = vunpack.c.h.b16 %v3638
    %v3998 = vunpack.c.l.b16 %v3639
    %v3999 = vunpack.c.h.b16 %v3639
    %v4000 = vunpack.c.l.b16 %v3640
    %v4001 = vunpack.c.h.b16 %v3640
    %v4002 = vunpack.c.l.b16 %v3641
    %v4003 = vunpack.c.h.b16 %v3641
    %v4004 = vunpack.c.l.b16 %v3642
    %v4005 = vunpack.c.h.b16 %v3642
    %v4006 = vunpack.c.l.b16 %v3643
    %v4007 = vunpack.c.h.b16 %v3643
    %v4008 = vunpack.c.l.b16 %v3644
    %v4009 = vunpack.c.h.b16 %v3644
    %v4010 = vunpack.c.l.b16 %v3645
    %v4011 = vunpack.c.h.b16 %v3645
    %v4012 = vunpack.c.l.b16 %v3646
    %v4013 = vunpack.c.h.b16 %v3646
    %v4014 = vunpack.c.l.b16 %v3647
    %v4015 = vunpack.c.h.b16 %v3647
    %v4016 = vunpack.c.l.b16 %v3648
    %v4017 = vunpack.c.h.b16 %v3648
    %v4018 = vunpack.c.l.b16 %v3649
    %v4019 = vunpack.c.h.b16 %v3649
    %v4020 = vunpack.c.l.b16 %v3650
    %v4021 = vunpack.c.h.b16 %v3650
    %v4022 = vunpack.c.l.b16 %v3651
    %v4023 = vunpack.c.h.b16 %v3651
    %v4024 = vunpack.c.l.b16 %v3652
    %v4025 = vunpack.c.h.b16 %v3652
    %v4026 = vunpack.c.l.b16 %v3653
    %v4027 = vunpack.c.h.b16 %v3653
    %v4028 = vunpack.c.l.b16 %v3654
    %v4029 = vunpack.c.h.b16 %v3654
    %v4030 = vunpack.c.l.b16 %v3655
    %v4031 = vunpack.c.h.b16 %v3655
    %v4032 = vunpack.c.l.b16 %v3656
    %v4033 = vunpack.c.h.b16 %v3656
    %v4034 = vunpack.c.l.b16 %v3657
    %v4035 = vunpack.c.h.b16 %v3657
    %v4036 = vunpack.c.l.b16 %v3658
    %v4037 = vunpack.c.h.b16 %v3658
    %v4038 = vunpack.c.l.b16 %v3659
    %v4039 = vunpack.c.h.b16 %v3659
    %v4040 = vunpack.c.l.b16 %v3660
    %v4041 = vunpack.c.h.b16 %v3660
    %v4042 = vunpack.c.l.b16 %v3661
    %v4043 = vunpack.c.h.b16 %v3661
    %v4044 = vunpack.c.l.b16 %v3662
    %v4045 = vunpack.c.h.b16 %v3662
    %v4046 = vunpack.c.l.b16 %v3663
    %v4047 = vunpack.c.h.b16 %v3663
    %v4048 = vunpack.c.l.b16 %v3664
    %v4049 = vunpack.c.h.b16 %v3664
    %v4050 = vpack.c.b16 %v3798, %v3794
    %v4051 = vpack.c.b16 %v3799, %v3795
    %v4052 = vpack.c.b16 %v3800, %v3796
    %v4053 = vpack.c.b16 %v3801, %v3797
    %v4054 = vpack.c.b16 %v3806, %v3802
    %v4055 = vpack.c.b16 %v3807, %v3803
    %v4056 = vpack.c.b16 %v3808, %v3804
    %v4057 = vpack.c.b16 %v3809, %v3805
    %v4058 = vpack.c.b16 %v3814, %v3810
    %v4059 = vpack.c.b16 %v3815, %v3811
    %v4060 = vpack.c.b16 %v3816, %v3812
    %v4061 = vpack.c.b16 %v3817, %v3813
    %v4062 = vpack.c.b16 %v3822, %v3818
    %v4063 = vpack.c.b16 %v3823, %v3819
    %v4064 = vpack.c.b16 %v3824, %v3820
    %v4065 = vpack.c.b16 %v3825, %v3821
    %v4066 = vpack.c.b16 %v3830, %v3826
    %v4067 = vpack.c.b16 %v3831, %v3827
    %v4068 = vpack.c.b16 %v3832, %v3828
    %v4069 = vpack.c.b16 %v3833, %v3829
    %v4070 = vpack.c.b16 %v3838, %v3834
    %v4071 = vpack.c.b16 %v3839, %v3835
    %v4072 = vpack.c.b16 %v3840, %v3836
    %v4073 = vpack.c.b16 %v3841, %v3837
    %v4074 = vpack.c.b16 %v3846, %v3842
    %v4075 = vpack.c.b16 %v3847, %v3843
    %v4076 = vpack.c.b16 %v3848, %v3844
    %v4077 = vpack.c.b16 %v3849, %v3845
    %v4078 = vpack.c.b16 %v3854, %v3850
    %v4079 = vpack.c.b16 %v3855, %v3851
    %v4080 = vpack.c.b16 %v3856, %v3852
    %v4081 = vpack.c.b16 %v3857, %v3853
    %v4082 = vpack.c.b16 %v3862, %v3858
    %v4083 = vpack.c.b16 %v3863, %v3859
    %v4084 = vpack.c.b16 %v3864, %v3860
    %v4085 = vpack.c.b16 %v3865, %v3861
    %v4086 = vpack.c.b16 %v3870, %v3866
    %v4087 = vpack.c.b16 %v3871, %v3867
    %v4088 = vpack.c.b16 %v3872, %v3868
    %v4089 = vpack.c.b16 %v3873, %v3869
    %v4090 = vpack.c.b16 %v3878, %v3874
    %v4091 = vpack.c.b16 %v3879, %v3875
    %v4092 = vpack.c.b16 %v3880, %v3876
    %v4093 = vpack.c.b16 %v3881, %v3877
    %v4094 = vpack.c.b16 %v3886, %v3882
    %v4095 = vpack.c.b16 %v3887, %v3883
    %v4096 = vpack.c.b16 %v3888, %v3884
    %v4097 = vpack.c.b16 %v3889, %v3885
    %v4098 = vpack.c.b16 %v3894, %v3890
    %v4099 = vpack.c.b16 %v3895, %v3891
    %v4100 = vpack.c.b16 %v3896, %v3892
    %v4101 = vpack.c.b16 %v3897, %v3893
    %v4102 = vpack.c.b16 %v3902, %v3898
    %v4103 = vpack.c.b16 %v3903, %v3899
    %v4104 = vpack.c.b16 %v3904, %v3900
    %v4105 = vpack.c.b16 %v3905, %v3901
    %v4106 = vpack.c.b16 %v3910, %v3906
    %v4107 = vpack.c.b16 %v3911, %v3907
    %v4108 = vpack.c.b16 %v3912, %v3908
    %v4109 = vpack.c.b16 %v3913, %v3909
    %v4110 = vpack.c.b16 %v3918, %v3914
    %v4111 = vpack.c.b16 %v3919, %v3915
    %v4112 = vpack.c.b16 %v3920, %v3916
    %v4113 = vpack.c.b16 %v3921, %v3917
    %v4114 = vpack.c.b16 %v3926, %v3922
    %v4115 = vpack.c.b16 %v3927, %v3923
    %v4116 = vpack.c.b16 %v3928, %v3924
    %v4117 = vpack.c.b16 %v3929, %v3925
    %v4118 = vpack.c.b16 %v3934, %v3930
    %v4119 = vpack.c.b16 %v3935, %v3931
    %v4120 = vpack.c.b16 %v3936, %v3932
    %v4121 = vpack.c.b16 %v3937, %v3933
    %v4122 = vpack.c.b16 %v3942, %v3938
    %v4123 = vpack.c.b16 %v3943, %v3939
    %v4124 = vpack.c.b16 %v3944, %v3940
    %v4125 = vpack.c.b16 %v3945, %v3941
    %v4126 = vpack.c.b16 %v3950, %v3946
    %v4127 = vpack.c.b16 %v3951, %v3947
    %v4128 = vpack.c.b16 %v3952, %v3948
    %v4129 = vpack.c.b16 %v3953, %v3949
    %v4130 = vpack.c.b16 %v3958, %v3954
    %v4131 = vpack.c.b16 %v3959, %v3955
    %v4132 = vpack.c.b16 %v3960, %v3956
    %v4133 = vpack.c.b16 %v3961, %v3957
    %v4134 = vpack.c.b16 %v3966, %v3962
    %v4135 = vpack.c.b16 %v3967, %v3963
    %v4136 = vpack.c.b16 %v3968, %v3964
    %v4137 = vpack.c.b16 %v3969, %v3965
    %v4138 = vpack.c.b16 %v3974, %v3970
    %v4139 = vpack.c.b16 %v3975, %v3971
    %v4140 = vpack.c.b16 %v3976, %v3972
    %v4141 = vpack.c.b16 %v3977, %v3973
    %v4142 = vpack.c.b16 %v3982, %v3978
    %v4143 = vpack.c.b16 %v3983, %v3979
    %v4144 = vpack.c.b16 %v3984, %v3980
    %v4145 = vpack.c.b16 %v3985, %v3981
    %v4146 = vpack.c.b16 %v3990, %v3986
    %v4147 = vpack.c.b16 %v3991, %v3987
    %v4148 = vpack.c.b16 %v3992, %v3988
    %v4149 = vpack.c.b16 %v3993, %v3989
    %v4150 = vpack.c.b16 %v3998, %v3994
    %v4151 = vpack.c.b16 %v3999, %v3995
    %v4152 = vpack.c.b16 %v4000, %v3996
    %v4153 = vpack.c.b16 %v4001, %v3997
    %v4154 = vpack.c.b16 %v4006, %v4002
    %v4155 = vpack.c.b16 %v4007, %v4003
    %v4156 = vpack.c.b16 %v4008, %v4004
    %v4157 = vpack.c.b16 %v4009, %v4005
    %v4158 = vpack.c.b16 %v4014, %v4010
    %v4159 = vpack.c.b16 %v4015, %v4011
    %v4160 = vpack.c.b16 %v4016, %v4012
    %v4161 = vpack.c.b16 %v4017, %v4013
    %v4162 = vpack.c.b16 %v4022, %v4018
    %v4163 = vpack.c.b16 %v4023, %v4019
    %v4164 = vpack.c.b16 %v4024, %v4020
    %v4165 = vpack.c.b16 %v4025, %v4021
    %v4166 = vpack.c.b16 %v4030, %v4026
    %v4167 = vpack.c.b16 %v4031, %v4027
    %v4168 = vpack.c.b16 %v4032, %v4028
    %v4169 = vpack.c.b16 %v4033, %v4029
    %v4170 = vpack.c.b16 %v4038, %v4034
    %v4171 = vpack.c.b16 %v4039, %v4035
    %v4172 = vpack.c.b16 %v4040, %v4036
    %v4173 = vpack.c.b16 %v4041, %v4037
    %v4174 = vpack.c.b16 %v4046, %v4042
    %v4175 = vpack.c.b16 %v4047, %v4043
    %v4176 = vpack.c.b16 %v4048, %v4044
    %v4177 = vpack.c.b16 %v4049, %v4045
    %v4307 = vlaneseq
    %v4308 = vshrl.u32 %v4307, 7
    %v4309 = vsub.s32 0, %v4308
    %v4310 = vrot.slane %v3665, %v4309
    %v4311 = vlaneseq
    %v4312 = vshrl.u32 %v4311, 7
    %v4313 = vsub.s32 1, %v4312
    %v4314 = vrot.slane %v3665, %v4313
    %v4315 = vlaneseq
    %v4316 = vshrl.u32 %v4315, 7
    %v4317 = vsub.s32 2, %v4316
    %v4318 = vrot.slane %v3665, %v4317
    %v4319 = vlaneseq
    %v4320 = vshrl.u32 %v4319, 7
    %v4321 = vsub.s32 3, %v4320
    %v4322 = vrot.slane %v3665, %v4321
    %4327 = vmatprep.subr.bf16.mxu0 %v4051
    %4328 = vmatpush1.bf16.msra.mxu0 %v4050
    %4329 = vmatprep.subr.bf16.mxu0 %v4055
    %4330 = vmatpush1.bf16.msra.mxu0 %v4054
    %4331 = vmatprep.subr.bf16.mxu0 %v4059
    %4332 = vmatpush1.bf16.msra.mxu0 %v4058
    %4333 = vmatprep.subr.bf16.mxu0 %v4063
    %4334 = vmatpush1.bf16.msra.mxu0 %v4062
    %4335 = vmatprep.subr.bf16.mxu0 %v4067
    %4336 = vmatpush1.bf16.msra.mxu0 %v4066
    %4337 = vmatprep.subr.bf16.mxu0 %v4071
    %4338 = vmatpush1.bf16.msra.mxu0 %v4070
    %4339 = vmatprep.subr.bf16.mxu0 %v4075
    %4340 = vmatpush1.bf16.msra.mxu0 %v4074
    %4341 = vmatprep.subr.bf16.mxu0 %v4079
    %4342 = vmatpush1.bf16.msra.mxu0 %v4078
    %4343 = vmatprep.subr.bf16.mxu0 %v4083
    %4344 = vmatpush1.bf16.msra.mxu0 %v4082
    %4345 = vmatprep.subr.bf16.mxu0 %v4087
    %4346 = vmatpush1.bf16.msra.mxu0 %v4086
    %4347 = vmatprep.subr.bf16.mxu0 %v4091
    %4348 = vmatpush1.bf16.msra.mxu0 %v4090
    %4349 = vmatprep.subr.bf16.mxu0 %v4095
    %4350 = vmatpush1.bf16.msra.mxu0 %v4094
    %4351 = vmatprep.subr.bf16.mxu0 %v4099
    %4352 = vmatpush1.bf16.msra.mxu0 %v4098
    %4353 = vmatprep.subr.bf16.mxu0 %v4103
    %4354 = vmatpush1.bf16.msra.mxu0 %v4102
    %4355 = vmatprep.subr.bf16.mxu0 %v4107
    %4356 = vmatpush1.bf16.msra.mxu0 %v4106
    %4357 = vmatprep.subr.bf16.mxu0 %v4111
    %4358 = vmatpush1.bf16.msra.mxu0 %v4110
    %4359 = vmatprep.mubr.bf16.mxu0 %v3534
    %4360 = vmatmul.mubr.bf16.gmra.mrb[0].mxu0 %v3533
    %v4361 = vpop.f32.mrb[0].mxu0
    %v4362 = vadd.f32 %v4310, %v4361
    %v4363 = vpop.f32.mrb[0].mxu0
    %v4364 = vadd.f32 %v4314, %v4363
    %v4365 = vpop.f32.mrb[0].mxu0
    %v4366 = vpop.f32.mrb[0].mxu0
    %4367 = vdwg.mxu0
    %4368 = vmatprep.subr.bf16.mxu0 %v4115
    %4369 = vmatpush1.bf16.msra.mxu0 %v4114
    %4370 = vmatprep.subr.bf16.mxu0 %v4119
    %4371 = vmatpush1.bf16.msra.mxu0 %v4118
    %4372 = vmatprep.subr.bf16.mxu0 %v4123
    %4373 = vmatpush1.bf16.msra.mxu0 %v4122
    %4374 = vmatprep.subr.bf16.mxu0 %v4127
    %4375 = vmatpush1.bf16.msra.mxu0 %v4126
    %4376 = vmatprep.subr.bf16.mxu0 %v4131
    %4377 = vmatpush1.bf16.msra.mxu0 %v4130
    %4378 = vmatprep.subr.bf16.mxu0 %v4135
    %4379 = vmatpush1.bf16.msra.mxu0 %v4134
    %4380 = vmatprep.subr.bf16.mxu0 %v4139
    %4381 = vmatpush1.bf16.msra.mxu0 %v4138
    %4382 = vmatprep.subr.bf16.mxu0 %v4143
    %4383 = vmatpush1.bf16.msra.mxu0 %v4142
    %4384 = vmatprep.subr.bf16.mxu0 %v4147
    %4385 = vmatpush1.bf16.msra.mxu0 %v4146
    %4386 = vmatprep.subr.bf16.mxu0 %v4151
    %4387 = vmatpush1.bf16.msra.mxu0 %v4150
    %4388 = vmatprep.subr.bf16.mxu0 %v4155
    %4389 = vmatpush1.bf16.msra.mxu0 %v4154
    %4390 = vmatprep.subr.bf16.mxu0 %v4159
    %4391 = vmatpush1.bf16.msra.mxu0 %v4158
    %4392 = vmatprep.subr.bf16.mxu0 %v4163
    %4393 = vmatpush1.bf16.msra.mxu0 %v4162
    %4394 = vmatprep.subr.bf16.mxu0 %v4167
    %4395 = vmatpush1.bf16.msra.mxu0 %v4166
    %4396 = vmatprep.subr.bf16.mxu0 %v4171
    %4397 = vmatpush1.bf16.msra.mxu0 %v4170
    %4398 = vmatprep.subr.bf16.mxu0 %v4175
    %4399 = vmatpush1.bf16.msra.mxu0 %v4174
    %4400 = vmatprep.mubr.bf16.mxu0 %v3536
    %4401 = vmatmul.mubr.bf16.gmra.mrb[0].mxu0 %v3535
    %v4402 = vpop.f32.mrb[0].mxu0
    %v4403 = vadd.f32 %v4362, %v4402
    %v4404 = vpop.f32.mrb[0].mxu0
    %v4405 = vadd.f32 %v4364, %v4404
    %v4406 = vpop.f32.mrb[0].mxu0
    %v4407 = vpop.f32.mrb[0].mxu0
    %4408 = vdwg.mxu0
    %4409 = vmatprep.subr.bf16.mxu0 %v4053
    %4410 = vmatpush1.bf16.msra.mxu0 %v4052
    %4411 = vmatprep.subr.bf16.mxu0 %v4057
    %4412 = vmatpush1.bf16.msra.mxu0 %v4056
    %4413 = vmatprep.subr.bf16.mxu0 %v4061
    %4414 = vmatpush1.bf16.msra.mxu0 %v4060
    %4415 = vmatprep.subr.bf16.mxu0 %v4065
    %4416 = vmatpush1.bf16.msra.mxu0 %v4064
    %4417 = vmatprep.subr.bf16.mxu0 %v4069
    %4418 = vmatpush1.bf16.msra.mxu0 %v4068
    %4419 = vmatprep.subr.bf16.mxu0 %v4073
    %4420 = vmatpush1.bf16.msra.mxu0 %v4072
    %4421 = vmatprep.subr.bf16.mxu0 %v4077
    %4422 = vmatpush1.bf16.msra.mxu0 %v4076
    %4423 = vmatprep.subr.bf16.mxu0 %v4081
    %4424 = vmatpush1.bf16.msra.mxu0 %v4080
    %4425 = vmatprep.subr.bf16.mxu0 %v4085
    %4426 = vmatpush1.bf16.msra.mxu0 %v4084
    %4427 = vmatprep.subr.bf16.mxu0 %v4089
    %4428 = vmatpush1.bf16.msra.mxu0 %v4088
    %4429 = vmatprep.subr.bf16.mxu0 %v4093
    %4430 = vmatpush1.bf16.msra.mxu0 %v4092
    %4431 = vmatprep.subr.bf16.mxu0 %v4097
    %4432 = vmatpush1.bf16.msra.mxu0 %v4096
    %4433 = vmatprep.subr.bf16.mxu0 %v4101
    %4434 = vmatpush1.bf16.msra.mxu0 %v4100
    %4435 = vmatprep.subr.bf16.mxu0 %v4105
    %4436 = vmatpush1.bf16.msra.mxu0 %v4104
    %4437 = vmatprep.subr.bf16.mxu0 %v4109
    %4438 = vmatpush1.bf16.msra.mxu0 %v4108
    %4439 = vmatprep.subr.bf16.mxu0 %v4113
    %4440 = vmatpush1.bf16.msra.mxu0 %v4112
    %4441 = vmatprep.mubr.bf16.mxu0 %v3534
    %4442 = vmatmul.mubr.bf16.gmra.mrb[0].mxu0 %v3533
    %v4443 = vpop.f32.mrb[0].mxu0
    %v4444 = vadd.f32 %v4318, %v4443
    %v4445 = vpop.f32.mrb[0].mxu0
    %v4446 = vadd.f32 %v4322, %v4445
    %v4447 = vpop.f32.mrb[0].mxu0
    %v4448 = vpop.f32.mrb[0].mxu0
    %4449 = vdwg.mxu0
    %4450 = vmatprep.subr.bf16.mxu0 %v4117
    %4451 = vmatpush1.bf16.msra.mxu0 %v4116
    %4452 = vmatprep.subr.bf16.mxu0 %v4121
    %4453 = vmatpush1.bf16.msra.mxu0 %v4120
    %4454 = vmatprep.subr.bf16.mxu0 %v4125
    %4455 = vmatpush1.bf16.msra.mxu0 %v4124
    %4456 = vmatprep.subr.bf16.mxu0 %v4129
    %4457 = vmatpush1.bf16.msra.mxu0 %v4128
    %4458 = vmatprep.subr.bf16.mxu0 %v4133
    %4459 = vmatpush1.bf16.msra.mxu0 %v4132
    %4460 = vmatprep.subr.bf16.mxu0 %v4137
    %4461 = vmatpush1.bf16.msra.mxu0 %v4136
    %4462 = vmatprep.subr.bf16.mxu0 %v4141
    %4463 = vmatpush1.bf16.msra.mxu0 %v4140
    %4464 = vmatprep.subr.bf16.mxu0 %v4145
    %4465 = vmatpush1.bf16.msra.mxu0 %v4144
    %4466 = vmatprep.subr.bf16.mxu0 %v4149
    %4467 = vmatpush1.bf16.msra.mxu0 %v4148
    %4468 = vmatprep.subr.bf16.mxu0 %v4153
    %4469 = vmatpush1.bf16.msra.mxu0 %v4152
    %4470 = vmatprep.subr.bf16.mxu0 %v4157
    %4471 = vmatpush1.bf16.msra.mxu0 %v4156
    %4472 = vmatprep.subr.bf16.mxu0 %v4161
    %4473 = vmatpush1.bf16.msra.mxu0 %v4160
    %4474 = vmatprep.subr.bf16.mxu0 %v4165
    %4475 = vmatpush1.bf16.msra.mxu0 %v4164
    %4476 = vmatprep.subr.bf16.mxu0 %v4169
    %4477 = vmatpush1.bf16.msra.mxu0 %v4168
    %4478 = vmatprep.subr.bf16.mxu0 %v4173
    %4479 = vmatpush1.bf16.msra.mxu0 %v4172
    %4480 = vmatprep.subr.bf16.mxu0 %v4177
    %4481 = vmatpush1.bf16.msra.mxu0 %v4176
    %4482 = vmatprep.mubr.bf16.mxu0 %v3536
    %4483 = vmatmul.mubr.bf16.gmra.mrb[0].mxu0 %v3535
    %v4484 = vpop.f32.mrb[0].mxu0
    %v4485 = vadd.f32 %v4444, %v4484
    %v4486 = vpop.f32.mrb[0].mxu0
    %v4487 = vadd.f32 %v4446, %v4486
    %v4488 = vpop.f32.mrb[0].mxu0
    %v4489 = vpop.f32.mrb[0].mxu0
    %4490 = vdwg.mxu0
    %v4491 = vxor.u32 %v4403, 2147483648
    %v4492 = vmul.f32 %v4491, 1.442695
    %v4493 = vpow.pop %v4492
    %v4494 = vadd.f32 %v4493, 1.0
    %v4495 = vrcp.pop %v4494
    %v4496 = vmul.f32 1.0, %v4495
    %v4497 = vxor.u32 %v4405, 2147483648
    %v4498 = vmul.f32 %v4497, 1.442695
    %v4499 = vpow.pop %v4498
    %v4500 = vadd.f32 %v4499, 1.0
    %v4501 = vrcp.pop %v4500
    %v4502 = vmul.f32 1.0, %v4501
    %v4503 = vtanh.pop %v4485
    %v4504 = vxor.u32 %v4487, 2147483648
    %v4505 = vmul.f32 %v4504, 1.442695
    %v4506 = vpow.pop %v4505
    %v4507 = vadd.f32 %v4506, 1.0
    %v4508 = vrcp.pop %v4507
    %v4509 = vmul.f32 1.0, %v4508
    %v4510 = vmul.f32 %v4502, %v231
    %v4511 = vmul.f32 %v4496, %v4503
    %v4512 = vadd.f32 %v4510, %v4511
    %v4513 = vtanh.pop %v4512
    %v4514 = vmul.f32 %v4509, %v4513
    %v4515 = vld [vmem:[#allocation9] sm:$0xff]
    %v4516 = vld [vmem:[#allocation9 + $0x8] sm:$0xff]
    %v4517 = vld [vmem:[#allocation9 + $0x10] sm:$0xff]
    %v4518 = vld [vmem:[#allocation9 + $0x18] sm:$0xff]
    %v4519 = vld [vmem:[#allocation9 + $0x20] sm:$0xff]
    %v4520 = vld [vmem:[#allocation9 + $0x28] sm:$0xff]
    %v4521 = vld [vmem:[#allocation9 + $0x30] sm:$0xff]
    %v4522 = vld [vmem:[#allocation9 + $0x38] sm:$0xff]
    %v4523 = vld [vmem:[#allocation9 + $0x40] sm:$0xff]
    %v4524 = vld [vmem:[#allocation9 + $0x48] sm:$0xff]
    %v4525 = vld [vmem:[#allocation9 + $0x50] sm:$0xff]
    %v4526 = vld [vmem:[#allocation9 + $0x58] sm:$0xff]
    %v4527 = vld [vmem:[%s11] sm:$0x3]
    %v4540 = vunpack.c.l.b16 %v4515
    %v4541 = vunpack.c.h.b16 %v4515
    %v4542 = vunpack.c.l.b16 %v4516
    %v4543 = vunpack.c.h.b16 %v4516
    %v4544 = vunpack.c.l.b16 %v4517
    %v4545 = vunpack.c.h.b16 %v4517
    %v4546 = vunpack.c.l.b16 %v4518
    %v4547 = vunpack.c.h.b16 %v4518
    %v4548 = vunpack.c.l.b16 %v4519
    %v4549 = vunpack.c.h.b16 %v4519
    %v4550 = vunpack.c.l.b16 %v4520
    %v4551 = vunpack.c.h.b16 %v4520
    %v4552 = vunpack.c.l.b16 %v4521
    %v4553 = vunpack.c.h.b16 %v4521
    %v4554 = vunpack.c.l.b16 %v4522
    %v4555 = vunpack.c.h.b16 %v4522
    %v4556 = vunpack.c.l.b16 %v4523
    %v4557 = vunpack.c.h.b16 %v4523
    %v4558 = vunpack.c.l.b16 %v4524
    %v4559 = vunpack.c.h.b16 %v4524
    %v4560 = vunpack.c.l.b16 %v4525
    %v4561 = vunpack.c.h.b16 %v4525
    %v4562 = vunpack.c.l.b16 %v4526
    %v4563 = vunpack.c.h.b16 %v4526
    %v4564 = vpack.c.b16 %v4542, %v4540
    %v4565 = vpack.c.b16 %v4543, %v4541
    %v4566 = vpack.c.b16 %v4546, %v4544
    %v4567 = vpack.c.b16 %v4547, %v4545
    %v4568 = vpack.c.b16 %v4550, %v4548
    %v4569 = vpack.c.b16 %v4551, %v4549
    %v4570 = vpack.c.b16 %v4554, %v4552
    %v4571 = vpack.c.b16 %v4555, %v4553
    %v4572 = vpack.c.b16 %v4558, %v4556
    %v4573 = vpack.c.b16 %v4559, %v4557
    %v4574 = vpack.c.b16 %v4562, %v4560
    %v4575 = vpack.c.b16 %v4563, %v4561
    %v4589 = vlaneseq
    %v4590 = vshrl.u32 %v4589, 7
    %v4591 = vsub.s32 0, %v4590
    %v4592 = vrot.slane %v4527, %v4591
    %v4593 = vlaneseq
    %v4594 = vshrl.u32 %v4593, 7
    %v4595 = vsub.s32 1, %v4594
    %v4596 = vrot.slane %v4527, %v4595
    %4599 = vmatprep.subr.bf16.mxu0 %v4565
    %4600 = vmatpush1.bf16.msra.mxu0 %v4564
    %4601 = vmatprep.subr.bf16.mxu0 %v4567
    %4602 = vmatpush1.bf16.msra.mxu0 %v4566
    %4603 = vmatprep.subr.bf16.mxu0 %v4569
    %4604 = vmatpush1.bf16.msra.mxu0 %v4568
    %4605 = vmatprep.subr.bf16.mxu0 %v4571
    %4606 = vmatpush1.bf16.msra.mxu0 %v4570
    %4607 = vmatprep.subr.bf16.mxu0 %v4573
    %4608 = vmatpush1.bf16.msra.mxu0 %v4572
    %4609 = vmatprep.subr.bf16.mxu0 %v4575
    %4610 = vmatpush1.bf16.msra.mxu0 %v4574
    %4611 = vmatprep.subr.bf16.mxu0 0
    %4612 = vmatpush1.bf16.msra.mxu0 0
    %4613 = vmatprep.subr.bf16.mxu0 0
    %4614 = vmatpush1.bf16.msra.mxu0 0
    %4615 = vmatprep.subr.bf16.mxu0 0
    %4616 = vmatpush1.bf16.msra.mxu0 0
    %4617 = vmatprep.subr.bf16.mxu0 0
    %4618 = vmatpush1.bf16.msra.mxu0 0
    %4619 = vmatprep.subr.bf16.mxu0 0
    %4620 = vmatpush1.bf16.msra.mxu0 0
    %4621 = vmatprep.subr.bf16.mxu0 0
    %4622 = vmatpush1.bf16.msra.mxu0 0
    %4623 = vmatprep.subr.bf16.mxu0 0
    %4624 = vmatpush1.bf16.msra.mxu0 0
    %4625 = vmatprep.subr.bf16.mxu0 0
    %4626 = vmatpush1.bf16.msra.mxu0 0
    %4627 = vmatprep.subr.bf16.mxu0 0
    %4628 = vmatpush1.bf16.msra.mxu0 0
    %4629 = vmatprep.subr.bf16.mxu0 0
    %4630 = vmatpush1.bf16.msra.mxu0 0
    %4631 = vmatprep.mubr.bf16.mxu0 0
    %4632 = vmatmul.mubr.bf16.gmra.mrb[0].mxu0 %v372
    %v4633 = vpop.f32.mrb[0].mxu0
    %v4634 = vadd.f32 %v4592, %v4633
    %v4635 = vpop.f32.mrb[0].mxu0
    %v4636 = vadd.f32 %v4596, %v4635
    %v4637 = vpop.f32.mrb[0].mxu0
    %v4638 = vpop.f32.mrb[0].mxu0
    %4639 = vdwg.mxu0
    %vm4640 = vcmp.gt.f32.partialorder %v4634, 0.0
    %vm4641 = vcmp.gt.f32.partialorder %v4636, 0.0
    %v4642 = vmul.f32 %v4634, 0.1
    %v4643 = vmul.f32 %v4636, 0.1
    %v4644 = vsel %vm4640, %v4634, %v4642
    %v4645 = vsel %vm4641, %v4636, %v4643
    %v4646 = vpack.c.bf16 %v4644, %v4644
    %v4647 = vpack.c.bf16 %v4645, %v4645
    %v4648 = vld [vmem:[#allocation10] sm:$0xff]
    %v4649 = vld [vmem:[#allocation10 + $0x8] sm:$0xff]
    %v4650 = vld [vmem:[#allocation10 + $0x10] sm:$0xff]
    %v4651 = vld [vmem:[#allocation10 + $0x18] sm:$0xff]
    %v4652 = vld [vmem:[#allocation10 + $0x20] sm:$0xff]
    %v4653 = vld [vmem:[#allocation10 + $0x28] sm:$0xff]
    %v4654 = vld [vmem:[#allocation10 + $0x30] sm:$0xff]
    %v4655 = vld [vmem:[#allocation10 + $0x38] sm:$0xff]
    %v4656 = vld [vmem:[#allocation10 + $0x40] sm:$0xff]
    %v4657 = vld [vmem:[#allocation10 + $0x48] sm:$0xff]
    %v4658 = vld [vmem:[#allocation10 + $0x50] sm:$0xff]
    %v4659 = vld [vmem:[#allocation10 + $0x58] sm:$0xff]
    %v4660 = vld [vmem:[#allocation10 + $0x60] sm:$0xff]
    %v4661 = vld [vmem:[#allocation10 + $0x68] sm:$0xff]
    %v4662 = vld [vmem:[#allocation10 + $0x70] sm:$0xff]
    %v4663 = vld [vmem:[#allocation10 + $0x78] sm:$0xff]
    %v4664 = vld [vmem:[#allocation10 + $0x80] sm:$0xff]
    %v4665 = vld [vmem:[#allocation10 + $0x88] sm:$0xff]
    %v4666 = vld [vmem:[#allocation10 + $0x90] sm:$0xff]
    %v4667 = vld [vmem:[#allocation10 + $0x98] sm:$0xff]
    %v4668 = vld [vmem:[#allocation10 + $0xa0] sm:$0xff]
    %v4669 = vld [vmem:[#allocation10 + $0xa8] sm:$0xff]
    %v4670 = vld [vmem:[#allocation10 + $0xb0] sm:$0xff]
    %v4671 = vld [vmem:[#allocation10 + $0xb8] sm:$0xff]
    %v4672 = vld [vmem:[#allocation10 + $0xc0] sm:$0xff]
    %v4673 = vld [vmem:[#allocation10 + $0xc8] sm:$0xff]
    %v4674 = vld [vmem:[#allocation10 + $0xd0] sm:$0xff]
    %v4675 = vld [vmem:[#allocation10 + $0xd8] sm:$0xff]
    %v4676 = vld [vmem:[#allocation10 + $0xe0] sm:$0xff]
    %v4677 = vld [vmem:[#allocation10 + $0xe8] sm:$0xff]
    %v4678 = vld [vmem:[#allocation10 + $0xf0] sm:$0xff]
    %v4679 = vld [vmem:[#allocation10 + $0xf8] sm:$0xff]
    %v4680 = vld [vmem:[%s13] sm:$0x3]
    %v4713 = vunpack.c.l.b16 %v4648
    %v4714 = vunpack.c.h.b16 %v4648
    %v4715 = vunpack.c.l.b16 %v4649
    %v4716 = vunpack.c.h.b16 %v4649
    %v4717 = vunpack.c.l.b16 %v4650
    %v4718 = vunpack.c.h.b16 %v4650
    %v4719 = vunpack.c.l.b16 %v4651
    %v4720 = vunpack.c.h.b16 %v4651
    %v4721 = vunpack.c.l.b16 %v4652
    %v4722 = vunpack.c.h.b16 %v4652
    %v4723 = vunpack.c.l.b16 %v4653
    %v4724 = vunpack.c.h.b16 %v4653
    %v4725 = vunpack.c.l.b16 %v4654
    %v4726 = vunpack.c.h.b16 %v4654
    %v4727 = vunpack.c.l.b16 %v4655
    %v4728 = vunpack.c.h.b16 %v4655
    %v4729 = vunpack.c.l.b16 %v4656
    %v4730 = vunpack.c.h.b16 %v4656
    %v4731 = vunpack.c.l.b16 %v4657
    %v4732 = vunpack.c.h.b16 %v4657
    %v4733 = vunpack.c.l.b16 %v4658
    %v4734 = vunpack.c.h.b16 %v4658
    %v4735 = vunpack.c.l.b16 %v4659
    %v4736 = vunpack.c.h.b16 %v4659
    %v4737 = vunpack.c.l.b16 %v4660
    %v4738 = vunpack.c.h.b16 %v4660
    %v4739 = vunpack.c.l.b16 %v4661
    %v4740 = vunpack.c.h.b16 %v4661
    %v4741 = vunpack.c.l.b16 %v4662
    %v4742 = vunpack.c.h.b16 %v4662
    %v4743 = vunpack.c.l.b16 %v4663
    %v4744 = vunpack.c.h.b16 %v4663
    %v4745 = vunpack.c.l.b16 %v4664
    %v4746 = vunpack.c.h.b16 %v4664
    %v4747 = vunpack.c.l.b16 %v4665
    %v4748 = vunpack.c.h.b16 %v4665
    %v4749 = vunpack.c.l.b16 %v4666
    %v4750 = vunpack.c.h.b16 %v4666
    %v4751 = vunpack.c.l.b16 %v4667
    %v4752 = vunpack.c.h.b16 %v4667
    %v4753 = vunpack.c.l.b16 %v4668
    %v4754 = vunpack.c.h.b16 %v4668
    %v4755 = vunpack.c.l.b16 %v4669
    %v4756 = vunpack.c.h.b16 %v4669
    %v4757 = vunpack.c.l.b16 %v4670
    %v4758 = vunpack.c.h.b16 %v4670
    %v4759 = vunpack.c.l.b16 %v4671
    %v4760 = vunpack.c.h.b16 %v4671
    %v4761 = vunpack.c.l.b16 %v4672
    %v4762 = vunpack.c.h.b16 %v4672
    %v4763 = vunpack.c.l.b16 %v4673
    %v4764 = vunpack.c.h.b16 %v4673
    %v4765 = vunpack.c.l.b16 %v4674
    %v4766 = vunpack.c.h.b16 %v4674
    %v4767 = vunpack.c.l.b16 %v4675
    %v4768 = vunpack.c.h.b16 %v4675
    %v4769 = vunpack.c.l.b16 %v4676
    %v4770 = vunpack.c.h.b16 %v4676
    %v4771 = vunpack.c.l.b16 %v4677
    %v4772 = vunpack.c.h.b16 %v4677
    %v4773 = vunpack.c.l.b16 %v4678
    %v4774 = vunpack.c.h.b16 %v4678
    %v4775 = vunpack.c.l.b16 %v4679
    %v4776 = vunpack.c.h.b16 %v4679
    %v4777 = vpack.c.b16 %v4715, %v4713
    %v4778 = vpack.c.b16 %v4716, %v4714
    %v4779 = vpack.c.b16 %v4719, %v4717
    %v4780 = vpack.c.b16 %v4720, %v4718
    %v4781 = vpack.c.b16 %v4723, %v4721
    %v4782 = vpack.c.b16 %v4724, %v4722
    %v4783 = vpack.c.b16 %v4727, %v4725
    %v4784 = vpack.c.b16 %v4728, %v4726
    %v4785 = vpack.c.b16 %v4731, %v4729
    %v4786 = vpack.c.b16 %v4732, %v4730
    %v4787 = vpack.c.b16 %v4735, %v4733
    %v4788 = vpack.c.b16 %v4736, %v4734
    %v4789 = vpack.c.b16 %v4739, %v4737
    %v4790 = vpack.c.b16 %v4740, %v4738
    %v4791 = vpack.c.b16 %v4743, %v4741
    %v4792 = vpack.c.b16 %v4744, %v4742
    %v4793 = vpack.c.b16 %v4747, %v4745
    %v4794 = vpack.c.b16 %v4748, %v4746
    %v4795 = vpack.c.b16 %v4751, %v4749
    %v4796 = vpack.c.b16 %v4752, %v4750
    %v4797 = vpack.c.b16 %v4755, %v4753
    %v4798 = vpack.c.b16 %v4756, %v4754
    %v4799 = vpack.c.b16 %v4759, %v4757
    %v4800 = vpack.c.b16 %v4760, %v4758
    %v4801 = vpack.c.b16 %v4763, %v4761
    %v4802 = vpack.c.b16 %v4764, %v4762
    %v4803 = vpack.c.b16 %v4767, %v4765
    %v4804 = vpack.c.b16 %v4768, %v4766
    %v4805 = vpack.c.b16 %v4771, %v4769
    %v4806 = vpack.c.b16 %v4772, %v4770
    %v4807 = vpack.c.b16 %v4775, %v4773
    %v4808 = vpack.c.b16 %v4776, %v4774
    %v4842 = vlaneseq
    %v4843 = vshrl.u32 %v4842, 7
    %v4844 = vsub.s32 0, %v4843
    %v4845 = vrot.slane %v4680, %v4844
    %v4846 = vlaneseq
    %v4847 = vshrl.u32 %v4846, 7
    %v4848 = vsub.s32 1, %v4847
    %v4849 = vrot.slane %v4680, %v4848
    %4852 = vmatprep.subr.bf16.mxu0 %v4778
    %4853 = vmatpush1.bf16.msra.mxu0 %v4777
    %4854 = vmatprep.subr.bf16.mxu0 %v4780
    %4855 = vmatpush1.bf16.msra.mxu0 %v4779
    %4856 = vmatprep.subr.bf16.mxu0 %v4782
    %4857 = vmatpush1.bf16.msra.mxu0 %v4781
    %4858 = vmatprep.subr.bf16.mxu0 %v4784
    %4859 = vmatpush1.bf16.msra.mxu0 %v4783
    %4860 = vmatprep.subr.bf16.mxu0 %v4786
    %4861 = vmatpush1.bf16.msra.mxu0 %v4785
    %4862 = vmatprep.subr.bf16.mxu0 %v4788
    %4863 = vmatpush1.bf16.msra.mxu0 %v4787
    %4864 = vmatprep.subr.bf16.mxu0 %v4790
    %4865 = vmatpush1.bf16.msra.mxu0 %v4789
    %4866 = vmatprep.subr.bf16.mxu0 %v4792
    %4867 = vmatpush1.bf16.msra.mxu0 %v4791
    %4868 = vmatprep.subr.bf16.mxu0 %v4794
    %4869 = vmatpush1.bf16.msra.mxu0 %v4793
    %4870 = vmatprep.subr.bf16.mxu0 %v4796
    %4871 = vmatpush1.bf16.msra.mxu0 %v4795
    %4872 = vmatprep.subr.bf16.mxu0 %v4798
    %4873 = vmatpush1.bf16.msra.mxu0 %v4797
    %4874 = vmatprep.subr.bf16.mxu0 %v4800
    %4875 = vmatpush1.bf16.msra.mxu0 %v4799
    %4876 = vmatprep.subr.bf16.mxu0 %v4802
    %4877 = vmatpush1.bf16.msra.mxu0 %v4801
    %4878 = vmatprep.subr.bf16.mxu0 %v4804
    %4879 = vmatpush1.bf16.msra.mxu0 %v4803
    %4880 = vmatprep.subr.bf16.mxu0 %v4806
    %4881 = vmatpush1.bf16.msra.mxu0 %v4805
    %4882 = vmatprep.subr.bf16.mxu0 %v4808
    %4883 = vmatpush1.bf16.msra.mxu0 %v4807
    %4884 = vmatprep.mubr.bf16.mxu0 %v4647
    %4885 = vmatmul.mubr.bf16.gmra.mrb[0].mxu0 %v4646
    %v4886 = vpop.f32.mrb[0].mxu0
    %v4887 = vadd.f32 %v4845, %v4886
    %v4888 = vpop.f32.mrb[0].mxu0
    %v4889 = vadd.f32 %v4849, %v4888
    %v4890 = vpop.f32.mrb[0].mxu0
    %v4891 = vpop.f32.mrb[0].mxu0
    %4892 = vdwg.mxu0
    %vm4893 = vcmp.gt.f32.partialorder %v4887, 0.0
    %vm4894 = vcmp.gt.f32.partialorder %v4889, 0.0
    %v4895 = vmul.f32 %v4887, 0.1
    %v4896 = vmul.f32 %v4889, 0.1
    %v4897 = vsel %vm4893, %v4887, %v4895
    %v4898 = vsel %vm4894, %v4889, %v4896
    %v4899 = vpack.c.bf16 %v4897, %v4897
    %v4900 = vpack.c.bf16 %v4898, %v4898
    %v4901 = vld [vmem:[#allocation12] sm:$0xf]
    %v4902 = vld [vmem:[#allocation12 + $0x4] sm:$0xf]
    %v4903 = vld [vmem:[#allocation12 + $0x8] sm:$0xf]
    %v4904 = vld [vmem:[#allocation12 + $0xc] sm:$0xf]
    %v4905 = vld [vmem:[#allocation12 + $0x10] sm:$0xf]
    %v4906 = vld [vmem:[#allocation12 + $0x14] sm:$0xf]
    %v4907 = vld [vmem:[#allocation12 + $0x18] sm:$0xf]
    %v4908 = vld [vmem:[#allocation12 + $0x1c] sm:$0xf]
    %v4909 = vld [vmem:[#allocation12 + $0x20] sm:$0xf]
    %v4910 = vld [vmem:[#allocation12 + $0x24] sm:$0xf]
    %v4911 = vld [vmem:[#allocation12 + $0x28] sm:$0xf]
    %v4912 = vld [vmem:[#allocation12 + $0x2c] sm:$0xf]
    %v4913 = vld [vmem:[#allocation12 + $0x30] sm:$0xf]
    %v4914 = vld [vmem:[#allocation12 + $0x34] sm:$0xf]
    %v4915 = vld [vmem:[#allocation12 + $0x38] sm:$0xf]
    %v4916 = vld [vmem:[#allocation12 + $0x3c] sm:$0xf]
    %v4917 = vld [vmem:[#allocation12 + $0x40] sm:$0xf]
    %v4918 = vld [vmem:[#allocation12 + $0x44] sm:$0xf]
    %v4919 = vld [vmem:[#allocation12 + $0x48] sm:$0xf]
    %v4920 = vld [vmem:[#allocation12 + $0x4c] sm:$0xf]
    %v4921 = vld [vmem:[#allocation12 + $0x50] sm:$0xf]
    %v4922 = vld [vmem:[#allocation12 + $0x54] sm:$0xf]
    %v4923 = vld [vmem:[#allocation12 + $0x58] sm:$0xf]
    %v4924 = vld [vmem:[#allocation12 + $0x5c] sm:$0xf]
    %v4925 = vld [vmem:[#allocation12 + $0x60] sm:$0xf]
    %v4926 = vld [vmem:[#allocation12 + $0x64] sm:$0xf]
    %v4927 = vld [vmem:[#allocation12 + $0x68] sm:$0xf]
    %v4928 = vld [vmem:[#allocation12 + $0x6c] sm:$0xf]
    %v4929 = vld [vmem:[#allocation12 + $0x70] sm:$0xf]
    %v4930 = vld [vmem:[#allocation12 + $0x74] sm:$0xf]
    %v4931 = vld [vmem:[#allocation12 + $0x78] sm:$0xf]
    %v4932 = vld [vmem:[#allocation12 + $0x7c] sm:$0xf]
    %v4933 = vld [vmem:[%s15] sm:$0x1]
    %v4966 = vunpack.c.l.b16 %v4901
    %v4967 = vunpack.c.l.b16 %v4902
    %v4968 = vunpack.c.l.b16 %v4903
    %v4969 = vunpack.c.l.b16 %v4904
    %v4970 = vunpack.c.l.b16 %v4905
    %v4971 = vunpack.c.l.b16 %v4906
    %v4972 = vunpack.c.l.b16 %v4907
    %v4973 = vunpack.c.l.b16 %v4908
    %v4974 = vunpack.c.l.b16 %v4909
    %v4975 = vunpack.c.l.b16 %v4910
    %v4976 = vunpack.c.l.b16 %v4911
    %v4977 = vunpack.c.l.b16 %v4912
    %v4978 = vunpack.c.l.b16 %v4913
    %v4979 = vunpack.c.l.b16 %v4914
    %v4980 = vunpack.c.l.b16 %v4915
    %v4981 = vunpack.c.l.b16 %v4916
    %v4982 = vunpack.c.l.b16 %v4917
    %v4983 = vunpack.c.l.b16 %v4918
    %v4984 = vunpack.c.l.b16 %v4919
    %v4985 = vunpack.c.l.b16 %v4920
    %v4986 = vunpack.c.l.b16 %v4921
    %v4987 = vunpack.c.l.b16 %v4922
    %v4988 = vunpack.c.l.b16 %v4923
    %v4989 = vunpack.c.l.b16 %v4924
    %v4990 = vunpack.c.l.b16 %v4925
    %v4991 = vunpack.c.l.b16 %v4926
    %v4992 = vunpack.c.l.b16 %v4927
    %v4993 = vunpack.c.l.b16 %v4928
    %v4994 = vunpack.c.l.b16 %v4929
    %v4995 = vunpack.c.l.b16 %v4930
    %v4996 = vunpack.c.l.b16 %v4931
    %v4997 = vunpack.c.l.b16 %v4932
    %v4998 = vpack.c.b16 %v4967, %v4966
    %v4999 = vpack.c.b16 %v4969, %v4968
    %v5000 = vpack.c.b16 %v4971, %v4970
    %v5001 = vpack.c.b16 %v4973, %v4972
    %v5002 = vpack.c.b16 %v4975, %v4974
    %v5003 = vpack.c.b16 %v4977, %v4976
    %v5004 = vpack.c.b16 %v4979, %v4978
    %v5005 = vpack.c.b16 %v4981, %v4980
    %v5006 = vpack.c.b16 %v4983, %v4982
    %v5007 = vpack.c.b16 %v4985, %v4984
    %v5008 = vpack.c.b16 %v4987, %v4986
    %v5009 = vpack.c.b16 %v4989, %v4988
    %v5010 = vpack.c.b16 %v4991, %v4990
    %v5011 = vpack.c.b16 %v4993, %v4992
    %v5012 = vpack.c.b16 %v4995, %v4994
    %v5013 = vpack.c.b16 %v4997, %v4996
    %5030 = vmatprep.subr.bf16.mxu0 0
    %5031 = vmatpush1.bf16.msra.mxu0 %v4998
    %5032 = vmatprep.subr.bf16.mxu0 0
    %5033 = vmatpush1.bf16.msra.mxu0 %v4999
    %5034 = vmatprep.subr.bf16.mxu0 0
    %5035 = vmatpush1.bf16.msra.mxu0 %v5000
    %5036 = vmatprep.subr.bf16.mxu0 0
    %5037 = vmatpush1.bf16.msra.mxu0 %v5001
    %5038 = vmatprep.subr.bf16.mxu0 0
    %5039 = vmatpush1.bf16.msra.mxu0 %v5002
    %5040 = vmatprep.subr.bf16.mxu0 0
    %5041 = vmatpush1.bf16.msra.mxu0 %v5003
    %5042 = vmatprep.subr.bf16.mxu0 0
    %5043 = vmatpush1.bf16.msra.mxu0 %v5004
    %5044 = vmatprep.subr.bf16.mxu0 0
    %5045 = vmatpush1.bf16.msra.mxu0 %v5005
    %5046 = vmatprep.subr.bf16.mxu0 0
    %5047 = vmatpush1.bf16.msra.mxu0 %v5006
    %5048 = vmatprep.subr.bf16.mxu0 0
    %5049 = vmatpush1.bf16.msra.mxu0 %v5007
    %5050 = vmatprep.subr.bf16.mxu0 0
    %5051 = vmatpush1.bf16.msra.mxu0 %v5008
    %5052 = vmatprep.subr.bf16.mxu0 0
    %5053 = vmatpush1.bf16.msra.mxu0 %v5009
    %5054 = vmatprep.subr.bf16.mxu0 0
    %5055 = vmatpush1.bf16.msra.mxu0 %v5010
    %5056 = vmatprep.subr.bf16.mxu0 0
    %5057 = vmatpush1.bf16.msra.mxu0 %v5011
    %5058 = vmatprep.subr.bf16.mxu0 0
    %5059 = vmatpush1.bf16.msra.mxu0 %v5012
    %5060 = vmatprep.subr.bf16.mxu0 0
    %5061 = vmatpush1.bf16.msra.mxu0 %v5013
    %5062 = vmatprep.mubr.bf16.mxu0 %v4900
    %5063 = vmatmul.mubr.bf16.gmra.mrb[0].mxu0 %v4899
    %v5064 = vpop.f32.mrb[0].mxu0
    %v5065 = vadd.f32 %v4933, %v5064
    %v5066 = vpop.f32.mrb[0].mxu0
    %v5067 = vpop.f32.mrb[0].mxu0
    %v5068 = vpop.f32.mrb[0].mxu0
    %5069 = vdwg.mxu0
    %vm5070 = vcmp.gt.f32.partialorder %v5065, 0.0
    %v5071 = vmul.f32 %v5065, 0.1
    %v5072 = vsel %vm5070, %v5065, %v5071
    %v5073 = vpack.c.bf16 %v5072, %v5072
    %v5074 = vpack.c.bf16 %v4514, %v4514
    %v5075 = vpack.c.bf16 %v228, %v228
    %v5076 = vld [vmem:[#allocation15] sm:$0xff]
    %v5077 = vld [vmem:[#allocation15 + $0x8] sm:$0xff]
    %v5078 = vld [vmem:[#allocation15 + $0x10] sm:$0xff]
    %v5079 = vld [vmem:[#allocation15 + $0x18] sm:$0xff]
    %v5080 = vld [vmem:[#allocation15 + $0x20] sm:$0xff]
    %v5081 = vld [vmem:[#allocation15 + $0x28] sm:$0xff]
    %v5082 = vld [vmem:[#allocation15 + $0x30] sm:$0xff]
    %v5083 = vld [vmem:[#allocation15 + $0x38] sm:$0xff]
    %v5084 = vld [vmem:[#allocation15 + $0x40] sm:$0xff]
    %v5085 = vld [vmem:[#allocation15 + $0x48] sm:$0xff]
    %v5086 = vld [vmem:[#allocation15 + $0x50] sm:$0xff]
    %v5087 = vld [vmem:[#allocation15 + $0x58] sm:$0xff]
    %v5088 = vld [vmem:[#allocation15 + $0x60] sm:$0xff]
    %v5089 = vld [vmem:[#allocation15 + $0x68] sm:$0xff]
    %v5090 = vld [vmem:[#allocation15 + $0x70] sm:$0xff]
    %v5091 = vld [vmem:[#allocation15 + $0x78] sm:$0xff]
    %v5092 = vld [vmem:[#allocation15 + $0x80] sm:$0xff]
    %v5093 = vld [vmem:[#allocation15 + $0x88] sm:$0xff]
    %v5094 = vld [vmem:[#allocation15 + $0x90] sm:$0xff]
    %v5095 = vld [vmem:[#allocation15 + $0x98] sm:$0xff]
    %v5096 = vld [vmem:[#allocation15 + $0xa0] sm:$0xff]
    %v5097 = vld [vmem:[#allocation15 + $0xa8] sm:$0xff]
    %v5098 = vld [vmem:[#allocation15 + $0xb0] sm:$0xff]
    %v5099 = vld [vmem:[#allocation15 + $0xb8] sm:$0xff]
    %v5100 = vld [vmem:[#allocation15 + $0xc0] sm:$0xff]
    %v5101 = vld [vmem:[#allocation15 + $0xc8] sm:$0xff]
    %v5102 = vld [vmem:[#allocation15 + $0xd0] sm:$0xff]
    %v5103 = vld [vmem:[#allocation15 + $0xd8] sm:$0xff]
    %v5104 = vld [vmem:[#allocation15 + $0xe0] sm:$0xff]
    %v5105 = vld [vmem:[#allocation15 + $0xe8] sm:$0xff]
    %v5106 = vld [vmem:[#allocation15 + $0xf0] sm:$0xff]
    %v5107 = vld [vmem:[#allocation15 + $0xf8] sm:$0xff]
    %v5108 = vld [vmem:[#allocation15 + $0x100] sm:$0xff]
    %v5109 = vld [vmem:[#allocation15 + $0x108] sm:$0xff]
    %v5110 = vld [vmem:[#allocation15 + $0x110] sm:$0xff]
    %v5111 = vld [vmem:[#allocation15 + $0x118] sm:$0xff]
    %v5112 = vld [vmem:[#allocation15 + $0x120] sm:$0xff]
    %v5113 = vld [vmem:[#allocation15 + $0x128] sm:$0xff]
    %v5114 = vld [vmem:[#allocation15 + $0x130] sm:$0xff]
    %v5115 = vld [vmem:[#allocation15 + $0x138] sm:$0xff]
    %v5116 = vld [vmem:[#allocation15 + $0x140] sm:$0xff]
    %v5117 = vld [vmem:[#allocation15 + $0x148] sm:$0xff]
    %v5118 = vld [vmem:[#allocation15 + $0x150] sm:$0xff]
    %v5119 = vld [vmem:[#allocation15 + $0x158] sm:$0xff]
    %v5120 = vld [vmem:[#allocation15 + $0x160] sm:$0xff]
    %v5121 = vld [vmem:[#allocation15 + $0x168] sm:$0xff]
    %v5122 = vld [vmem:[#allocation15 + $0x170] sm:$0xff]
    %v5123 = vld [vmem:[#allocation15 + $0x178] sm:$0xff]
    %v5124 = vld [vmem:[#allocation15 + $0x180] sm:$0xff]
    %v5125 = vld [vmem:[#allocation15 + $0x188] sm:$0xff]
    %v5126 = vld [vmem:[#allocation15 + $0x190] sm:$0xff]
    %v5127 = vld [vmem:[#allocation15 + $0x198] sm:$0xff]
    %v5128 = vld [vmem:[#allocation15 + $0x1a0] sm:$0xff]
    %v5129 = vld [vmem:[#allocation15 + $0x1a8] sm:$0xff]
    %v5130 = vld [vmem:[#allocation15 + $0x1b0] sm:$0xff]
    %v5131 = vld [vmem:[#allocation15 + $0x1b8] sm:$0xff]
    %v5132 = vld [vmem:[#allocation15 + $0x1c0] sm:$0xff]
    %v5133 = vld [vmem:[#allocation15 + $0x1c8] sm:$0xff]
    %v5134 = vld [vmem:[#allocation15 + $0x1d0] sm:$0xff]
    %v5135 = vld [vmem:[#allocation15 + $0x1d8] sm:$0xff]
    %v5136 = vld [vmem:[#allocation15 + $0x1e0] sm:$0xff]
    %v5137 = vld [vmem:[#allocation15 + $0x1e8] sm:$0xff]
    %v5138 = vld [vmem:[#allocation15 + $0x1f0] sm:$0xff]
    %v5139 = vld [vmem:[#allocation15 + $0x1f8] sm:$0xff]
    %v5140 = vld [vmem:[#allocation15 + $0x200] sm:$0xff]
    %v5141 = vld [vmem:[#allocation15 + $0x208] sm:$0xff]
    %v5142 = vld [vmem:[#allocation15 + $0x210] sm:$0xff]
    %v5143 = vld [vmem:[#allocation15 + $0x218] sm:$0xff]
    %v5144 = vld [vmem:[#allocation15 + $0x220] sm:$0xff]
    %v5145 = vld [vmem:[#allocation15 + $0x228] sm:$0xff]
    %v5146 = vld [vmem:[#allocation15 + $0x230] sm:$0xff]
    %v5147 = vld [vmem:[#allocation15 + $0x238] sm:$0xff]
    %v5148 = vld [vmem:[#allocation15 + $0x240] sm:$0xff]
    %v5149 = vld [vmem:[#allocation15 + $0x248] sm:$0xff]
    %v5150 = vld [vmem:[#allocation15 + $0x250] sm:$0xff]
    %v5151 = vld [vmem:[#allocation15 + $0x258] sm:$0xff]
    %v5152 = vld [vmem:[#allocation15 + $0x260] sm:$0xff]
    %v5153 = vld [vmem:[#allocation15 + $0x268] sm:$0xff]
    %v5154 = vld [vmem:[#allocation15 + $0x270] sm:$0xff]
    %v5155 = vld [vmem:[#allocation15 + $0x278] sm:$0xff]
    %v5156 = vld [vmem:[#allocation15 + $0x280] sm:$0xff]
    %v5157 = vld [vmem:[#allocation15 + $0x288] sm:$0xff]
    %v5158 = vld [vmem:[#allocation15 + $0x290] sm:$0xff]
    %v5159 = vld [vmem:[#allocation15 + $0x298] sm:$0xff]
    %v5160 = vld [vmem:[#allocation15 + $0x2a0] sm:$0xff]
    %v5161 = vld [vmem:[#allocation15 + $0x2a8] sm:$0xff]
    %v5162 = vld [vmem:[#allocation15 + $0x2b0] sm:$0xff]
    %v5163 = vld [vmem:[#allocation15 + $0x2b8] sm:$0xff]
    %v5164 = vld [vmem:[#allocation15 + $0x2c0] sm:$0xff]
    %v5165 = vld [vmem:[#allocation15 + $0x2c8] sm:$0xff]
    %v5166 = vld [vmem:[#allocation15 + $0x2d0] sm:$0xff]
    %v5167 = vld [vmem:[#allocation15 + $0x2d8] sm:$0xff]
    %v5168 = vld [vmem:[#allocation15 + $0x2e0] sm:$0xff]
    %v5169 = vld [vmem:[#allocation15 + $0x2e8] sm:$0xff]
    %v5170 = vld [vmem:[#allocation15 + $0x2f0] sm:$0xff]
    %v5171 = vld [vmem:[#allocation15 + $0x2f8] sm:$0xff]
    %v5172 = vld [vmem:[%s19] sm:$0xf]
    %v5269 = vunpack.c.l.b16 %v5076
    %v5270 = vunpack.c.h.b16 %v5076
    %v5271 = vunpack.c.l.b16 %v5077
    %v5272 = vunpack.c.h.b16 %v5077
    %v5273 = vunpack.c.l.b16 %v5078
    %v5274 = vunpack.c.h.b16 %v5078
    %v5275 = vunpack.c.l.b16 %v5079
    %v5276 = vunpack.c.h.b16 %v5079
    %v5277 = vunpack.c.l.b16 %v5080
    %v5278 = vunpack.c.h.b16 %v5080
    %v5279 = vunpack.c.l.b16 %v5081
    %v5280 = vunpack.c.h.b16 %v5081
    %v5281 = vunpack.c.l.b16 %v5082
    %v5282 = vunpack.c.h.b16 %v5082
    %v5283 = vunpack.c.l.b16 %v5083
    %v5284 = vunpack.c.h.b16 %v5083
    %v5285 = vunpack.c.l.b16 %v5084
    %v5286 = vunpack.c.h.b16 %v5084
    %v5287 = vunpack.c.l.b16 %v5085
    %v5288 = vunpack.c.h.b16 %v5085
    %v5289 = vunpack.c.l.b16 %v5086
    %v5290 = vunpack.c.h.b16 %v5086
    %v5291 = vunpack.c.l.b16 %v5087
    %v5292 = vunpack.c.h.b16 %v5087
    %v5293 = vunpack.c.l.b16 %v5088
    %v5294 = vunpack.c.h.b16 %v5088
    %v5295 = vunpack.c.l.b16 %v5089
    %v5296 = vunpack.c.h.b16 %v5089
    %v5297 = vunpack.c.l.b16 %v5090
    %v5298 = vunpack.c.h.b16 %v5090
    %v5299 = vunpack.c.l.b16 %v5091
    %v5300 = vunpack.c.h.b16 %v5091
    %v5301 = vunpack.c.l.b16 %v5092
    %v5302 = vunpack.c.h.b16 %v5092
    %v5303 = vunpack.c.l.b16 %v5093
    %v5304 = vunpack.c.h.b16 %v5093
    %v5305 = vunpack.c.l.b16 %v5094
    %v5306 = vunpack.c.h.b16 %v5094
    %v5307 = vunpack.c.l.b16 %v5095
    %v5308 = vunpack.c.h.b16 %v5095
    %v5309 = vunpack.c.l.b16 %v5096
    %v5310 = vunpack.c.h.b16 %v5096
    %v5311 = vunpack.c.l.b16 %v5097
    %v5312 = vunpack.c.h.b16 %v5097
    %v5313 = vunpack.c.l.b16 %v5098
    %v5314 = vunpack.c.h.b16 %v5098
    %v5315 = vunpack.c.l.b16 %v5099
    %v5316 = vunpack.c.h.b16 %v5099
    %v5317 = vunpack.c.l.b16 %v5100
    %v5318 = vunpack.c.h.b16 %v5100
    %v5319 = vunpack.c.l.b16 %v5101
    %v5320 = vunpack.c.h.b16 %v5101
    %v5321 = vunpack.c.l.b16 %v5102
    %v5322 = vunpack.c.h.b16 %v5102
    %v5323 = vunpack.c.l.b16 %v5103
    %v5324 = vunpack.c.h.b16 %v5103
    %v5325 = vunpack.c.l.b16 %v5104
    %v5326 = vunpack.c.h.b16 %v5104
    %v5327 = vunpack.c.l.b16 %v5105
    %v5328 = vunpack.c.h.b16 %v5105
    %v5329 = vunpack.c.l.b16 %v5106
    %v5330 = vunpack.c.h.b16 %v5106
    %v5331 = vunpack.c.l.b16 %v5107
    %v5332 = vunpack.c.h.b16 %v5107
    %v5333 = vunpack.c.l.b16 %v5108
    %v5334 = vunpack.c.h.b16 %v5108
    %v5335 = vunpack.c.l.b16 %v5109
    %v5336 = vunpack.c.h.b16 %v5109
    %v5337 = vunpack.c.l.b16 %v5110
    %v5338 = vunpack.c.h.b16 %v5110
    %v5339 = vunpack.c.l.b16 %v5111
    %v5340 = vunpack.c.h.b16 %v5111
    %v5341 = vunpack.c.l.b16 %v5112
    %v5342 = vunpack.c.h.b16 %v5112
    %v5343 = vunpack.c.l.b16 %v5113
    %v5344 = vunpack.c.h.b16 %v5113
    %v5345 = vunpack.c.l.b16 %v5114
    %v5346 = vunpack.c.h.b16 %v5114
    %v5347 = vunpack.c.l.b16 %v5115
    %v5348 = vunpack.c.h.b16 %v5115
    %v5349 = vunpack.c.l.b16 %v5116
    %v5350 = vunpack.c.h.b16 %v5116
    %v5351 = vunpack.c.l.b16 %v5117
    %v5352 = vunpack.c.h.b16 %v5117
    %v5353 = vunpack.c.l.b16 %v5118
    %v5354 = vunpack.c.h.b16 %v5118
    %v5355 = vunpack.c.l.b16 %v5119
    %v5356 = vunpack.c.h.b16 %v5119
    %v5357 = vunpack.c.l.b16 %v5120
    %v5358 = vunpack.c.h.b16 %v5120
    %v5359 = vunpack.c.l.b16 %v5121
    %v5360 = vunpack.c.h.b16 %v5121
    %v5361 = vunpack.c.l.b16 %v5122
    %v5362 = vunpack.c.h.b16 %v5122
    %v5363 = vunpack.c.l.b16 %v5123
    %v5364 = vunpack.c.h.b16 %v5123
    %v5365 = vunpack.c.l.b16 %v5124
    %v5366 = vunpack.c.h.b16 %v5124
    %v5367 = vunpack.c.l.b16 %v5125
    %v5368 = vunpack.c.h.b16 %v5125
    %v5369 = vunpack.c.l.b16 %v5126
    %v5370 = vunpack.c.h.b16 %v5126
    %v5371 = vunpack.c.l.b16 %v5127
    %v5372 = vunpack.c.h.b16 %v5127
    %v5373 = vunpack.c.l.b16 %v5128
    %v5374 = vunpack.c.h.b16 %v5128
    %v5375 = vunpack.c.l.b16 %v5129
    %v5376 = vunpack.c.h.b16 %v5129
    %v5377 = vunpack.c.l.b16 %v5130
    %v5378 = vunpack.c.h.b16 %v5130
    %v5379 = vunpack.c.l.b16 %v5131
    %v5380 = vunpack.c.h.b16 %v5131
    %v5381 = vunpack.c.l.b16 %v5132
    %v5382 = vunpack.c.h.b16 %v5132
    %v5383 = vunpack.c.l.b16 %v5133
    %v5384 = vunpack.c.h.b16 %v5133
    %v5385 = vunpack.c.l.b16 %v5134
    %v5386 = vunpack.c.h.b16 %v5134
    %v5387 = vunpack.c.l.b16 %v5135
    %v5388 = vunpack.c.h.b16 %v5135
    %v5389 = vunpack.c.l.b16 %v5136
    %v5390 = vunpack.c.h.b16 %v5136
    %v5391 = vunpack.c.l.b16 %v5137
    %v5392 = vunpack.c.h.b16 %v5137
    %v5393 = vunpack.c.l.b16 %v5138
    %v5394 = vunpack.c.h.b16 %v5138
    %v5395 = vunpack.c.l.b16 %v5139
    %v5396 = vunpack.c.h.b16 %v5139
    %v5397 = vunpack.c.l.b16 %v5140
    %v5398 = vunpack.c.h.b16 %v5140
    %v5399 = vunpack.c.l.b16 %v5141
    %v5400 = vunpack.c.h.b16 %v5141
    %v5401 = vunpack.c.l.b16 %v5142
    %v5402 = vunpack.c.h.b16 %v5142
    %v5403 = vunpack.c.l.b16 %v5143
    %v5404 = vunpack.c.h.b16 %v5143
    %v5405 = vunpack.c.l.b16 %v5144
    %v5406 = vunpack.c.h.b16 %v5144
    %v5407 = vunpack.c.l.b16 %v5145
    %v5408 = vunpack.c.h.b16 %v5145
    %v5409 = vunpack.c.l.b16 %v5146
    %v5410 = vunpack.c.h.b16 %v5146
    %v5411 = vunpack.c.l.b16 %v5147
    %v5412 = vunpack.c.h.b16 %v5147
    %v5413 = vunpack.c.l.b16 %v5148
    %v5414 = vunpack.c.h.b16 %v5148
    %v5415 = vunpack.c.l.b16 %v5149
    %v5416 = vunpack.c.h.b16 %v5149
    %v5417 = vunpack.c.l.b16 %v5150
    %v5418 = vunpack.c.h.b16 %v5150
    %v5419 = vunpack.c.l.b16 %v5151
    %v5420 = vunpack.c.h.b16 %v5151
    %v5421 = vunpack.c.l.b16 %v5152
    %v5422 = vunpack.c.h.b16 %v5152
    %v5423 = vunpack.c.l.b16 %v5153
    %v5424 = vunpack.c.h.b16 %v5153
    %v5425 = vunpack.c.l.b16 %v5154
    %v5426 = vunpack.c.h.b16 %v5154
    %v5427 = vunpack.c.l.b16 %v5155
    %v5428 = vunpack.c.h.b16 %v5155
    %v5429 = vunpack.c.l.b16 %v5156
    %v5430 = vunpack.c.h.b16 %v5156
    %v5431 = vunpack.c.l.b16 %v5157
    %v5432 = vunpack.c.h.b16 %v5157
    %v5433 = vunpack.c.l.b16 %v5158
    %v5434 = vunpack.c.h.b16 %v5158
    %v5435 = vunpack.c.l.b16 %v5159
    %v5436 = vunpack.c.h.b16 %v5159
    %v5437 = vunpack.c.l.b16 %v5160
    %v5438 = vunpack.c.h.b16 %v5160
    %v5439 = vunpack.c.l.b16 %v5161
    %v5440 = vunpack.c.h.b16 %v5161
    %v5441 = vunpack.c.l.b16 %v5162
    %v5442 = vunpack.c.h.b16 %v5162
    %v5443 = vunpack.c.l.b16 %v5163
    %v5444 = vunpack.c.h.b16 %v5163
    %v5445 = vunpack.c.l.b16 %v5164
    %v5446 = vunpack.c.h.b16 %v5164
    %v5447 = vunpack.c.l.b16 %v5165
    %v5448 = vunpack.c.h.b16 %v5165
    %v5449 = vunpack.c.l.b16 %v5166
    %v5450 = vunpack.c.h.b16 %v5166
    %v5451 = vunpack.c.l.b16 %v5167
    %v5452 = vunpack.c.h.b16 %v5167
    %v5453 = vunpack.c.l.b16 %v5168
    %v5454 = vunpack.c.h.b16 %v5168
    %v5455 = vunpack.c.l.b16 %v5169
    %v5456 = vunpack.c.h.b16 %v5169
    %v5457 = vunpack.c.l.b16 %v5170
    %v5458 = vunpack.c.h.b16 %v5170
    %v5459 = vunpack.c.l.b16 %v5171
    %v5460 = vunpack.c.h.b16 %v5171
    %v5461 = vpack.c.b16 %v5273, %v5269
    %v5462 = vpack.c.b16 %v5274, %v5270
    %v5463 = vpack.c.b16 %v5275, %v5271
    %v5464 = vpack.c.b16 %v5276, %v5272
    %v5465 = vpack.c.b16 %v5281, %v5277
    %v5466 = vpack.c.b16 %v5282, %v5278
    %v5467 = vpack.c.b16 %v5283, %v5279
    %v5468 = vpack.c.b16 %v5284, %v5280
    %v5469 = vpack.c.b16 %v5289, %v5285
    %v5470 = vpack.c.b16 %v5290, %v5286
    %v5471 = vpack.c.b16 %v5291, %v5287
    %v5472 = vpack.c.b16 %v5292, %v5288
    %v5473 = vpack.c.b16 %v5297, %v5293
    %v5474 = vpack.c.b16 %v5298, %v5294
    %v5475 = vpack.c.b16 %v5299, %v5295
    %v5476 = vpack.c.b16 %v5300, %v5296
    %v5477 = vpack.c.b16 %v5305, %v5301
    %v5478 = vpack.c.b16 %v5306, %v5302
    %v5479 = vpack.c.b16 %v5307, %v5303
    %v5480 = vpack.c.b16 %v5308, %v5304
    %v5481 = vpack.c.b16 %v5313, %v5309
    %v5482 = vpack.c.b16 %v5314, %v5310
    %v5483 = vpack.c.b16 %v5315, %v5311
    %v5484 = vpack.c.b16 %v5316, %v5312
    %v5485 = vpack.c.b16 %v5321, %v5317
    %v5486 = vpack.c.b16 %v5322, %v5318
    %v5487 = vpack.c.b16 %v5323, %v5319
    %v5488 = vpack.c.b16 %v5324, %v5320
    %v5489 = vpack.c.b16 %v5329, %v5325
    %v5490 = vpack.c.b16 %v5330, %v5326
    %v5491 = vpack.c.b16 %v5331, %v5327
    %v5492 = vpack.c.b16 %v5332, %v5328
    %v5493 = vpack.c.b16 %v5337, %v5333
    %v5494 = vpack.c.b16 %v5338, %v5334
    %v5495 = vpack.c.b16 %v5339, %v5335
    %v5496 = vpack.c.b16 %v5340, %v5336
    %v5497 = vpack.c.b16 %v5345, %v5341
    %v5498 = vpack.c.b16 %v5346, %v5342
    %v5499 = vpack.c.b16 %v5347, %v5343
    %v5500 = vpack.c.b16 %v5348, %v5344
    %v5501 = vpack.c.b16 %v5353, %v5349
    %v5502 = vpack.c.b16 %v5354, %v5350
    %v5503 = vpack.c.b16 %v5355, %v5351
    %v5504 = vpack.c.b16 %v5356, %v5352
    %v5505 = vpack.c.b16 %v5361, %v5357
    %v5506 = vpack.c.b16 %v5362, %v5358
    %v5507 = vpack.c.b16 %v5363, %v5359
    %v5508 = vpack.c.b16 %v5364, %v5360
    %v5509 = vpack.c.b16 %v5369, %v5365
    %v5510 = vpack.c.b16 %v5370, %v5366
    %v5511 = vpack.c.b16 %v5371, %v5367
    %v5512 = vpack.c.b16 %v5372, %v5368
    %v5513 = vpack.c.b16 %v5377, %v5373
    %v5514 = vpack.c.b16 %v5378, %v5374
    %v5515 = vpack.c.b16 %v5379, %v5375
    %v5516 = vpack.c.b16 %v5380, %v5376
    %v5517 = vpack.c.b16 %v5385, %v5381
    %v5518 = vpack.c.b16 %v5386, %v5382
    %v5519 = vpack.c.b16 %v5387, %v5383
    %v5520 = vpack.c.b16 %v5388, %v5384
    %v5521 = vpack.c.b16 %v5393, %v5389
    %v5522 = vpack.c.b16 %v5394, %v5390
    %v5523 = vpack.c.b16 %v5395, %v5391
    %v5524 = vpack.c.b16 %v5396, %v5392
    %v5525 = vpack.c.b16 %v5401, %v5397
    %v5526 = vpack.c.b16 %v5402, %v5398
    %v5527 = vpack.c.b16 %v5403, %v5399
    %v5528 = vpack.c.b16 %v5404, %v5400
    %v5529 = vpack.c.b16 %v5409, %v5405
    %v5530 = vpack.c.b16 %v5410, %v5406
    %v5531 = vpack.c.b16 %v5411, %v5407
    %v5532 = vpack.c.b16 %v5412, %v5408
    %v5533 = vpack.c.b16 %v5417, %v5413
    %v5534 = vpack.c.b16 %v5418, %v5414
    %v5535 = vpack.c.b16 %v5419, %v5415
    %v5536 = vpack.c.b16 %v5420, %v5416
    %v5537 = vpack.c.b16 %v5425, %v5421
    %v5538 = vpack.c.b16 %v5426, %v5422
    %v5539 = vpack.c.b16 %v5427, %v5423
    %v5540 = vpack.c.b16 %v5428, %v5424
    %v5541 = vpack.c.b16 %v5433, %v5429
    %v5542 = vpack.c.b16 %v5434, %v5430
    %v5543 = vpack.c.b16 %v5435, %v5431
    %v5544 = vpack.c.b16 %v5436, %v5432
    %v5545 = vpack.c.b16 %v5441, %v5437
    %v5546 = vpack.c.b16 %v5442, %v5438
    %v5547 = vpack.c.b16 %v5443, %v5439
    %v5548 = vpack.c.b16 %v5444, %v5440
    %v5549 = vpack.c.b16 %v5449, %v5445
    %v5550 = vpack.c.b16 %v5450, %v5446
    %v5551 = vpack.c.b16 %v5451, %v5447
    %v5552 = vpack.c.b16 %v5452, %v5448
    %v5553 = vpack.c.b16 %v5457, %v5453
    %v5554 = vpack.c.b16 %v5458, %v5454
    %v5555 = vpack.c.b16 %v5459, %v5455
    %v5556 = vpack.c.b16 %v5460, %v5456
    %v5654 = vlaneseq
    %v5655 = vshrl.u32 %v5654, 7
    %v5656 = vsub.s32 0, %v5655
    %v5657 = vrot.slane %v5172, %v5656
    %v5658 = vlaneseq
    %v5659 = vshrl.u32 %v5658, 7
    %v5660 = vsub.s32 1, %v5659
    %v5661 = vrot.slane %v5172, %v5660
    %v5662 = vlaneseq
    %v5663 = vshrl.u32 %v5662, 7
    %v5664 = vsub.s32 2, %v5663
    %v5665 = vrot.slane %v5172, %v5664
    %v5666 = vlaneseq
    %v5667 = vshrl.u32 %v5666, 7
    %v5668 = vsub.s32 3, %v5667
    %v5669 = vrot.slane %v5172, %v5668
    %5674 = vmatprep.subr.bf16.mxu0 %v5462
    %5675 = vmatpush1.bf16.msra.mxu0 %v5461
    %5676 = vmatprep.subr.bf16.mxu0 %v5466
    %5677 = vmatpush1.bf16.msra.mxu0 %v5465
    %5678 = vmatprep.subr.bf16.mxu0 %v5470
    %5679 = vmatpush1.bf16.msra.mxu0 %v5469
    %5680 = vmatprep.subr.bf16.mxu0 %v5474
    %5681 = vmatpush1.bf16.msra.mxu0 %v5473
    %5682 = vmatprep.subr.bf16.mxu0 %v5478
    %5683 = vmatpush1.bf16.msra.mxu0 %v5477
    %5684 = vmatprep.subr.bf16.mxu0 %v5482
    %5685 = vmatpush1.bf16.msra.mxu0 %v5481
    %5686 = vmatprep.subr.bf16.mxu0 %v5486
    %5687 = vmatpush1.bf16.msra.mxu0 %v5485
    %5688 = vmatprep.subr.bf16.mxu0 %v5490
    %5689 = vmatpush1.bf16.msra.mxu0 %v5489
    %5690 = vmatprep.subr.bf16.mxu0 %v5494
    %5691 = vmatpush1.bf16.msra.mxu0 %v5493
    %5692 = vmatprep.subr.bf16.mxu0 %v5498
    %5693 = vmatpush1.bf16.msra.mxu0 %v5497
    %5694 = vmatprep.subr.bf16.mxu0 %v5502
    %5695 = vmatpush1.bf16.msra.mxu0 %v5501
    %5696 = vmatprep.subr.bf16.mxu0 %v5506
    %5697 = vmatpush1.bf16.msra.mxu0 %v5505
    %5698 = vmatprep.subr.bf16.mxu0 %v5510
    %5699 = vmatpush1.bf16.msra.mxu0 %v5509
    %5700 = vmatprep.subr.bf16.mxu0 %v5514
    %5701 = vmatpush1.bf16.msra.mxu0 %v5513
    %5702 = vmatprep.subr.bf16.mxu0 %v5518
    %5703 = vmatpush1.bf16.msra.mxu0 %v5517
    %5704 = vmatprep.subr.bf16.mxu0 %v5522
    %5705 = vmatpush1.bf16.msra.mxu0 %v5521
    %5706 = vmatprep.mubr.bf16.mxu0 %v5074
    %5707 = vmatmul.mubr.bf16.gmra.mrb[0].mxu0 %v5073
    %v5708 = vpop.f32.mrb[0].mxu0
    %v5709 = vadd.f32 %v5657, %v5708
    %v5710 = vpop.f32.mrb[0].mxu0
    %v5711 = vadd.f32 %v5661, %v5710
    %v5712 = vpop.f32.mrb[0].mxu0
    %v5713 = vpop.f32.mrb[0].mxu0
    %5714 = vdwg.mxu0
    %5715 = vmatprep.subr.bf16.mxu0 %v5526
    %5716 = vmatpush1.bf16.msra.mxu0 %v5525
    %5717 = vmatprep.subr.bf16.mxu0 %v5530
    %5718 = vmatpush1.bf16.msra.mxu0 %v5529
    %5719 = vmatprep.subr.bf16.mxu0 %v5534
    %5720 = vmatpush1.bf16.msra.mxu0 %v5533
    %5721 = vmatprep.subr.bf16.mxu0 %v5538
    %5722 = vmatpush1.bf16.msra.mxu0 %v5537
    %5723 = vmatprep.subr.bf16.mxu0 %v5542
    %5724 = vmatpush1.bf16.msra.mxu0 %v5541
    %5725 = vmatprep.subr.bf16.mxu0 %v5546
    %5726 = vmatpush1.bf16.msra.mxu0 %v5545
    %5727 = vmatprep.subr.bf16.mxu0 %v5550
    %5728 = vmatpush1.bf16.msra.mxu0 %v5549
    %5729 = vmatprep.subr.bf16.mxu0 %v5554
    %5730 = vmatpush1.bf16.msra.mxu0 %v5553
    %5731 = vmatprep.subr.bf16.mxu0 0
    %5732 = vmatpush1.bf16.msra.mxu0 0
    %5733 = vmatprep.subr.bf16.mxu0 0
    %5734 = vmatpush1.bf16.msra.mxu0 0
    %5735 = vmatprep.subr.bf16.mxu0 0
    %5736 = vmatpush1.bf16.msra.mxu0 0
    %5737 = vmatprep.subr.bf16.mxu0 0
    %5738 = vmatpush1.bf16.msra.mxu0 0
    %5739 = vmatprep.subr.bf16.mxu0 0
    %5740 = vmatpush1.bf16.msra.mxu0 0
    %5741 = vmatprep.subr.bf16.mxu0 0
    %5742 = vmatpush1.bf16.msra.mxu0 0
    %5743 = vmatprep.subr.bf16.mxu0 0
    %5744 = vmatpush1.bf16.msra.mxu0 0
    %5745 = vmatprep.subr.bf16.mxu0 0
    %5746 = vmatpush1.bf16.msra.mxu0 0
    %5747 = vmatprep.mubr.bf16.mxu0 0
    %5748 = vmatmul.mubr.bf16.gmra.mrb[0].mxu0 %v5075
    %v5749 = vpop.f32.mrb[0].mxu0
    %v5750 = vadd.f32 %v5709, %v5749
    %v5751 = vpop.f32.mrb[0].mxu0
    %v5752 = vadd.f32 %v5711, %v5751
    %v5753 = vpop.f32.mrb[0].mxu0
    %v5754 = vpop.f32.mrb[0].mxu0
    %5755 = vdwg.mxu0
    %5756 = vmatprep.subr.bf16.mxu0 %v5464
    %5757 = vmatpush1.bf16.msra.mxu0 %v5463
    %5758 = vmatprep.subr.bf16.mxu0 %v5468
    %5759 = vmatpush1.bf16.msra.mxu0 %v5467
    %5760 = vmatprep.subr.bf16.mxu0 %v5472
    %5761 = vmatpush1.bf16.msra.mxu0 %v5471
    %5762 = vmatprep.subr.bf16.mxu0 %v5476
    %5763 = vmatpush1.bf16.msra.mxu0 %v5475
    %5764 = vmatprep.subr.bf16.mxu0 %v5480
    %5765 = vmatpush1.bf16.msra.mxu0 %v5479
    %5766 = vmatprep.subr.bf16.mxu0 %v5484
    %5767 = vmatpush1.bf16.msra.mxu0 %v5483
    %5768 = vmatprep.subr.bf16.mxu0 %v5488
    %5769 = vmatpush1.bf16.msra.mxu0 %v5487
    %5770 = vmatprep.subr.bf16.mxu0 %v5492
    %5771 = vmatpush1.bf16.msra.mxu0 %v5491
    %5772 = vmatprep.subr.bf16.mxu0 %v5496
    %5773 = vmatpush1.bf16.msra.mxu0 %v5495
    %5774 = vmatprep.subr.bf16.mxu0 %v5500
    %5775 = vmatpush1.bf16.msra.mxu0 %v5499
    %5776 = vmatprep.subr.bf16.mxu0 %v5504
    %5777 = vmatpush1.bf16.msra.mxu0 %v5503
    %5778 = vmatprep.subr.bf16.mxu0 %v5508
    %5779 = vmatpush1.bf16.msra.mxu0 %v5507
    %5780 = vmatprep.subr.bf16.mxu0 %v5512
    %5781 = vmatpush1.bf16.msra.mxu0 %v5511
    %5782 = vmatprep.subr.bf16.mxu0 %v5516
    %5783 = vmatpush1.bf16.msra.mxu0 %v5515
    %5784 = vmatprep.subr.bf16.mxu0 %v5520
    %5785 = vmatpush1.bf16.msra.mxu0 %v5519
    %5786 = vmatprep.subr.bf16.mxu0 %v5524
    %5787 = vmatpush1.bf16.msra.mxu0 %v5523
    %5788 = vmatprep.mubr.bf16.mxu0 %v5074
    %5789 = vmatmul.mubr.bf16.gmra.mrb[0].mxu0 %v5073
    %v5790 = vpop.f32.mrb[0].mxu0
    %v5791 = vadd.f32 %v5665, %v5790
    %v5792 = vpop.f32.mrb[0].mxu0
    %v5793 = vadd.f32 %v5669, %v5792
    %v5794 = vpop.f32.mrb[0].mxu0
    %v5795 = vpop.f32.mrb[0].mxu0
    %5796 = vdwg.mxu0
    %5797 = vmatprep.subr.bf16.mxu0 %v5528
    %5798 = vmatpush1.bf16.msra.mxu0 %v5527
    %5799 = vmatprep.subr.bf16.mxu0 %v5532
    %5800 = vmatpush1.bf16.msra.mxu0 %v5531
    %5801 = vmatprep.subr.bf16.mxu0 %v5536
    %5802 = vmatpush1.bf16.msra.mxu0 %v5535
    %5803 = vmatprep.subr.bf16.mxu0 %v5540
    %5804 = vmatpush1.bf16.msra.mxu0 %v5539
    %5805 = vmatprep.subr.bf16.mxu0 %v5544
    %5806 = vmatpush1.bf16.msra.mxu0 %v5543
    %5807 = vmatprep.subr.bf16.mxu0 %v5548
    %5808 = vmatpush1.bf16.msra.mxu0 %v5547
    %5809 = vmatprep.subr.bf16.mxu0 %v5552
    %5810 = vmatpush1.bf16.msra.mxu0 %v5551
    %5811 = vmatprep.subr.bf16.mxu0 %v5556
    %5812 = vmatpush1.bf16.msra.mxu0 %v5555
    %5813 = vmatprep.subr.bf16.mxu0 0
    %5814 = vmatpush1.bf16.msra.mxu0 0
    %5815 = vmatprep.subr.bf16.mxu0 0
    %5816 = vmatpush1.bf16.msra.mxu0 0
    %5817 = vmatprep.subr.bf16.mxu0 0
    %5818 = vmatpush1.bf16.msra.mxu0 0
    %5819 = vmatprep.subr.bf16.mxu0 0
    %5820 = vmatpush1.bf16.msra.mxu0 0
    %5821 = vmatprep.subr.bf16.mxu0 0
    %5822 = vmatpush1.bf16.msra.mxu0 0
    %5823 = vmatprep.subr.bf16.mxu0 0
    %5824 = vmatpush1.bf16.msra.mxu0 0
    %5825 = vmatprep.subr.bf16.mxu0 0
    %5826 = vmatpush1.bf16.msra.mxu0 0
    %5827 = vmatprep.subr.bf16.mxu0 0
    %5828 = vmatpush1.bf16.msra.mxu0 0
    %5829 = vmatprep.mubr.bf16.mxu0 0
    %5830 = vmatmul.mubr.bf16.gmra.mrb[0].mxu0 %v5075
    %v5831 = vpop.f32.mrb[0].mxu0
    %v5832 = vadd.f32 %v5791, %v5831
    %v5833 = vpop.f32.mrb[0].mxu0
    %v5834 = vadd.f32 %v5793, %v5833
    %v5835 = vpop.f32.mrb[0].mxu0
    %v5836 = vpop.f32.mrb[0].mxu0
    %5837 = vdwg.mxu0
    %v5838 = vxor.u32 %v5750, 2147483648
    %v5839 = vmul.f32 %v5838, 1.442695
    %v5840 = vpow.pop %v5839
    %v5841 = vadd.f32 %v5840, 1.0
    %v5842 = vrcp.pop %v5841
    %v5843 = vmul.f32 1.0, %v5842
    %v5844 = vxor.u32 %v5752, 2147483648
    %v5845 = vmul.f32 %v5844, 1.442695
    %v5846 = vpow.pop %v5845
    %v5847 = vadd.f32 %v5846, 1.0
    %v5848 = vrcp.pop %v5847
    %v5849 = vmul.f32 1.0, %v5848
    %v5850 = vtanh.pop %v5832
    %v5851 = vxor.u32 %v5834, 2147483648
    %v5852 = vmul.f32 %v5851, 1.442695
    %v5853 = vpow.pop %v5852
    %v5854 = vadd.f32 %v5853, 1.0
    %v5855 = vrcp.pop %v5854
    %v5856 = vmul.f32 1.0, %v5855
    %v5857 = vmul.f32 %v5849, %v229
    %v5858 = vmul.f32 %v5843, %v5850
    %v5859 = vadd.f32 %v5857, %v5858
    %v5860 = vtanh.pop %v5859
    %v5861 = vmul.f32 %v5856, %v5860
    %v5863 = vrot.slane %v5859, 7
    %v5866 = vrot.slane %v4514, 6
    %v5869 = vrot.slane %v4512, 5
    %vm5871 = vcmask 1040384
    %v5872 = vsel %vm5871, %v5861, %v5863
    %vm5873 = vcmask 1041408
    %v5874 = vsel %vm5873, %v5872, %v5866
    %vm5875 = vcmask 1042432
    %v5876 = vsel %vm5875, %v5874, %v5869
    %5877 = vst [vmem:[%s23] sm:$0xf] %v5876
    %v5878 = vpack.c.bf16 %v5861, %v5861
    %v5879 = vld [vmem:[#allocation16] sm:$0xf]
    %v5880 = vld [vmem:[#allocation16 + $0x4] sm:$0xf]
    %v5881 = vld [vmem:[#allocation16 + $0x8] sm:$0xf]
    %v5882 = vld [vmem:[#allocation16 + $0xc] sm:$0xf]
    %v5883 = vld [vmem:[#allocation16 + $0x10] sm:$0xf]
    %v5884 = vld [vmem:[#allocation16 + $0x14] sm:$0xf]
    %v5885 = vld [vmem:[#allocation16 + $0x18] sm:$0xf]
    %v5886 = vld [vmem:[#allocation16 + $0x1c] sm:$0xf]
    %v5887 = vld [vmem:[#allocation16 + $0x20] sm:$0xf]
    %v5888 = vld [vmem:[#allocation16 + $0x24] sm:$0xf]
    %v5889 = vld [vmem:[#allocation16 + $0x28] sm:$0xf]
    %v5890 = vld [vmem:[#allocation16 + $0x2c] sm:$0xf]
    %v5891 = vld [vmem:[#allocation16 + $0x30] sm:$0xf]
    %v5892 = vld [vmem:[#allocation16 + $0x34] sm:$0xf]
    %v5893 = vld [vmem:[#allocation16 + $0x38] sm:$0xf]
    %v5894 = vld [vmem:[#allocation16 + $0x3c] sm:$0xf]
    %v5895 = vld [vmem:[#allocation18] sm:$0x1]
    %v5912 = vunpack.c.l.b16 %v5879
    %v5913 = vunpack.c.l.b16 %v5880
    %v5914 = vunpack.c.l.b16 %v5881
    %v5915 = vunpack.c.l.b16 %v5882
    %v5916 = vunpack.c.l.b16 %v5883
    %v5917 = vunpack.c.l.b16 %v5884
    %v5918 = vunpack.c.l.b16 %v5885
    %v5919 = vunpack.c.l.b16 %v5886
    %v5920 = vunpack.c.l.b16 %v5887
    %v5921 = vunpack.c.l.b16 %v5888
    %v5922 = vunpack.c.l.b16 %v5889
    %v5923 = vunpack.c.l.b16 %v5890
    %v5924 = vunpack.c.l.b16 %v5891
    %v5925 = vunpack.c.l.b16 %v5892
    %v5926 = vunpack.c.l.b16 %v5893
    %v5927 = vunpack.c.l.b16 %v5894
    %v5928 = vpack.c.b16 %v5913, %v5912
    %v5929 = vpack.c.b16 %v5915, %v5914
    %v5930 = vpack.c.b16 %v5917, %v5916
    %v5931 = vpack.c.b16 %v5919, %v5918
    %v5932 = vpack.c.b16 %v5921, %v5920
    %v5933 = vpack.c.b16 %v5923, %v5922
    %v5934 = vpack.c.b16 %v5925, %v5924
    %v5935 = vpack.c.b16 %v5927, %v5926
    %5944 = vmatprep.subr.bf16.mxu0 0
    %5945 = vmatpush1.bf16.msra.mxu0 %v5928
    %5946 = vmatprep.subr.bf16.mxu0 0
    %5947 = vmatpush1.bf16.msra.mxu0 %v5929
    %5948 = vmatprep.subr.bf16.mxu0 0
    %5949 = vmatpush1.bf16.msra.mxu0 %v5930
    %5950 = vmatprep.subr.bf16.mxu0 0
    %5951 = vmatpush1.bf16.msra.mxu0 %v5931
    %5952 = vmatprep.subr.bf16.mxu0 0
    %5953 = vmatpush1.bf16.msra.mxu0 %v5932
    %5954 = vmatprep.subr.bf16.mxu0 0
    %5955 = vmatpush1.bf16.msra.mxu0 %v5933
    %5956 = vmatprep.subr.bf16.mxu0 0
    %5957 = vmatpush1.bf16.msra.mxu0 %v5934
    %5958 = vmatprep.subr.bf16.mxu0 0
    %5959 = vmatpush1.bf16.msra.mxu0 %v5935
    %5960 = vmatprep.subr.bf16.mxu0 0
    %5961 = vmatpush1.bf16.msra.mxu0 0
    %5962 = vmatprep.subr.bf16.mxu0 0
    %5963 = vmatpush1.bf16.msra.mxu0 0
    %5964 = vmatprep.subr.bf16.mxu0 0
    %5965 = vmatpush1.bf16.msra.mxu0 0
    %5966 = vmatprep.subr.bf16.mxu0 0
    %5967 = vmatpush1.bf16.msra.mxu0 0
    %5968 = vmatprep.subr.bf16.mxu0 0
    %5969 = vmatpush1.bf16.msra.mxu0 0
    %5970 = vmatprep.subr.bf16.mxu0 0
    %5971 = vmatpush1.bf16.msra.mxu0 0
    %5972 = vmatprep.subr.bf16.mxu0 0
    %5973 = vmatpush1.bf16.msra.mxu0 0
    %5974 = vmatprep.subr.bf16.mxu0 0
    %5975 = vmatpush1.bf16.msra.mxu0 0
    %5976 = vmatprep.mubr.bf16.mxu0 0
    %5977 = vmatmul.mubr.bf16.gmra.mrb[0].mxu0 %v5878
    %v5978 = vpop.f32.mrb[0].mxu0
    %v5979 = vadd.f32 %v5895, %v5978
    %v5980 = vpop.f32.mrb[0].mxu0
    %v5981 = vpop.f32.mrb[0].mxu0
    %v5982 = vpop.f32.mrb[0].mxu0
    %5983 = vdwg.mxu0
    %v5984 = vlaneseq
    %v5985 = vand.u32 %v5984, 127
    %vm5986 = vcmp.ge.s32.totalorder %v5985, 1
    %vm5987 = vcmp.lt.s32.totalorder %v5985, 5
    %vm5988 = vmand %vm5986, %vm5987
    %v5989 = vand.u32 2147483647, %v5979
    %v5990 = vadd.f32 %v5989, 1.0
    %v5991 = vrcp.pop %v5990
    %v5992 = vmul.f32 %v5979, %v5991
    %v5993 = vsel %vm5988, %v5992, %v5979
    %5994 = vst [vmem:[%s22] sm:$0x1] %v5993
    // Predicated region
    $region138: #{conv6_forward.1} parent=1 // pred_check
      _
    $region139: #{conv6_forward.1} parent=1 // pred_check_branch
      %5996 = sbr.rel (0) target = $region141
    $region140: #{conv6_forward.1} parent=1 // pred_region
      _
    $region141: #{conv6_forward.1} parent=1 // pred_fallthru
      _
    // Predicated region
    $region142: #{conv6_forward.1} parent=1 // pred_check
      _
    $region143: #{conv6_forward.1} parent=1 // pred_check_branch
      %5998 = sbr.rel (0) target = $region145
    $region144: #{conv6_forward.1} parent=1 // pred_region
      _
    $region145: #{conv6_forward.1} parent=1 // pred_fallthru
      _
    // Predicated region
    $region146: #{conv6_forward.1} parent=1 // pred_check
      _
    $region147: #{conv6_forward.1} parent=1 // pred_check_branch
      %6000 = sbr.rel (0) target = $region149
    $region148: #{conv6_forward.1} parent=1 // pred_region
      _
    $region149: #{conv6_forward.1} parent=1 // pred_fallthru
      _
    // Predicated region
    $region150: #{conv6_forward.1} parent=1 // pred_check
      _
    $region151: #{conv6_forward.1} parent=1 // pred_check_branch
      %6002 = sbr.rel (0) target = $region153
    $region152: #{conv6_forward.1} parent=1 // pred_region
      _
    $region153: #{conv6_forward.1} parent=1 // pred_fallthru
      _
    %6003 = vsyncpa [#allocation3], 1
    %6004 = vsyncpa [#allocation5], 1
    %6005 = vsyncpa [#allocation8], 1
    %6006 = vsyncpa [#allocation11], 1
    %6007 = vsyncpa [#allocation14], 1
    %6008 = vsyncpa [#allocation17], 1

</llo_original>
